<compile_context>
chip_gen: v6e
topology: v6e:2x2x1
jax: 0.10.0
libtpu: 0.0.40
codegen_flags: <defaults>
</compile_context>

<pallas_src>
import functools

import jax
import jax.numpy as jnp
from jax.experimental import pallas as pl
from jax.experimental.pallas import tpu as pltpu


# ---------------------------------------------------------------------------
# Kernel 1: feature-extractor normalize + patch embedding (conv == flatten+matmul)
# ---------------------------------------------------------------------------
def _patch_embed_kernel(x_ref, w_ref, b_ref, o_ref):
    # Fused ViTFeatureExtractor normalization: (x - 0.5) / 0.5
    xn = (x_ref[...] - 0.5) * 2.0
    o_ref[...] = jnp.dot(xn, w_ref[...], preferred_element_type=jnp.float32) + b_ref[...]


def patch_embed(patches, w, b):
    M, K = patches.shape
    _, N = w.shape
    return pl.pallas_call(
        _patch_embed_kernel,
        out_shape=jax.ShapeDtypeStruct((M, N), jnp.float32),
        grid=(1,),
        in_specs=[
            pl.BlockSpec((M, K), lambda i: (0, 0)),
            pl.BlockSpec((K, N), lambda i: (0, 0)),
            pl.BlockSpec((1, N), lambda i: (0, 0)),
        ],
        out_specs=pl.BlockSpec((M, N), lambda i: (0, 0)),
    )(patches, w, b)


# ---------------------------------------------------------------------------
# Kernel 2: fused transformer encoder, grid = (batch, layer)
# ---------------------------------------------------------------------------
def _encoder_kernel(x_ref, ln1g_ref, ln1b_ref, wqkv_ref, bqkv_ref,
                    wo_ref, bo_ref, ln2g_ref, ln2b_ref,
                    w1_ref, b1_ref, w2_ref, b2_ref,
                    h_ref, *, S, NH, dh, eps):
    D = NH * dh

    # First layer of each batch block: seed the resident activation from the input.
    @pl.when(pl.program_id(1) == 0)
    def _():
        h_ref[...] = x_ref[...]

    h = h_ref[0]                                                    # (S, D)

    def layer_norm(t, g, b):
        mu = jnp.mean(t, axis=-1, keepdims=True)
        var = jnp.mean((t - mu) ** 2, axis=-1, keepdims=True)
        return (t - mu) * jax.lax.rsqrt(var + eps) * g + b

    # ---- Multi-head self-attention (pre-LN), fused QKV projection ----
    ln1 = layer_norm(h, ln1g_ref[0], ln1b_ref[0])
    qkv = jnp.dot(ln1, wqkv_ref[0], preferred_element_type=jnp.float32) + bqkv_ref[0]

    scale = 1.0 / (dh ** 0.5)
    heads = []
    for hh in range(NH):                       # static unroll: NH small
        c0 = hh * dh
        q = qkv[:, c0:c0 + dh]                                      # (S, dh)
        k = qkv[:, D + c0:D + c0 + dh]
        v = qkv[:, 2 * D + c0:2 * D + c0 + dh]
        s = jax.lax.dot_general(q, k, (((1,), (1,)), ((), ())),
                                preferred_element_type=jnp.float32) * scale   # (S, S)
        m = jnp.max(s, axis=-1, keepdims=True)
        p = jnp.exp(s - m)
        p = p * pl.reciprocal(jnp.sum(p, axis=-1, keepdims=True), approx=True)
        heads.append(jnp.dot(p, v, preferred_element_type=jnp.float32))       # (S, dh)
    ctx = jnp.concatenate(heads, axis=-1)                           # (S, D) lane-dense
    attn = jnp.dot(ctx, wo_ref[0], preferred_element_type=jnp.float32) + bo_ref[0]
    h = h + attn

    # ---- MLP (pre-LN, GELU) ----
    ln2 = layer_norm(h, ln2g_ref[0], ln2b_ref[0])
    m1 = jnp.dot(ln2, w1_ref[0], preferred_element_type=jnp.float32) + b1_ref[0]
    # TODO(synk): HF ViT uses exact erf-GELU; tanh approximation used here for a
    # guaranteed Mosaic EUP lowering.
    c = jnp.float32(0.7978845608028654)   # sqrt(2/pi)
    m1 = 0.5 * m1 * (1.0 + jnp.tanh(c * (m1 + 0.044715 * m1 * m1 * m1)))
    m2 = jnp.dot(m1, w2_ref[0], preferred_element_type=jnp.float32) + b2_ref[0]

    h_ref[0] = h + m2


def encoder(h0, p, cfg):
    B, S, D = h0.shape
    NH, L, MLP = cfg["heads"], cfg["layers"], cfg["mlp"]

    def per_layer(*dims):
        nd = len(dims)
        return pl.BlockSpec((1,) + dims, lambda b, l, _n=nd: (l,) + (0,) * _n)

    act_spec = pl.BlockSpec((1, S, D), lambda b, l: (b, 0, 0))

    kern = functools.partial(_encoder_kernel, S=S, NH=NH, dh=D // NH, eps=1e-12)
    return pl.pallas_call(
        kern,
        out_shape=jax.ShapeDtypeStruct((B, S, D), jnp.float32),
        grid=(B, L),
        in_specs=[
            act_spec,                                   # initial activations
            per_layer(1, D), per_layer(1, D),           # ln1 gamma/beta
            per_layer(D, 3 * D), per_layer(1, 3 * D),   # fused Wqkv / bqkv
            per_layer(D, D), per_layer(1, D),           # Wo / bo
            per_layer(1, D), per_layer(1, D),           # ln2 gamma/beta
            per_layer(D, MLP), per_layer(1, MLP),       # W1 / b1
            per_layer(MLP, D), per_layer(1, D),         # W2 / b2
        ],
        out_specs=act_spec,
        compiler_params=pltpu.CompilerParams(
            dimension_semantics=("parallel", "arbitrary")),
    )(h0, p["ln1_g"], p["ln1_b"], p["wqkv"], p["bqkv"], p["wo"], p["bo"],
      p["ln2_g"], p["ln2_b"], p["w1"], p["b1"], p["w2"], p["b2"])


# ---------------------------------------------------------------------------
# Kernel 3: final LayerNorm + classifier head on CLS tokens (fused)
# ---------------------------------------------------------------------------
def _head_kernel(x_ref, g_ref, b_ref, w_ref, hb_ref, o_ref, *, eps):
    x = x_ref[...]
    mu = jnp.mean(x, axis=-1, keepdims=True)
    var = jnp.mean((x - mu) ** 2, axis=-1, keepdims=True)
    xn = (x - mu) * jax.lax.rsqrt(var + eps) * g_ref[...] + b_ref[...]
    o_ref[...] = jnp.dot(xn, w_ref[...], preferred_element_type=jnp.float32) + hb_ref[...]


def classifier_head(cls_tok, g, b, w, hb, eps=1e-12):
    M, D = cls_tok.shape
    _, N = w.shape
    kern = functools.partial(_head_kernel, eps=eps)
    return pl.pallas_call(
        kern,
        out_shape=jax.ShapeDtypeStruct((M, N), jnp.float32),
        grid=(1,),
        in_specs=[
            pl.BlockSpec((M, D), lambda i: (0, 0)),
            pl.BlockSpec((1, D), lambda i: (0, 0)),
            pl.BlockSpec((1, D), lambda i: (0, 0)),
            pl.BlockSpec((D, N), lambda i: (0, 0)),
            pl.BlockSpec((1, N), lambda i: (0, 0)),
        ],
        out_specs=pl.BlockSpec((M, N), lambda i: (0, 0)),
    )(cls_tok, g, b, w, hb)


# ---------------------------------------------------------------------------
# Parameter init (deterministic, synthetic — no checkpoint loading)
# ---------------------------------------------------------------------------
def init_params(key, cfg):
    C, P, D = cfg["chans"], cfg["patch"], cfg["hidden"]
    MLP, L, NCLS = cfg["mlp"], cfg["layers"], cfg["classes"]
    S = (cfg["image"] // P) ** 2 + 1

    def nrm(k, shape, scale=0.02):
        return scale * jax.random.normal(k, shape, dtype=jnp.float32)

    keys = iter(jax.random.split(key, 16))
    return {
        "patch_w": nrm(next(keys), (C * P * P, D)),
        "patch_b": jnp.zeros((1, D), jnp.float32),
        "cls": nrm(next(keys), (1, 1, D)),
        "pos": nrm(next(keys), (1, S, D)),
        "ln_g": jnp.ones((1, D), jnp.float32),
        "ln_b": jnp.zeros((1, D), jnp.float32),
        "head_w": nrm(next(keys), (D, NCLS)),
        "head_b": jnp.zeros((1, NCLS), jnp.float32),
        # Per-layer weights stacked along a leading L axis (streamed by BlockSpec).
        "ln1_g": jnp.ones((L, 1, D), jnp.float32),
        "ln1_b": jnp.zeros((L, 1, D), jnp.float32),
        "wqkv": nrm(next(keys), (L, D, 3 * D)),
        "bqkv": jnp.zeros((L, 1, 3 * D), jnp.float32),
        "wo": nrm(next(keys), (L, D, D)),
        "bo": jnp.zeros((L, 1, D), jnp.float32),
        "ln2_g": jnp.ones((L, 1, D), jnp.float32),
        "ln2_b": jnp.zeros((L, 1, D), jnp.float32),
        "w1": nrm(next(keys), (L, D, MLP)),
        "b1": jnp.zeros((L, 1, MLP), jnp.float32),
        "w2": nrm(next(keys), (L, MLP, D)),
        "b2": jnp.zeros((L, 1, D), jnp.float32),
    }


# ---------------------------------------------------------------------------
# Forward pass (mirrors Cifar10Transformer.forward)
# ---------------------------------------------------------------------------
def cifar10_transformer_forward(x, params, cfg):
    B, C, Himg, Wimg = x.shape
    P, D = cfg["patch"], cfg["hidden"]

    # --- ViTFeatureExtractor ---
    # TODO(synk): the real extractor bilinear-resizes to the model resolution; this
    # synthetic config uses image_size == input size, so resize is the identity.
    # The (x - 0.5)/0.5 normalization is fused into the patch-embed kernel.

    # --- Patch embedding (conv k=stride=P == patch-flatten + matmul) ---
    nH, nW = Himg // P, Wimg // P
    patches = (x.reshape(B, C, nH, P, nW, P)
                 .transpose(0, 2, 4, 1, 3, 5)
                 .reshape(B * nH * nW, C * P * P))
    tok = patch_embed(patches, params["patch_w"], params["patch_b"]).reshape(B, nH * nW, D)

    # --- [CLS] + position embeddings ---
    cls = jnp.broadcast_to(params["cls"], (B, 1, D))
    h = jnp.concatenate([cls, tok], axis=1) + params["pos"]          # (B, S, D)

    # --- Whole transformer encoder: ONE pallas_call, grid=(B, L) ---
    h = encoder(h, params, cfg)                                      # (B, S, D)

    # --- Final LayerNorm + classifier head on the CLS token (fused kernel) ---
    logits = classifier_head(h[:, 0, :], params["ln_g"], params["ln_b"],
                             params["head_w"], params["head_b"])     # (B, num_classes)
    return logits


# ---------------------------------------------------------------------------
if __name__ == "__main__":
    cfg = dict(image=16, patch=4, chans=3, hidden=128, heads=4, mlp=256,
               layers=2, classes=10)

    x = jax.random.uniform(jax.random.PRNGKey(0),
                           (2, cfg["chans"], cfg["image"], cfg["image"]),
                           dtype=jnp.float32)                        # NCHW in [0, 1)
    params = init_params(jax.random.PRNGKey(42), cfg)

    fwd = jax.jit(functools.partial(cifar10_transformer_forward, cfg=cfg))
    logits = fwd(x, params)
    jax.block_until_ready(logits)

    assert logits.shape == (2, cfg["classes"]), logits.shape
    assert logits.dtype == jnp.float32
    print("KERNEL_OK")
</pallas_src>

<mosaic_0001>
module attributes {stable_mosaic.version = 11 : i64} {
  func.func @_patch_embed_kernel(%arg0: i32, %arg1: memref<32x48xf32, #tpu.memory_space<vmem>>, %arg2: memref<48x128xf32, #tpu.memory_space<vmem>>, %arg3: memref<1x128xf32, #tpu.memory_space<vmem>>, %arg4: memref<32x128xf32, #tpu.memory_space<vmem>>) attributes {dimension_semantics = [#tpu.dimension_semantics<arbitrary>], iteration_bounds = array<i64: 1>, scalar_prefetch = 0 : i64, scratch_operands = 0 : i64, tpu.core_type = #tpu.core_type<tc>, window_params = [{pipeline_mode = #tpu.pipeline_mode<synchronous>, transform_indices = @transform_0, window_bounds = array<i64: 32, 48>}, {pipeline_mode = #tpu.pipeline_mode<synchronous>, transform_indices = @transform_1, window_bounds = array<i64: 48, 128>}, {pipeline_mode = #tpu.pipeline_mode<synchronous>, transform_indices = @transform_2, window_bounds = array<i64: 1, 128>}, {pipeline_mode = #tpu.pipeline_mode<synchronous>, transform_indices = @transform_3, window_bounds = array<i64: 32, 128>}]} {
    %c0 = arith.constant 0 : index
    %c0_0 = arith.constant 0 : index
    %0 = vector.load %arg1[%c0, %c0_0] : memref<32x48xf32, #tpu.memory_space<vmem>>, vector<32x48xf32>
    %cst = arith.constant 5.000000e-01 : f32
    %1 = vector.broadcast %cst : f32 to vector<32x48xf32>
    %2 = arith.subf %0, %1 : vector<32x48xf32>
    %cst_1 = arith.constant 2.000000e+00 : f32
    %3 = vector.broadcast %cst_1 : f32 to vector<32x48xf32>
    %4 = arith.mulf %2, %3 : vector<32x48xf32>
    %c0_2 = arith.constant 0 : index
    %c0_3 = arith.constant 0 : index
    %5 = vector.load %arg2[%c0_2, %c0_3] : memref<48x128xf32, #tpu.memory_space<vmem>>, vector<48x128xf32>
    %cst_4 = arith.constant dense<0.000000e+00> : vector<32x128xf32>
    %6 = tpu.matmul %4, %5, %cst_4 {dimension_numbers = #tpu.dot_dimension_numbers<[1], [0], [0], [1], [0, 0, 1, 1], [], []>} : vector<32x48xf32>, vector<48x128xf32>, vector<32x128xf32> -> vector<32x128xf32>
    %c0_5 = arith.constant 0 : index
    %c0_6 = arith.constant 0 : index
    %7 = vector.load %arg3[%c0_5, %c0_6] : memref<1x128xf32, #tpu.memory_space<vmem>>, vector<1x128xf32>
    %8 = vector.broadcast %7 : vector<1x128xf32> to vector<32x128xf32>
    %9 = arith.addf %6, %8 : vector<32x128xf32>
    %c0_7 = arith.constant 0 : index
    %c0_8 = arith.constant 0 : index
    %10 = vector.load %arg4[%c0_7, %c0_8] : memref<32x128xf32, #tpu.memory_space<vmem>>, vector<32x128xf32>
    tpu.vector_store %arg4[%c0_7, %c0_8], %9 {strides = array<i32>} : memref<32x128xf32, #tpu.memory_space<vmem>>, vector<32x128xf32>,
    return
  }
  func.func @transform_0(%arg0: i32) -> (i32, i32) {
    %c0_i32 = arith.constant 0 : i32
    %c0_i32_0 = arith.constant 0 : i32
    %c0_i32_1 = arith.constant 0 : i32
    return %c0_i32, %c0_i32_0 : i32, i32
  }
  func.func @transform_1(%arg0: i32) -> (i32, i32) {
    %c0_i32 = arith.constant 0 : i32
    %c0_i32_0 = arith.constant 0 : i32
    %c0_i32_1 = arith.constant 0 : i32
    return %c0_i32, %c0_i32_0 : i32, i32
  }
  func.func @transform_2(%arg0: i32) -> (i32, i32) {
    %c0_i32 = arith.constant 0 : i32
    %c0_i32_0 = arith.constant 0 : i32
    %c0_i32_1 = arith.constant 0 : i32
    return %c0_i32, %c0_i32_0 : i32, i32
  }
  func.func @transform_3(%arg0: i32) -> (i32, i32) {
    %c0_i32 = arith.constant 0 : i32
    %c0_i32_0 = arith.constant 0 : i32
    %c0_i32_1 = arith.constant 0 : i32
    return %c0_i32, %c0_i32_0 : i32, i32
  }
}

module attributes {stable_mosaic.version = 11 : i64} {
  func.func @_encoder_kernel(%arg0: i32, %arg1: i32, %arg2: memref<1x17x128xf32, #tpu.memory_space<vmem>>, %arg3: memref<1x1x128xf32, #tpu.memory_space<vmem>>, %arg4: memref<1x1x128xf32, #tpu.memory_space<vmem>>, %arg5: memref<1x128x384xf32, #tpu.memory_space<vmem>>, %arg6: memref<1x1x384xf32, #tpu.memory_space<vmem>>, %arg7: memref<1x128x128xf32, #tpu.memory_space<vmem>>, %arg8: memref<1x1x128xf32, #tpu.memory_space<vmem>>, %arg9: memref<1x1x128xf32, #tpu.memory_space<vmem>>, %arg10: memref<1x1x128xf32, #tpu.memory_space<vmem>>, %arg11: memref<1x128x256xf32, #tpu.memory_space<vmem>>, %arg12: memref<1x1x256xf32, #tpu.memory_space<vmem>>, %arg13: memref<1x256x128xf32, #tpu.memory_space<vmem>>, %arg14: memref<1x1x128xf32, #tpu.memory_space<vmem>>, %arg15: memref<1x17x128xf32, #tpu.memory_space<vmem>>) attributes {dimension_semantics = [#tpu.dimension_semantics<parallel>, #tpu.dimension_semantics<arbitrary>], iteration_bounds = array<i64: 2, 2>, scalar_prefetch = 0 : i64, scratch_operands = 0 : i64, tpu.core_type = #tpu.core_type<tc>, window_params = [{transform_indices = @transform_0, window_bounds = array<i64: 1, 17, 128>}, {transform_indices = @transform_1, window_bounds = array<i64: 1, 1, 128>}, {transform_indices = @transform_2, window_bounds = array<i64: 1, 1, 128>}, {transform_indices = @transform_3, window_bounds = array<i64: 1, 128, 384>}, {transform_indices = @transform_4, window_bounds = array<i64: 1, 1, 384>}, {transform_indices = @transform_5, window_bounds = array<i64: 1, 128, 128>}, {transform_indices = @transform_6, window_bounds = array<i64: 1, 1, 128>}, {transform_indices = @transform_7, window_bounds = array<i64: 1, 1, 128>}, {transform_indices = @transform_8, window_bounds = array<i64: 1, 1, 128>}, {transform_indices = @transform_9, window_bounds = array<i64: 1, 128, 256>}, {transform_indices = @transform_10, window_bounds = array<i64: 1, 1, 256>}, {transform_indices = @transform_11, window_bounds = array<i64: 1, 256, 128>}, {transform_indices = @transform_12, window_bounds = array<i64: 1, 1, 128>}, {transform_indices = @transform_13, window_bounds = array<i64: 1, 17, 128>}]} {
    %c0_i32 = arith.constant 0 : i32
    %0 = arith.cmpi eq, %arg1, %c0_i32 : i32
    %1 = arith.extui %0 : i1 to i32
    %c0_i32_0 = arith.constant 0 : i32
    %2 = arith.cmpi ne, %1, %c0_i32_0 : i32
    scf.if %2 {
      %c0_79 = arith.constant 0 : index
      %c0_80 = arith.constant 0 : index
      %c0_81 = arith.constant 0 : index
      %172 = vector.load %arg2[%c0_79, %c0_80, %c0_81] : memref<1x17x128xf32, #tpu.memory_space<vmem>>, vector<1x17x128xf32>
      %c0_82 = arith.constant 0 : index
      %c0_83 = arith.constant 0 : index
      %c0_84 = arith.constant 0 : index
      %173 = vector.load %arg15[%c0_82, %c0_83, %c0_84] : memref<1x17x128xf32, #tpu.memory_space<vmem>>, vector<1x17x128xf32>
      tpu.vector_store %arg15[%c0_82, %c0_83, %c0_84], %172 {strides = array<i32>} : memref<1x17x128xf32, #tpu.memory_space<vmem>>, vector<1x17x128xf32>,
    } else {
    }
    %c0 = arith.constant 0 : index
    %c0_1 = arith.constant 0 : index
    %c0_2 = arith.constant 0 : index
    %3 = vector.load %arg15[%c0, %c0_1, %c0_2] : memref<1x17x128xf32, #tpu.memory_space<vmem>>, vector<1x17x128xf32>
    %4 = vector.shape_cast %3 : vector<1x17x128xf32> to vector<17x128xf32>
    %c0_3 = arith.constant 0 : index
    %c0_4 = arith.constant 0 : index
    %c0_5 = arith.constant 0 : index
    %5 = vector.load %arg3[%c0_3, %c0_4, %c0_5] : memref<1x1x128xf32, #tpu.memory_space<vmem>>, vector<1x1x128xf32>
    %6 = vector.shape_cast %5 : vector<1x1x128xf32> to vector<1x128xf32>
    %c0_6 = arith.constant 0 : index
    %c0_7 = arith.constant 0 : index
    %c0_8 = arith.constant 0 : index
    %7 = vector.load %arg4[%c0_6, %c0_7, %c0_8] : memref<1x1x128xf32, #tpu.memory_space<vmem>>, vector<1x1x128xf32>
    %8 = vector.shape_cast %7 : vector<1x1x128xf32> to vector<1x128xf32>
    %cst = arith.constant dense<0.000000e+00> : vector<17xf32>
    %9 = vector.multi_reduction <add>, %4, %cst [1] : vector<17x128xf32> to vector<17xf32>
    %10 = vector.shape_cast %9 : vector<17xf32> to vector<17x1xf32>
    %cst_9 = arith.constant 1.280000e+02 : f32
    %11 = vector.broadcast %cst_9 : f32 to vector<17x1xf32>
    %12 = arith.divf %10, %11 : vector<17x1xf32>
    %13 = vector.broadcast %12 : vector<17x1xf32> to vector<17x128xf32>
    %14 = arith.subf %4, %13 : vector<17x128xf32>
    %15 = arith.mulf %14, %14 : vector<17x128xf32>
    %cst_10 = arith.constant dense<0.000000e+00> : vector<17xf32>
    %16 = vector.multi_reduction <add>, %15, %cst_10 [1] : vector<17x128xf32> to vector<17xf32>
    %17 = vector.shape_cast %16 : vector<17xf32> to vector<17x1xf32>
    %cst_11 = arith.constant 1.280000e+02 : f32
    %18 = vector.broadcast %cst_11 : f32 to vector<17x1xf32>
    %19 = arith.divf %17, %18 : vector<17x1xf32>
    %20 = vector.broadcast %12 : vector<17x1xf32> to vector<17x128xf32>
    %21 = arith.subf %4, %20 : vector<17x128xf32>
    %cst_12 = arith.constant 9.99999996E-13 : f32
    %22 = vector.broadcast %cst_12 : f32 to vector<17x1xf32>
    %23 = arith.addf %19, %22 : vector<17x1xf32>
    %24 = math.rsqrt %23 : vector<17x1xf32>
    %25 = vector.broadcast %24 : vector<17x1xf32> to vector<17x128xf32>
    %26 = arith.mulf %21, %25 : vector<17x128xf32>
    %27 = vector.broadcast %6 : vector<1x128xf32> to vector<17x128xf32>
    %28 = arith.mulf %26, %27 : vector<17x128xf32>
    %29 = vector.broadcast %8 : vector<1x128xf32> to vector<17x128xf32>
    %30 = arith.addf %28, %29 : vector<17x128xf32>
    %c0_13 = arith.constant 0 : index
    %c0_14 = arith.constant 0 : index
    %c0_15 = arith.constant 0 : index
    %31 = vector.load %arg5[%c0_13, %c0_14, %c0_15] : memref<1x128x384xf32, #tpu.memory_space<vmem>>, vector<1x128x384xf32>
    %32 = vector.shape_cast %31 : vector<1x128x384xf32> to vector<128x384xf32>
    %cst_16 = arith.constant dense<0.000000e+00> : vector<17x384xf32>
    %33 = tpu.matmul %30, %32, %cst_16 {dimension_numbers = #tpu.dot_dimension_numbers<[1], [0], [0], [1], [0, 0, 1, 1], [], []>} : vector<17x128xf32>, vector<128x384xf32>, vector<17x384xf32> -> vector<17x384xf32>
    %c0_17 = arith.constant 0 : index
    %c0_18 = arith.constant 0 : index
    %c0_19 = arith.constant 0 : index
    %34 = vector.load %arg6[%c0_17, %c0_18, %c0_19] : memref<1x1x384xf32, #tpu.memory_space<vmem>>, vector<1x1x384xf32>
    %35 = vector.shape_cast %34 : vector<1x1x384xf32> to vector<1x384xf32>
    %36 = vector.broadcast %35 : vector<1x384xf32> to vector<17x384xf32>
    %37 = arith.addf %33, %36 : vector<17x384xf32>
    %38 = vector.extract_strided_slice %37 {offsets = [0, 0], sizes = [17, 32], strides = [1, 1]} : vector<17x384xf32> to vector<17x32xf32>
    %39 = vector.extract_strided_slice %37 {offsets = [0, 128], sizes = [17, 32], strides = [1, 1]} : vector<17x384xf32> to vector<17x32xf32>
    %40 = vector.extract_strided_slice %37 {offsets = [0, 256], sizes = [17, 32], strides = [1, 1]} : vector<17x384xf32> to vector<17x32xf32>
    %cst_20 = arith.constant dense<0.000000e+00> : vector<17x17xf32>
    %41 = tpu.matmul %38, %39, %cst_20 {dimension_numbers = #tpu.dot_dimension_numbers<[1], [1], [0], [0], [0, 0, 1, 0], [], []>} : vector<17x32xf32>, vector<17x32xf32>, vector<17x17xf32> -> vector<17x17xf32>
    %cst_21 = arith.constant 0.176776692 : f32
    %42 = vector.broadcast %cst_21 : f32 to vector<17x17xf32>
    %43 = arith.mulf %41, %42 : vector<17x17xf32>
    %cst_22 = arith.constant dense<0xFF800000> : vector<17xf32>
    %44 = vector.multi_reduction <maximumf>, %43, %cst_22 [1] : vector<17x17xf32> to vector<17xf32>
    %45 = vector.shape_cast %44 : vector<17xf32> to vector<17x1xf32>
    %46 = vector.broadcast %45 : vector<17x1xf32> to vector<17x17xf32>
    %47 = arith.subf %43, %46 : vector<17x17xf32>
    %48 = math.exp %47 : vector<17x17xf32>
    %cst_23 = arith.constant dense<0.000000e+00> : vector<17xf32>
    %49 = vector.multi_reduction <add>, %48, %cst_23 [1] : vector<17x17xf32> to vector<17xf32>
    %50 = vector.shape_cast %49 : vector<17xf32> to vector<17x1xf32>
    %51 = tpu.reciprocal %50 {approx = true} : vector<17x1xf32> -> vector<17x1xf32>
    %52 = vector.broadcast %51 : vector<17x1xf32> to vector<17x17xf32>
    %53 = arith.mulf %48, %52 : vector<17x17xf32>
    %cst_24 = arith.constant dense<0.000000e+00> : vector<17x32xf32>
    %54 = tpu.matmul %53, %40, %cst_24 {dimension_numbers = #tpu.dot_dimension_numbers<[1], [0], [0], [1], [0, 0, 1, 1], [], []>} : vector<17x17xf32>, vector<17x32xf32>, vector<17x32xf32> -> vector<17x32xf32>
    %55 = vector.extract_strided_slice %37 {offsets = [0, 32], sizes = [17, 32], strides = [1, 1]} : vector<17x384xf32> to vector<17x32xf32>
    %56 = vector.extract_strided_slice %37 {offsets = [0, 160], sizes = [17, 32], strides = [1, 1]} : vector<17x384xf32> to vector<17x32xf32>
    %57 = vector.extract_strided_slice %37 {offsets = [0, 288], sizes = [17, 32], strides = [1, 1]} : vector<17x384xf32> to vector<17x32xf32>
    %cst_25 = arith.constant dense<0.000000e+00> : vector<17x17xf32>
    %58 = tpu.matmul %55, %56, %cst_25 {dimension_numbers = #tpu.dot_dimension_numbers<[1], [1], [0], [0], [0, 0, 1, 0], [], []>} : vector<17x32xf32>, vector<17x32xf32>, vector<17x17xf32> -> vector<17x17xf32>
    %cst_26 = arith.constant 0.176776692 : f32
    %59 = vector.broadcast %cst_26 : f32 to vector<17x17xf32>
    %60 = arith.mulf %58, %59 : vector<17x17xf32>
    %cst_27 = arith.constant dense<0xFF800000> : vector<17xf32>
    %61 = vector.multi_reduction <maximumf>, %60, %cst_27 [1] : vector<17x17xf32> to vector<17xf32>
    %62 = vector.shape_cast %61 : vector<17xf32> to vector<17x1xf32>
    %63 = vector.broadcast %62 : vector<17x1xf32> to vector<17x17xf32>
    %64 = arith.subf %60, %63 : vector<17x17xf32>
    %65 = math.exp %64 : vector<17x17xf32>
    %cst_28 = arith.constant dense<0.000000e+00> : vector<17xf32>
    %66 = vector.multi_reduction <add>, %65, %cst_28 [1] : vector<17x17xf32> to vector<17xf32>
    %67 = vector.shape_cast %66 : vector<17xf32> to vector<17x1xf32>
    %68 = tpu.reciprocal %67 {approx = true} : vector<17x1xf32> -> vector<17x1xf32>
    %69 = vector.broadcast %68 : vector<17x1xf32> to vector<17x17xf32>
    %70 = arith.mulf %65, %69 : vector<17x17xf32>
    %cst_29 = arith.constant dense<0.000000e+00> : vector<17x32xf32>
    %71 = tpu.matmul %70, %57, %cst_29 {dimension_numbers = #tpu.dot_dimension_numbers<[1], [0], [0], [1], [0, 0, 1, 1], [], []>} : vector<17x17xf32>, vector<17x32xf32>, vector<17x32xf32> -> vector<17x32xf32>
    %72 = vector.extract_strided_slice %37 {offsets = [0, 64], sizes = [17, 32], strides = [1, 1]} : vector<17x384xf32> to vector<17x32xf32>
    %73 = vector.extract_strided_slice %37 {offsets = [0, 192], sizes = [17, 32], strides = [1, 1]} : vector<17x384xf32> to vector<17x32xf32>
    %74 = vector.extract_strided_slice %37 {offsets = [0, 320], sizes = [17, 32], strides = [1, 1]} : vector<17x384xf32> to vector<17x32xf32>
    %cst_30 = arith.constant dense<0.000000e+00> : vector<17x17xf32>
    %75 = tpu.matmul %72, %73, %cst_30 {dimension_numbers = #tpu.dot_dimension_numbers<[1], [1], [0], [0], [0, 0, 1, 0], [], []>} : vector<17x32xf32>, vector<17x32xf32>, vector<17x17xf32> -> vector<17x17xf32>
    %cst_31 = arith.constant 0.176776692 : f32
    %76 = vector.broadcast %cst_31 : f32 to vector<17x17xf32>
    %77 = arith.mulf %75, %76 : vector<17x17xf32>
    %cst_32 = arith.constant dense<0xFF800000> : vector<17xf32>
    %78 = vector.multi_reduction <maximumf>, %77, %cst_32 [1] : vector<17x17xf32> to vector<17xf32>
    %79 = vector.shape_cast %78 : vector<17xf32> to vector<17x1xf32>
    %80 = vector.broadcast %79 : vector<17x1xf32> to vector<17x17xf32>
    %81 = arith.subf %77, %80 : vector<17x17xf32>
    %82 = math.exp %81 : vector<17x17xf32>
    %cst_33 = arith.constant dense<0.000000e+00> : vector<17xf32>
    %83 = vector.multi_reduction <add>, %82, %cst_33 [1] : vector<17x17xf32> to vector<17xf32>
    %84 = vector.shape_cast %83 : vector<17xf32> to vector<17x1xf32>
    %85 = tpu.reciprocal %84 {approx = true} : vector<17x1xf32> -> vector<17x1xf32>
    %86 = vector.broadcast %85 : vector<17x1xf32> to vector<17x17xf32>
    %87 = arith.mulf %82, %86 : vector<17x17xf32>
    %cst_34 = arith.constant dense<0.000000e+00> : vector<17x32xf32>
    %88 = tpu.matmul %87, %74, %cst_34 {dimension_numbers = #tpu.dot_dimension_numbers<[1], [0], [0], [1], [0, 0, 1, 1], [], []>} : vector<17x17xf32>, vector<17x32xf32>, vector<17x32xf32> -> vector<17x32xf32>
    %89 = vector.extract_strided_slice %37 {offsets = [0, 96], sizes = [17, 32], strides = [1, 1]} : vector<17x384xf32> to vector<17x32xf32>
    %90 = vector.extract_strided_slice %37 {offsets = [0, 224], sizes = [17, 32], strides = [1, 1]} : vector<17x384xf32> to vector<17x32xf32>
    %91 = vector.extract_strided_slice %37 {offsets = [0, 352], sizes = [17, 32], strides = [1, 1]} : vector<17x384xf32> to vector<17x32xf32>
    %cst_35 = arith.constant dense<0.000000e+00> : vector<17x17xf32>
    %92 = tpu.matmul %89, %90, %cst_35 {dimension_numbers = #tpu.dot_dimension_numbers<[1], [1], [0], [0], [0, 0, 1, 0], [], []>} : vector<17x32xf32>, vector<17x32xf32>, vector<17x17xf32> -> vector<17x17xf32>
    %cst_36 = arith.constant 0.176776692 : f32
    %93 = vector.broadcast %cst_36 : f32 to vector<17x17xf32>
    %94 = arith.mulf %92, %93 : vector<17x17xf32>
    %cst_37 = arith.constant dense<0xFF800000> : vector<17xf32>
    %95 = vector.multi_reduction <maximumf>, %94, %cst_37 [1] : vector<17x17xf32> to vector<17xf32>
    %96 = vector.shape_cast %95 : vector<17xf32> to vector<17x1xf32>
    %97 = vector.broadcast %96 : vector<17x1xf32> to vector<17x17xf32>
    %98 = arith.subf %94, %97 : vector<17x17xf32>
    %99 = math.exp %98 : vector<17x17xf32>
    %cst_38 = arith.constant dense<0.000000e+00> : vector<17xf32>
    %100 = vector.multi_reduction <add>, %99, %cst_38 [1] : vector<17x17xf32> to vector<17xf32>
    %101 = vector.shape_cast %100 : vector<17xf32> to vector<17x1xf32>
    %102 = tpu.reciprocal %101 {approx = true} : vector<17x1xf32> -> vector<17x1xf32>
    %103 = vector.broadcast %102 : vector<17x1xf32> to vector<17x17xf32>
    %104 = arith.mulf %99, %103 : vector<17x17xf32>
    %cst_39 = arith.constant dense<0.000000e+00> : vector<17x32xf32>
    %105 = tpu.matmul %104, %91, %cst_39 {dimension_numbers = #tpu.dot_dimension_numbers<[1], [0], [0], [1], [0, 0, 1, 1], [], []>} : vector<17x17xf32>, vector<17x32xf32>, vector<17x32xf32> -> vector<17x32xf32>
    %106 = tpu.concatenate %54, %71, %88, %105 in 1 : vector<17x32xf32>, vector<17x32xf32>, vector<17x32xf32>, vector<17x32xf32> -> vector<17x128xf32>
    %c0_40 = arith.constant 0 : index
    %c0_41 = arith.constant 0 : index
    %c0_42 = arith.constant 0 : index
    %107 = vector.load %arg7[%c0_40, %c0_41, %c0_42] : memref<1x128x128xf32, #tpu.memory_space<vmem>>, vector<1x128x128xf32>
    %108 = vector.shape_cast %107 : vector<1x128x128xf32> to vector<128x128xf32>
    %cst_43 = arith.constant dense<0.000000e+00> : vector<17x128xf32>
    %109 = tpu.matmul %106, %108, %cst_43 {dimension_numbers = #tpu.dot_dimension_numbers<[1], [0], [0], [1], [0, 0, 1, 1], [], []>} : vector<17x128xf32>, vector<128x128xf32>, vector<17x128xf32> -> vector<17x128xf32>
    %c0_44 = arith.constant 0 : index
    %c0_45 = arith.constant 0 : index
    %c0_46 = arith.constant 0 : index
    %110 = vector.load %arg8[%c0_44, %c0_45, %c0_46] : memref<1x1x128xf32, #tpu.memory_space<vmem>>, vector<1x1x128xf32>
    %111 = vector.shape_cast %110 : vector<1x1x128xf32> to vector<1x128xf32>
    %112 = vector.broadcast %111 : vector<1x128xf32> to vector<17x128xf32>
    %113 = arith.addf %109, %112 : vector<17x128xf32>
    %114 = arith.addf %4, %113 : vector<17x128xf32>
    %c0_47 = arith.constant 0 : index
    %c0_48 = arith.constant 0 : index
    %c0_49 = arith.constant 0 : index
    %115 = vector.load %arg9[%c0_47, %c0_48, %c0_49] : memref<1x1x128xf32, #tpu.memory_space<vmem>>, vector<1x1x128xf32>
    %116 = vector.shape_cast %115 : vector<1x1x128xf32> to vector<1x128xf32>
    %c0_50 = arith.constant 0 : index
    %c0_51 = arith.constant 0 : index
    %c0_52 = arith.constant 0 : index
    %117 = vector.load %arg10[%c0_50, %c0_51, %c0_52] : memref<1x1x128xf32, #tpu.memory_space<vmem>>, vector<1x1x128xf32>
    %118 = vector.shape_cast %117 : vector<1x1x128xf32> to vector<1x128xf32>
    %cst_53 = arith.constant dense<0.000000e+00> : vector<17xf32>
    %119 = vector.multi_reduction <add>, %114, %cst_53 [1] : vector<17x128xf32> to vector<17xf32>
    %120 = vector.shape_cast %119 : vector<17xf32> to vector<17x1xf32>
    %cst_54 = arith.constant 1.280000e+02 : f32
    %121 = vector.broadcast %cst_54 : f32 to vector<17x1xf32>
    %122 = arith.divf %120, %121 : vector<17x1xf32>
    %123 = vector.broadcast %122 : vector<17x1xf32> to vector<17x128xf32>
    %124 = arith.subf %114, %123 : vector<17x128xf32>
    %125 = arith.mulf %124, %124 : vector<17x128xf32>
    %cst_55 = arith.constant dense<0.000000e+00> : vector<17xf32>
    %126 = vector.multi_reduction <add>, %125, %cst_55 [1] : vector<17x128xf32> to vector<17xf32>
    %127 = vector.shape_cast %126 : vector<17xf32> to vector<17x1xf32>
    %cst_56 = arith.constant 1.280000e+02 : f32
    %128 = vector.broadcast %cst_56 : f32 to vector<17x1xf32>
    %129 = arith.divf %127, %128 : vector<17x1xf32>
    %130 = vector.broadcast %122 : vector<17x1xf32> to vector<17x128xf32>
    %131 = arith.subf %114, %130 : vector<17x128xf32>
    %cst_57 = arith.constant 9.99999996E-13 : f32
    %132 = vector.broadcast %cst_57 : f32 to vector<17x1xf32>
    %133 = arith.addf %129, %132 : vector<17x1xf32>
    %134 = math.rsqrt %133 : vector<17x1xf32>
    %135 = vector.broadcast %134 : vector<17x1xf32> to vector<17x128xf32>
    %136 = arith.mulf %131, %135 : vector<17x128xf32>
    %137 = vector.broadcast %116 : vector<1x128xf32> to vector<17x128xf32>
    %138 = arith.mulf %136, %137 : vector<17x128xf32>
    %139 = vector.broadcast %118 : vector<1x128xf32> to vector<17x128xf32>
    %140 = arith.addf %138, %139 : vector<17x128xf32>
    %c0_58 = arith.constant 0 : index
    %c0_59 = arith.constant 0 : index
    %c0_60 = arith.constant 0 : index
    %141 = vector.load %arg11[%c0_58, %c0_59, %c0_60] : memref<1x128x256xf32, #tpu.memory_space<vmem>>, vector<1x128x256xf32>
    %142 = vector.shape_cast %141 : vector<1x128x256xf32> to vector<128x256xf32>
    %cst_61 = arith.constant dense<0.000000e+00> : vector<17x256xf32>
    %143 = tpu.matmul %140, %142, %cst_61 {dimension_numbers = #tpu.dot_dimension_numbers<[1], [0], [0], [1], [0, 0, 1, 1], [], []>} : vector<17x128xf32>, vector<128x256xf32>, vector<17x256xf32> -> vector<17x256xf32>
    %c0_62 = arith.constant 0 : index
    %c0_63 = arith.constant 0 : index
    %c0_64 = arith.constant 0 : index
    %144 = vector.load %arg12[%c0_62, %c0_63, %c0_64] : memref<1x1x256xf32, #tpu.memory_space<vmem>>, vector<1x1x256xf32>
    %145 = vector.shape_cast %144 : vector<1x1x256xf32> to vector<1x256xf32>
    %146 = vector.broadcast %145 : vector<1x256xf32> to vector<17x256xf32>
    %147 = arith.addf %143, %146 : vector<17x256xf32>
    %cst_65 = arith.constant 5.000000e-01 : f32
    %148 = vector.broadcast %cst_65 : f32 to vector<17x256xf32>
    %149 = arith.mulf %148, %147 : vector<17x256xf32>
    %cst_66 = arith.constant 4.471500e-02 : f32
    %150 = vector.broadcast %cst_66 : f32 to vector<17x256xf32>
    %151 = arith.mulf %150, %147 : vector<17x256xf32>
    %152 = arith.mulf %151, %147 : vector<17x256xf32>
    %153 = arith.mulf %152, %147 : vector<17x256xf32>
    %154 = arith.addf %147, %153 : vector<17x256xf32>
    %cst_67 = arith.constant 0.797884583 : f32
    %155 = vector.broadcast %cst_67 : f32 to vector<17x256xf32>
    %156 = arith.mulf %155, %154 : vector<17x256xf32>
    %157 = math.tanh %156 : vector<17x256xf32>
    %cst_68 = arith.constant 1.000000e+00 : f32
    %158 = vector.broadcast %cst_68 : f32 to vector<17x256xf32>
    %159 = arith.addf %158, %157 : vector<17x256xf32>
    %160 = arith.mulf %149, %159 : vector<17x256xf32>
    %c0_69 = arith.constant 0 : index
    %c0_70 = arith.constant 0 : index
    %c0_71 = arith.constant 0 : index
    %161 = vector.load %arg13[%c0_69, %c0_70, %c0_71] : memref<1x256x128xf32, #tpu.memory_space<vmem>>, vector<1x256x128xf32>
    %162 = vector.shape_cast %161 : vector<1x256x128xf32> to vector<256x128xf32>
    %cst_72 = arith.constant dense<0.000000e+00> : vector<17x128xf32>
    %163 = tpu.matmul %160, %162, %cst_72 {dimension_numbers = #tpu.dot_dimension_numbers<[1], [0], [0], [1], [0, 0, 1, 1], [], []>} : vector<17x256xf32>, vector<256x128xf32>, vector<17x128xf32> -> vector<17x128xf32>
    %c0_73 = arith.constant 0 : index
    %c0_74 = arith.constant 0 : index
    %c0_75 = arith.constant 0 : index
    %164 = vector.load %arg14[%c0_73, %c0_74, %c0_75] : memref<1x1x128xf32, #tpu.memory_space<vmem>>, vector<1x1x128xf32>
    %165 = vector.shape_cast %164 : vector<1x1x128xf32> to vector<1x128xf32>
    %166 = vector.broadcast %165 : vector<1x128xf32> to vector<17x128xf32>
    %167 = arith.addf %163, %166 : vector<17x128xf32>
    %168 = arith.addf %114, %167 : vector<17x128xf32>
    %c0_76 = arith.constant 0 : index
    %c0_77 = arith.constant 0 : index
    %c0_78 = arith.constant 0 : index
    %169 = vector.load %arg15[%c0_76, %c0_77, %c0_78] : memref<1x17x128xf32, #tpu.memory_space<vmem>>, vector<1x17x128xf32>
    %170 = vector.shape_cast %169 : vector<1x17x128xf32> to vector<17x128xf32>
    %171 = vector.shape_cast %168 : vector<17x128xf32> to vector<1x17x128xf32>
    tpu.vector_store %arg15[%c0_76, %c0_77, %c0_78], %171 {strides = array<i32>} : memref<1x17x128xf32, #tpu.memory_space<vmem>>, vector<1x17x128xf32>,
    return
  }
  func.func @transform_0(%arg0: i32, %arg1: i32) -> (i32, i32, i32) {
    %c0_i32 = arith.constant 0 : i32
    %c0_i32_0 = arith.constant 0 : i32
    %c0_i32_1 = arith.constant 0 : i32
    return %arg0, %c0_i32, %c0_i32_0 : i32, i32, i32
  }
  func.func @transform_1(%arg0: i32, %arg1: i32) -> (i32, i32, i32) {
    %c0_i32 = arith.constant 0 : i32
    %c0_i32_0 = arith.constant 0 : i32
    %c0_i32_1 = arith.constant 0 : i32
    return %arg1, %c0_i32, %c0_i32_0 : i32, i32, i32
  }
  func.func @transform_2(%arg0: i32, %arg1: i32) -> (i32, i32, i32) {
    %c0_i32 = arith.constant 0 : i32
    %c0_i32_0 = arith.constant 0 : i32
    %c0_i32_1 = arith.constant 0 : i32
    return %arg1, %c0_i32, %c0_i32_0 : i32, i32, i32
  }
  func.func @transform_3(%arg0: i32, %arg1: i32) -> (i32, i32, i32) {
    %c0_i32 = arith.constant 0 : i32
    %c0_i32_0 = arith.constant 0 : i32
    %c0_i32_1 = arith.constant 0 : i32
    return %arg1, %c0_i32, %c0_i32_0 : i32, i32, i32
  }
  func.func @transform_4(%arg0: i32, %arg1: i32) -> (i32, i32, i32) {
    %c0_i32 = arith.constant 0 : i32
    %c0_i32_0 = arith.constant 0 : i32
    %c0_i32_1 = arith.constant 0 : i32
    return %arg1, %c0_i32, %c0_i32_0 : i32, i32, i32
  }
  func.func @transform_5(%arg0: i32, %arg1: i32) -> (i32, i32, i32) {
    %c0_i32 = arith.constant 0 : i32
    %c0_i32_0 = arith.constant 0 : i32
    %c0_i32_1 = arith.constant 0 : i32
    return %arg1, %c0_i32, %c0_i32_0 : i32, i32, i32
  }
  func.func @transform_6(%arg0: i32, %arg1: i32) -> (i32, i32, i32) {
    %c0_i32 = arith.constant 0 : i32
    %c0_i32_0 = arith.constant 0 : i32
    %c0_i32_1 = arith.constant 0 : i32
    return %arg1, %c0_i32, %c0_i32_0 : i32, i32, i32
  }
  func.func @transform_7(%arg0: i32, %arg1: i32) -> (i32, i32, i32) {
    %c0_i32 = arith.constant 0 : i32
    %c0_i32_0 = arith.constant 0 : i32
    %c0_i32_1 = arith.constant 0 : i32
    return %arg1, %c0_i32, %c0_i32_0 : i32, i32, i32
  }
  func.func @transform_8(%arg0: i32, %arg1: i32) -> (i32, i32, i32) {
    %c0_i32 = arith.constant 0 : i32
    %c0_i32_0 = arith.constant 0 : i32
    %c0_i32_1 = arith.constant 0 : i32
    return %arg1, %c0_i32, %c0_i32_0 : i32, i32, i32
  }
  func.func @transform_9(%arg0: i32, %arg1: i32) -> (i32, i32, i32) {
    %c0_i32 = arith.constant 0 : i32
    %c0_i32_0 = arith.constant 0 : i32
    %c0_i32_1 = arith.constant 0 : i32
    return %arg1, %c0_i32, %c0_i32_0 : i32, i32, i32
  }
  func.func @transform_10(%arg0: i32, %arg1: i32) -> (i32, i32, i32) {
    %c0_i32 = arith.constant 0 : i32
    %c0_i32_0 = arith.constant 0 : i32
    %c0_i32_1 = arith.constant 0 : i32
    return %arg1, %c0_i32, %c0_i32_0 : i32, i32, i32
  }
  func.func @transform_11(%arg0: i32, %arg1: i32) -> (i32, i32, i32) {
    %c0_i32 = arith.constant 0 : i32
    %c0_i32_0 = arith.constant 0 : i32
    %c0_i32_1 = arith.constant 0 : i32
    return %arg1, %c0_i32, %c0_i32_0 : i32, i32, i32
  }
  func.func @transform_12(%arg0: i32, %arg1: i32) -> (i32, i32, i32) {
    %c0_i32 = arith.constant 0 : i32
    %c0_i32_0 = arith.constant 0 : i32
    %c0_i32_1 = arith.constant 0 : i32
    return %arg1, %c0_i32, %c0_i32_0 : i32, i32, i32
  }
  func.func @transform_13(%arg0: i32, %arg1: i32) -> (i32, i32, i32) {
    %c0_i32 = arith.constant 0 : i32
    %c0_i32_0 = arith.constant 0 : i32
    %c0_i32_1 = arith.constant 0 : i32
    return %arg0, %c0_i32, %c0_i32_0 : i32, i32, i32
  }
}

module attributes {stable_mosaic.version = 11 : i64} {
  func.func @_head_kernel(%arg0: i32, %arg1: memref<2x128xf32, #tpu.memory_space<vmem>>, %arg2: memref<1x128xf32, #tpu.memory_space<vmem>>, %arg3: memref<1x128xf32, #tpu.memory_space<vmem>>, %arg4: memref<128x10xf32, #tpu.memory_space<vmem>>, %arg5: memref<1x10xf32, #tpu.memory_space<vmem>>, %arg6: memref<2x10xf32, #tpu.memory_space<vmem>>) attributes {dimension_semantics = [#tpu.dimension_semantics<arbitrary>], iteration_bounds = array<i64: 1>, scalar_prefetch = 0 : i64, scratch_operands = 0 : i64, tpu.core_type = #tpu.core_type<tc>, window_params = [{pipeline_mode = #tpu.pipeline_mode<synchronous>, transform_indices = @transform_0, window_bounds = array<i64: 2, 128>}, {pipeline_mode = #tpu.pipeline_mode<synchronous>, transform_indices = @transform_1, window_bounds = array<i64: 1, 128>}, {pipeline_mode = #tpu.pipeline_mode<synchronous>, transform_indices = @transform_2, window_bounds = array<i64: 1, 128>}, {pipeline_mode = #tpu.pipeline_mode<synchronous>, transform_indices = @transform_3, window_bounds = array<i64: 128, 10>}, {pipeline_mode = #tpu.pipeline_mode<synchronous>, transform_indices = @transform_4, window_bounds = array<i64: 1, 10>}, {pipeline_mode = #tpu.pipeline_mode<synchronous>, transform_indices = @transform_5, window_bounds = array<i64: 2, 10>}]} {
    %c0 = arith.constant 0 : index
    %c0_0 = arith.constant 0 : index
    %0 = vector.load %arg1[%c0, %c0_0] : memref<2x128xf32, #tpu.memory_space<vmem>>, vector<2x128xf32>
    %cst = arith.constant dense<0.000000e+00> : vector<2xf32>
    %1 = vector.multi_reduction <add>, %0, %cst [1] : vector<2x128xf32> to vector<2xf32>
    %2 = vector.shape_cast %1 : vector<2xf32> to vector<2x1xf32>
    %cst_1 = arith.constant 1.280000e+02 : f32
    %3 = vector.broadcast %cst_1 : f32 to vector<2x1xf32>
    %4 = arith.divf %2, %3 : vector<2x1xf32>
    %5 = vector.broadcast %4 : vector<2x1xf32> to vector<2x128xf32>
    %6 = arith.subf %0, %5 : vector<2x128xf32>
    %7 = arith.mulf %6, %6 : vector<2x128xf32>
    %cst_2 = arith.constant dense<0.000000e+00> : vector<2xf32>
    %8 = vector.multi_reduction <add>, %7, %cst_2 [1] : vector<2x128xf32> to vector<2xf32>
    %9 = vector.shape_cast %8 : vector<2xf32> to vector<2x1xf32>
    %cst_3 = arith.constant 1.280000e+02 : f32
    %10 = vector.broadcast %cst_3 : f32 to vector<2x1xf32>
    %11 = arith.divf %9, %10 : vector<2x1xf32>
    %12 = vector.broadcast %4 : vector<2x1xf32> to vector<2x128xf32>
    %13 = arith.subf %0, %12 : vector<2x128xf32>
    %cst_4 = arith.constant 9.99999996E-13 : f32
    %14 = vector.broadcast %cst_4 : f32 to vector<2x1xf32>
    %15 = arith.addf %11, %14 : vector<2x1xf32>
    %16 = math.rsqrt %15 : vector<2x1xf32>
    %17 = vector.broadcast %16 : vector<2x1xf32> to vector<2x128xf32>
    %18 = arith.mulf %13, %17 : vector<2x128xf32>
    %c0_5 = arith.constant 0 : index
    %c0_6 = arith.constant 0 : index
    %19 = vector.load %arg2[%c0_5, %c0_6] : memref<1x128xf32, #tpu.memory_space<vmem>>, vector<1x128xf32>
    %20 = vector.broadcast %19 : vector<1x128xf32> to vector<2x128xf32>
    %21 = arith.mulf %18, %20 : vector<2x128xf32>
    %c0_7 = arith.constant 0 : index
    %c0_8 = arith.constant 0 : index
    %22 = vector.load %arg3[%c0_7, %c0_8] : memref<1x128xf32, #tpu.memory_space<vmem>>, vector<1x128xf32>
    %23 = vector.broadcast %22 : vector<1x128xf32> to vector<2x128xf32>
    %24 = arith.addf %21, %23 : vector<2x128xf32>
    %c0_9 = arith.constant 0 : index
    %c0_10 = arith.constant 0 : index
    %25 = vector.load %arg4[%c0_9, %c0_10] : memref<128x10xf32, #tpu.memory_space<vmem>>, vector<128x10xf32>
    %cst_11 = arith.constant dense<0.000000e+00> : vector<2x10xf32>
    %26 = tpu.matmul %24, %25, %cst_11 {dimension_numbers = #tpu.dot_dimension_numbers<[1], [0], [0], [1], [0, 0, 1, 1], [], []>} : vector<2x128xf32>, vector<128x10xf32>, vector<2x10xf32> -> vector<2x10xf32>
    %c0_12 = arith.constant 0 : index
    %c0_13 = arith.constant 0 : index
    %27 = vector.load %arg5[%c0_12, %c0_13] : memref<1x10xf32, #tpu.memory_space<vmem>>, vector<1x10xf32>
    %28 = vector.broadcast %27 : vector<1x10xf32> to vector<2x10xf32>
    %29 = arith.addf %26, %28 : vector<2x10xf32>
    %c0_14 = arith.constant 0 : index
    %c0_15 = arith.constant 0 : index
    %30 = vector.load %arg6[%c0_14, %c0_15] : memref<2x10xf32, #tpu.memory_space<vmem>>, vector<2x10xf32>
    tpu.vector_store %arg6[%c0_14, %c0_15], %29 {strides = array<i32>} : memref<2x10xf32, #tpu.memory_space<vmem>>, vector<2x10xf32>,
    return
  }
  func.func @transform_0(%arg0: i32) -> (i32, i32) {
    %c0_i32 = arith.constant 0 : i32
    %c0_i32_0 = arith.constant 0 : i32
    %c0_i32_1 = arith.constant 0 : i32
    return %c0_i32, %c0_i32_0 : i32, i32
  }
  func.func @transform_1(%arg0: i32) -> (i32, i32) {
    %c0_i32 = arith.constant 0 : i32
    %c0_i32_0 = arith.constant 0 : i32
    %c0_i32_1 = arith.constant 0 : i32
    return %c0_i32, %c0_i32_0 : i32, i32
  }
  func.func @transform_2(%arg0: i32) -> (i32, i32) {
    %c0_i32 = arith.constant 0 : i32
    %c0_i32_0 = arith.constant 0 : i32
    %c0_i32_1 = arith.constant 0 : i32
    return %c0_i32, %c0_i32_0 : i32, i32
  }
  func.func @transform_3(%arg0: i32) -> (i32, i32) {
    %c0_i32 = arith.constant 0 : i32
    %c0_i32_0 = arith.constant 0 : i32
    %c0_i32_1 = arith.constant 0 : i32
    return %c0_i32, %c0_i32_0 : i32, i32
  }
  func.func @transform_4(%arg0: i32) -> (i32, i32) {
    %c0_i32 = arith.constant 0 : i32
    %c0_i32_0 = arith.constant 0 : i32
    %c0_i32_1 = arith.constant 0 : i32
    return %c0_i32, %c0_i32_0 : i32, i32
  }
  func.func @transform_5(%arg0: i32) -> (i32, i32) {
    %c0_i32 = arith.constant 0 : i32
    %c0_i32_0 = arith.constant 0 : i32
    %c0_i32_1 = arith.constant 0 : i32
    return %c0_i32, %c0_i32_0 : i32, i32
  }
}

</mosaic_0001>

<llo_original>
// kernel: cifar10_transformer_forward.3
$region0: #{cifar10_transformer_forward.3}
  #allocation0 [shape = 'u32[]', space=smem, size = 0x4, offset = 0x4, fixed_abs, tag = 'smem constant byte address 0x4 - core index']
  #allocation1 [shape = 'u32[144,128]{1,0:T(1,128)}', space=vmem, size = 0x12000, scoped, tag = 'internal scratch']
  %s0 = inlined_call_operand.vmem [shape: f32[32,48], index: 0, kind: input, shape index: {}]
  %s1 = inlined_call_operand.vmem [shape: f32[48,128], index: 1, kind: input, shape index: {}]
  %s2 = inlined_call_operand.vmem [shape: f32[1,128], index: 2, kind: input, shape index: {}]
  %s3 = inlined_call_operand.vmem [shape: f32[32,128], index: 3, kind: output, shape index: {}]
  %s4 = sld [smem:[#allocation0]]
  $region22: #{cifar10_transformer_forward.3} parent=0
    _
  %s6 = ssub.s32 1, %s4
  %s7 = scalar_select 0, %s6, %s4
  // Predicated region
  $region2: #{cifar10_transformer_forward.3} parent=0 // pred_check
    _
  $region3: #{cifar10_transformer_forward.3} parent=0 // pred_check_branch
    %9 = sbr.rel (0) target = $region5
  $region4: #{cifar10_transformer_forward.3} parent=0 // pred_region
    _
  $region5: #{cifar10_transformer_forward.3} parent=0 // pred_fallthru
    _
  // Predicated region
  $region6: #{cifar10_transformer_forward.3} parent=0 // pred_check
    _
  $region7: #{cifar10_transformer_forward.3} parent=0 // pred_check_branch
    %11 = sbr.rel (0) target = $region9
  $region8: #{cifar10_transformer_forward.3} parent=0 // pred_region
    _
  $region9: #{cifar10_transformer_forward.3} parent=0 // pred_fallthru
    _
  // Predicated region
  $region10: #{cifar10_transformer_forward.3} parent=0 // pred_check
    _
  $region11: #{cifar10_transformer_forward.3} parent=0 // pred_check_branch
    %13 = sbr.rel (0) target = $region13
  $region12: #{cifar10_transformer_forward.3} parent=0 // pred_region
    _
  $region13: #{cifar10_transformer_forward.3} parent=0 // pred_fallthru
    _
  %v14 = vld [vmem:[%s0] sm:$0xff]
  %v15 = vld [vmem:[%s0 + $0x8] sm:$0xff]
  %v16 = vld [vmem:[%s0 + $0x10] sm:$0xff]
  %v17 = vld [vmem:[%s0 + $0x18] sm:$0xff]
  %v18 = vsub.f32 %v14, 0.5
  %v19 = vsub.f32 %v15, 0.5
  %v20 = vsub.f32 %v16, 0.5
  %v21 = vsub.f32 %v17, 0.5
  %v22 = vmul.f32 %v18, 2.0
  %v23 = vmul.f32 %v19, 2.0
  %v24 = vmul.f32 %v20, 2.0
  %v25 = vmul.f32 %v21, 2.0
  %v26 = vld [vmem:[%s1] sm:$0xff]
  %v27 = vld [vmem:[%s1 + $0x8] sm:$0xff]
  %v28 = vld [vmem:[%s1 + $0x10] sm:$0xff]
  %v29 = vld [vmem:[%s1 + $0x18] sm:$0xff]
  %v30 = vld [vmem:[%s1 + $0x20] sm:$0xff]
  %v31 = vld [vmem:[%s1 + $0x28] sm:$0xff]
  %v32 = vld [vmem:[%s2] sm:$0x1]
  %v34 = vlaneseq
  %v35 = vshrl.u32 %v34, 7
  %v36 = vsub.s32 0, %v35
  %v37 = vrot.slane %v32, %v36
  %vm39 = vcmask 392192
  %v41 = vsel %vm39, %v22, 0
  %v44 = vsel %vm39, %v23, 0
  %v47 = vsel %vm39, %v24, 0
  %v50 = vsel %vm39, %v25, 0
  %52 = vmatprep.subr.mxu0 0.0
  %53 = vmatpush1.msra.mxu0 0.0
  %54 = vmatprep.subr.mxu0 0.0
  %55 = vmatpush1.msra.mxu0 0.0
  %56 = vmatprep.subr.mxu0 0.0
  %57 = vmatpush1.msra.mxu0 0.0
  %58 = vmatprep.subr.mxu0 0.0
  %59 = vmatpush1.msra.mxu0 0.0
  %60 = vmatprep.subr.mxu0 0.0
  %61 = vmatpush1.msra.mxu0 0.0
  %62 = vmatprep.subr.mxu0 0.0
  %63 = vmatpush1.msra.mxu0 0.0
  %64 = vmatprep.subr.mxu0 0.0
  %65 = vmatpush1.msra.mxu0 0.0
  %66 = vmatprep.subr.mxu0 0.0
  %67 = vmatpush1.msra.mxu0 0.0
  %68 = vmatprep.subr.mxu0 0.0
  %69 = vmatpush1.msra.mxu0 0.0
  %70 = vmatprep.subr.mxu0 0.0
  %71 = vmatpush1.msra.mxu0 0.0
  %72 = vmatprep.subr.mxu0 0.0
  %73 = vmatpush1.msra.mxu0 %v31
  %74 = vmatprep.subr.mxu0 0.0
  %75 = vmatpush1.msra.mxu0 %v30
  %76 = vmatprep.subr.mxu0 0.0
  %77 = vmatpush1.msra.mxu0 %v29
  %78 = vmatprep.subr.mxu0 0.0
  %79 = vmatpush1.msra.mxu0 %v28
  %80 = vmatprep.subr.mxu0 0.0
  %81 = vmatpush1.msra.mxu0 %v27
  %82 = vmatprep.subr.mxu0 0.0
  %83 = vmatpush1.msra.mxu0 %v26
  %84 = vmatprep.subr.mxu0 0.0
  %85 = vmatpush2.msra.mxu0 0.0
  %86 = vmatprep.subr.mxu0 0.0
  %87 = vmatpush2.msra.mxu0 0.0
  %88 = vmatprep.subr.mxu0 0.0
  %89 = vmatpush2.msra.mxu0 0.0
  %90 = vmatprep.subr.mxu0 0.0
  %91 = vmatpush2.msra.mxu0 0.0
  %92 = vmatprep.subr.mxu0 0.0
  %93 = vmatpush2.msra.mxu0 0.0
  %94 = vmatprep.subr.mxu0 0.0
  %95 = vmatpush2.msra.mxu0 0.0
  %96 = vmatprep.subr.mxu0 0.0
  %97 = vmatpush2.msra.mxu0 0.0
  %98 = vmatprep.subr.mxu0 0.0
  %99 = vmatpush2.msra.mxu0 0.0
  %100 = vmatprep.subr.mxu0 0.0
  %101 = vmatpush2.msra.mxu0 0.0
  %102 = vmatprep.subr.mxu0 0.0
  %103 = vmatpush2.msra.mxu0 0.0
  %104 = vmatprep.subr.mxu0 0.0
  %105 = vmatpush2.msra.mxu0 0.0
  %106 = vmatprep.subr.mxu0 0.0
  %107 = vmatpush2.msra.mxu0 0.0
  %108 = vmatprep.subr.mxu0 0.0
  %109 = vmatpush2.msra.mxu0 0.0
  %110 = vmatprep.subr.mxu0 0.0
  %111 = vmatpush2.msra.mxu0 0.0
  %112 = vmatprep.subr.mxu0 0.0
  %113 = vmatpush2.msra.mxu0 0.0
  %114 = vmatprep.subr.mxu0 0.0
  %115 = vmatpush2.msra.mxu0 0.0
  %116 = vmatprep.mubr.f32.mxu0 0.0
  %117 = vmatmul.mubr.f32.gmra.mxu0 %v41
  %v118 = vpop.f32.mrf.mxu0
  %v119 = vadd.f32 %v37, %v118
  %v120 = vpop.f32.mrf.mxu0
  %121 = vmatprep.mubr.f32.mxu0 0.0
  %122 = vmatmul.mubr.f32.gmra.mxu0 %v44
  %v123 = vpop.f32.mrf.mxu0
  %v124 = vadd.f32 %v37, %v123
  %v125 = vpop.f32.mrf.mxu0
  %126 = vmatprep.mubr.f32.mxu0 0.0
  %127 = vmatmul.mubr.f32.gmra.mxu0 %v47
  %v128 = vpop.f32.mrf.mxu0
  %v129 = vadd.f32 %v37, %v128
  %v130 = vpop.f32.mrf.mxu0
  %131 = vmatprep.mubr.f32.mxu0 0.0
  %132 = vmatmul.mubr.f32.gmra.mxu0 %v50
  %v133 = vpop.f32.mrf.mxu0
  %v134 = vadd.f32 %v37, %v133
  %v135 = vpop.f32.mrf.mxu0
  %136 = vdwg.mxu0
  %137 = vst [vmem:[%s3] sm:$0xff] %v119
  %138 = vst [vmem:[%s3 + $0x8] sm:$0xff] %v124
  %139 = vst [vmem:[%s3 + $0x10] sm:$0xff] %v129
  %140 = vst [vmem:[%s3 + $0x18] sm:$0xff] %v134
  // Predicated region
  $region14: #{cifar10_transformer_forward.3} parent=0 // pred_check
    _
  $region15: #{cifar10_transformer_forward.3} parent=0 // pred_check_branch
    %142 = sbr.rel (0) target = $region17
  $region16: #{cifar10_transformer_forward.3} parent=0 // pred_region
    _
  $region17: #{cifar10_transformer_forward.3} parent=0 // pred_fallthru
    _
  // Predicated region
  $region18: #{cifar10_transformer_forward.3} parent=0 // pred_check
    _
  $region19: #{cifar10_transformer_forward.3} parent=0 // pred_check_branch
    %144 = sbr.rel (0) target = $region21
  $region20: #{cifar10_transformer_forward.3} parent=0 // pred_region
    _
  $region21: #{cifar10_transformer_forward.3} parent=0 // pred_fallthru
    _

// kernel: cifar10_transformer_forward.5
$region0: #{cifar10_transformer_forward.5}
  #allocation0 [shape = 'u32[]', space=smem, size = 0x4, offset = 0x4, fixed_abs, tag = 'smem constant byte address 0x4 - core index']
  #allocation1 [shape = 'u32[144,128]{1,0:T(1,128)}', space=vmem, size = 0x12000, scoped, tag = 'internal scratch']
  %s0 = inlined_call_operand.vmem [shape: f32[2,128], index: 0, kind: input, shape index: {}]
  %s1 = inlined_call_operand.vmem [shape: f32[1,128], index: 1, kind: input, shape index: {}]
  %s2 = inlined_call_operand.vmem [shape: f32[1,128], index: 2, kind: input, shape index: {}]
  %s3 = inlined_call_operand.vmem [shape: f32[128,10], index: 3, kind: input, shape index: {}]
  %s4 = inlined_call_operand.vmem [shape: f32[1,10], index: 4, kind: input, shape index: {}]
  %s5 = inlined_call_operand.hbm [shape: f32[2,10], index: 5, kind: output, shape index: {}]
  %s6 = sld [smem:[#allocation0]]
  $region30: #{cifar10_transformer_forward.5} parent=0
    _
  %s8 = ssub.s32 1, %s6
  %s9 = scalar_select 0, %s8, %s6
  $region1: #{cifar10_transformer_forward.5} parent=0
    #allocation2 [shape = 'u8[1024]{0}', space=vmem, size = 0x400, scoped, tag = 'output window, operand 0, single buffered']
    #allocation3 [shape = 's32[1]{0}', space=sflag, size = 0x4, scoped, tag = 'scoped memory for cifar10_transformer_forward.5']
    %10 = vsyncpa [#allocation3], 0
    // Predicated region
    $region2: #{cifar10_transformer_forward.5} parent=1 // pred_check
      _
    $region3: #{cifar10_transformer_forward.5} parent=1 // pred_check_branch
      %12 = sbr.rel (0) target = $region5
    $region4: #{cifar10_transformer_forward.5} parent=1 // pred_region
      _
    $region5: #{cifar10_transformer_forward.5} parent=1 // pred_fallthru
      _
    // Predicated region
    $region6: #{cifar10_transformer_forward.5} parent=1 // pred_check
      _
    $region7: #{cifar10_transformer_forward.5} parent=1 // pred_check_branch
      %14 = sbr.rel (0) target = $region9
    $region8: #{cifar10_transformer_forward.5} parent=1 // pred_region
      _
    $region9: #{cifar10_transformer_forward.5} parent=1 // pred_fallthru
      _
    // Predicated region
    $region10: #{cifar10_transformer_forward.5} parent=1 // pred_check
      _
    $region11: #{cifar10_transformer_forward.5} parent=1 // pred_check_branch
      %16 = sbr.rel (0) target = $region13
    $region12: #{cifar10_transformer_forward.5} parent=1 // pred_region
      _
    $region13: #{cifar10_transformer_forward.5} parent=1 // pred_fallthru
      _
    // Predicated region
    $region14: #{cifar10_transformer_forward.5} parent=1 // pred_check
      _
    $region15: #{cifar10_transformer_forward.5} parent=1 // pred_check_branch
      %18 = sbr.rel (0) target = $region17
    $region16: #{cifar10_transformer_forward.5} parent=1 // pred_region
      _
    $region17: #{cifar10_transformer_forward.5} parent=1 // pred_fallthru
      _
    // Predicated region
    $region18: #{cifar10_transformer_forward.5} parent=1 // pred_check
      _
    $region19: #{cifar10_transformer_forward.5} parent=1 // pred_check_branch
      %20 = sbr.rel (0) target = $region21
    $region20: #{cifar10_transformer_forward.5} parent=1 // pred_region
      _
    $region21: #{cifar10_transformer_forward.5} parent=1 // pred_fallthru
      _
    %v21 = vld [vmem:[%s0] sm:$0x3]
    %vm22 = vcmask 1041408
    %v23 = vsel %vm22, %v21, 0.0
    %24 = vadd.xlane.f32.xlu0 %v23
    %v25 = vpop.xlane.xlu0 %24
    %v26 = vrcp.pop 128.0
    %v27 = vmul.f32 %v25, %v26
    %v28 = vsub.f32 %v21, %v27
    %v29 = vmul.f32 %v28, %v28
    %v30 = vsel %vm22, %v29, 0.0
    %31 = vadd.xlane.f32.xlu0 %v30
    %v32 = vpop.xlane.xlu0 %31
    %v33 = vmul.f32 %v32, %v26
    %v34 = vadd.f32 %v33, 1e-12
    %v35 = vrsqrt.pop %v34
    %v36 = vmul.f32 %v28, %v35
    %v37 = vld [vmem:[%s1] sm:$0x1]
    %v39 = vlaneseq
    %v40 = vshrl.u32 %v39, 7
    %v41 = vsub.s32 0, %v40
    %v42 = vrot.slane %v37, %v41
    %v44 = vmul.f32 %v36, %v42
    %v45 = vld [vmem:[%s2] sm:$0x1]
    %v47 = vlaneseq
    %v48 = vshrl.u32 %v47, 7
    %v49 = vsub.s32 0, %v48
    %v50 = vrot.slane %v45, %v49
    %v52 = vadd.f32 %v44, %v50
    %v53 = vld [vmem:[%s3] sm:$0xff]
    %v54 = vld [vmem:[%s3 + $0x8] sm:$0xff]
    %v55 = vld [vmem:[%s3 + $0x10] sm:$0xff]
    %v56 = vld [vmem:[%s3 + $0x18] sm:$0xff]
    %v57 = vld [vmem:[%s3 + $0x20] sm:$0xff]
    %v58 = vld [vmem:[%s3 + $0x28] sm:$0xff]
    %v59 = vld [vmem:[%s3 + $0x30] sm:$0xff]
    %v60 = vld [vmem:[%s3 + $0x38] sm:$0xff]
    %v61 = vld [vmem:[%s3 + $0x40] sm:$0xff]
    %v62 = vld [vmem:[%s3 + $0x48] sm:$0xff]
    %v63 = vld [vmem:[%s3 + $0x50] sm:$0xff]
    %v64 = vld [vmem:[%s3 + $0x58] sm:$0xff]
    %v65 = vld [vmem:[%s3 + $0x60] sm:$0xff]
    %v66 = vld [vmem:[%s3 + $0x68] sm:$0xff]
    %v67 = vld [vmem:[%s3 + $0x70] sm:$0xff]
    %v68 = vld [vmem:[%s3 + $0x78] sm:$0xff]
    %v69 = vld [vmem:[%s4] sm:$0x1]
    %v71 = vlaneseq
    %v72 = vshrl.u32 %v71, 7
    %v73 = vsub.s32 0, %v72
    %v74 = vrot.slane %v69, %v73
    %76 = vmatprep.subr.mxu0 0.0
    %77 = vmatpush1.msra.mxu0 %v68
    %78 = vmatprep.subr.mxu0 0.0
    %79 = vmatpush1.msra.mxu0 %v67
    %80 = vmatprep.subr.mxu0 0.0
    %81 = vmatpush1.msra.mxu0 %v66
    %82 = vmatprep.subr.mxu0 0.0
    %83 = vmatpush1.msra.mxu0 %v65
    %84 = vmatprep.subr.mxu0 0.0
    %85 = vmatpush1.msra.mxu0 %v64
    %86 = vmatprep.subr.mxu0 0.0
    %87 = vmatpush1.msra.mxu0 %v63
    %88 = vmatprep.subr.mxu0 0.0
    %89 = vmatpush1.msra.mxu0 %v62
    %90 = vmatprep.subr.mxu0 0.0
    %91 = vmatpush1.msra.mxu0 %v61
    %92 = vmatprep.subr.mxu0 0.0
    %93 = vmatpush1.msra.mxu0 %v60
    %94 = vmatprep.subr.mxu0 0.0
    %95 = vmatpush1.msra.mxu0 %v59
    %96 = vmatprep.subr.mxu0 0.0
    %97 = vmatpush1.msra.mxu0 %v58
    %98 = vmatprep.subr.mxu0 0.0
    %99 = vmatpush1.msra.mxu0 %v57
    %100 = vmatprep.subr.mxu0 0.0
    %101 = vmatpush1.msra.mxu0 %v56
    %102 = vmatprep.subr.mxu0 0.0
    %103 = vmatpush1.msra.mxu0 %v55
    %104 = vmatprep.subr.mxu0 0.0
    %105 = vmatpush1.msra.mxu0 %v54
    %106 = vmatprep.subr.mxu0 0.0
    %107 = vmatpush1.msra.mxu0 %v53
    %108 = vmatprep.subr.mxu0 0.0
    %109 = vmatpush2.msra.mxu0 0.0
    %110 = vmatprep.subr.mxu0 0.0
    %111 = vmatpush2.msra.mxu0 0.0
    %112 = vmatprep.subr.mxu0 0.0
    %113 = vmatpush2.msra.mxu0 0.0
    %114 = vmatprep.subr.mxu0 0.0
    %115 = vmatpush2.msra.mxu0 0.0
    %116 = vmatprep.subr.mxu0 0.0
    %117 = vmatpush2.msra.mxu0 0.0
    %118 = vmatprep.subr.mxu0 0.0
    %119 = vmatpush2.msra.mxu0 0.0
    %120 = vmatprep.subr.mxu0 0.0
    %121 = vmatpush2.msra.mxu0 0.0
    %122 = vmatprep.subr.mxu0 0.0
    %123 = vmatpush2.msra.mxu0 0.0
    %124 = vmatprep.subr.mxu0 0.0
    %125 = vmatpush2.msra.mxu0 0.0
    %126 = vmatprep.subr.mxu0 0.0
    %127 = vmatpush2.msra.mxu0 0.0
    %128 = vmatprep.subr.mxu0 0.0
    %129 = vmatpush2.msra.mxu0 0.0
    %130 = vmatprep.subr.mxu0 0.0
    %131 = vmatpush2.msra.mxu0 0.0
    %132 = vmatprep.subr.mxu0 0.0
    %133 = vmatpush2.msra.mxu0 0.0
    %134 = vmatprep.subr.mxu0 0.0
    %135 = vmatpush2.msra.mxu0 0.0
    %136 = vmatprep.subr.mxu0 0.0
    %137 = vmatpush2.msra.mxu0 0.0
    %138 = vmatprep.subr.mxu0 0.0
    %139 = vmatpush2.msra.mxu0 0.0
    %140 = vmatprep.mubr.f32.mxu0 0.0
    %141 = vmatmul.mubr.f32.gmra.mxu0 %v52
    %v142 = vpop.f32.mrf.mxu0
    %v143 = vadd.f32 %v74, %v142
    %v144 = vpop.f32.mrf.mxu0
    %145 = vdwg.mxu0
    %vm146 = vcmask 74752
    %147 = vst.msk [vmem:[#allocation2] sm:$0x3] %vm146, %v143
    // Predicated region
    $region22: #{cifar10_transformer_forward.5} parent=1 // pred_check
      _
    $region23: #{cifar10_transformer_forward.5} parent=1 // pred_check_branch
      %149 = sbr.rel (0) target = $region25
    $region24: #{cifar10_transformer_forward.5} parent=1 // pred_region
      %s151 = ssub.s32 32, 32
      %152 = vsyncadd [#allocation3], %s151
      %s154 = sshll.u32 [#allocation2], 4
      %s155 = int_to_ptr.vmem [resolvable:$true] %s154
      %157 = dma.vmem_to_hbm [thread:$0]  %s155, 32, %s5, [#allocation3]
    $region25: #{cifar10_transformer_forward.5} parent=1 // pred_fallthru
      _
    // Predicated region
    $region26: #{cifar10_transformer_forward.5} parent=1 // pred_check
      _
    $region27: #{cifar10_transformer_forward.5} parent=1 // pred_check_branch
      %159 = sbr.rel (0) target = $region29
    $region28: #{cifar10_transformer_forward.5} parent=1 // pred_region
      %160 = dma.done [#allocation3], 32
    $region29: #{cifar10_transformer_forward.5} parent=1 // pred_fallthru
      _
    %161 = vsyncpa [#allocation3], 1

// kernel: cifar10_transformer_forward.4
$region0: #{cifar10_transformer_forward.4}
  #allocation0 [shape = 'u32[]', space=smem, size = 0x4, offset = 0x4, fixed_abs, tag = 'smem constant byte address 0x4 - core index']
  #allocation1 [shape = 'u32[144,128]{1,0:T(1,128)}', space=vmem, size = 0x12000, scoped, tag = 'internal scratch']
  %s0 = inlined_call_operand.vmem [shape: f32[2,17,128], index: 0, kind: input, shape index: {}]
  %s1 = inlined_call_operand.vmem [shape: f32[2,1,128], index: 1, kind: input, shape index: {}]
  %s2 = inlined_call_operand.vmem [shape: f32[2,1,128], index: 2, kind: input, shape index: {}]
  %s3 = inlined_call_operand.vmem [shape: f32[2,128,384], index: 3, kind: input, shape index: {}]
  %s4 = inlined_call_operand.vmem [shape: f32[2,1,384], index: 4, kind: input, shape index: {}]
  %s5 = inlined_call_operand.hbm [shape: f32[2,128,128], index: 5, kind: input, shape index: {}]
  %s6 = inlined_call_operand.vmem [shape: f32[2,1,128], index: 6, kind: input, shape index: {}]
  %s7 = inlined_call_operand.vmem [shape: f32[2,1,128], index: 7, kind: input, shape index: {}]
  %s8 = inlined_call_operand.vmem [shape: f32[2,1,128], index: 8, kind: input, shape index: {}]
  %s9 = inlined_call_operand.vmem [shape: f32[2,128,256], index: 9, kind: input, shape index: {}]
  %s10 = inlined_call_operand.vmem [shape: f32[2,1,256], index: 10, kind: input, shape index: {}]
  %s11 = inlined_call_operand.vmem [shape: f32[2,256,128], index: 11, kind: input, shape index: {}]
  %s12 = inlined_call_operand.vmem [shape: f32[2,1,128], index: 12, kind: input, shape index: {}]
  %s13 = inlined_call_operand.vmem [shape: f32[2,17,128], index: 13, kind: output, shape index: {}]
  %s14 = sld [smem:[#allocation0]]
  $region93: #{cifar10_transformer_forward.4} parent=0
    _
  %s16 = ssub.s32 1, %s14
  %s17 = scalar_select 0, %s16, %s14
  $region1: #{cifar10_transformer_forward.4} parent=0
    #allocation2 [shape = 'u8[131072]{0}', space=vmem, size = 0x20000, scoped, tag = 'input window, operand 5']
    #allocation3 [shape = 's32[2]{0}', space=sflag, size = 0x8, scoped, tag = 'scoped memory for cifar10_transformer_forward.4']
    %18 = vsyncpa [#allocation3], 0
    %s19 = scalar_lea.sflag [#allocation3], 1
    %20 = vsyncpa %s19, 0
    loop: start=0, step=1, limit=6
    $region2: #{cifar10_transformer_forward.4} parent=1 // loop_pre_header
      _
    $region3: #{cifar10_transformer_forward.4} parent=1 // loop_header
      %s22 = sphi 0, %s26
      %p23 = scmp.ge.s32.totalorder %s22, 6
      %s29 = sphi 0, %s41
      %s30 = sphi 0, %s37
      %s31 = sphi 0, %s29
      %s32 = sphi 0, %s30
      %s33 = sphi 0, %s31
      %s34 = sphi 0, %s32
      %s44 = sphi 0, %s46
      %s47 = sphi 0, %s44
      %s48 = sphi 0, %s47
      %s64 = sphi 0, %s48
      %s70 = sphi 0, %s72
      %s73 = sphi 0, %s70
      %s74 = sphi 0, %s73
      %s90 = sphi 0, %s74
      %s96 = sphi 0, %s98
      %s99 = sphi 0, %s96
      %s100 = sphi 0, %s99
      %s116 = sphi 0, %s100
      %s122 = sphi 0, %s124
      %s125 = sphi 0, %s122
      %s126 = sphi 0, %s125
      %s142 = sphi 0, %s126
      %s148 = sphi 0, %s150
      %s151 = sphi 0, %s148
      %s152 = sphi 0, %s151
      %s168 = sphi 0, %s152
      %s174 = sphi 0, %s176
      %s177 = sphi 0, %s174
      %s178 = sphi 0, %s177
      %s194 = sphi 0, %s178
      %s200 = sphi 0, %s202
      %s203 = sphi 0, %s200
      %s204 = sphi 0, %s203
      %s220 = sphi 0, %s204
      %s226 = sphi 0, %s228
      %s229 = sphi 0, %s226
      %s230 = sphi 0, %s229
      %s246 = sphi 0, %s230
      %s252 = sphi 0, %s254
      %s255 = sphi 0, %s252
      %s256 = sphi 0, %s255
      %s272 = sphi 0, %s256
      %s278 = sphi 0, %s280
      %s281 = sphi 0, %s278
      %s282 = sphi 0, %s281
      %s298 = sphi 0, %s282
      %s304 = sphi 0, %s306
      %s307 = sphi 0, %s304
      %s308 = sphi 0, %s307
      %s324 = sphi 0, %s308
      %s330 = sphi 0, %s332
      %s333 = sphi 0, %s330
      %s334 = sphi 0, %s333
      %s350 = sphi 0, %s334
      %s356 = sphi 0, %s358
      %s359 = sphi 0, %s356
      %s360 = sphi 0, %s359
      %s376 = sphi 0, %s360
      %s382 = sphi 0, %s384
      %s385 = sphi 0, %s382
      %s386 = sphi 0, %s385
      %s402 = sphi 0, %s386
    $region4: #{cifar10_transformer_forward.4} parent=1 // loop_header_branch
      %25 = sbr.rel (%p23) target = $region8
    $region5: #{cifar10_transformer_forward.4} parent=1 // loop_body
      %s27 = ssub.s32 %s22, 1
      %s28 = ssub.s32 %s22, 2
      %s35 = sadd.s32 1, %s30
      %p36 = scmp.ge.s32.totalorder %s35, 2
      %s37 = scalar_select %p36, 0, %s35
      %s38 = sadd.s32 1, %s29
      %s39 = scalar_select %p36, %s38, %s29
      %p40 = scmp.ge.s32.totalorder %s39, 2
      %s41 = scalar_select %p40, 0, %s39
      %s42 = ssub.s32 %s29, %s41
      %p43 = scmp.eq.s32.totalorder %s42, 0
      %s45 = sadd.s32 %s44, 1
      %s46 = scalar_select %p43, %s44, %s45
      %p49 = pneg %p43
      %p50 = scmp.eq.s32.totalorder %s22, 3
      %p51 = por %p49, %p50
      %p52 = scmp.ne.s32.totalorder %s44, %s47
      %p53 = scmp.eq.s32.totalorder %s22, 0
      %p54 = por %p52, %p53
      %p55 = scmp.ne.s32.totalorder %s44, %s47
      %p56 = scmp.eq.s32.totalorder %s27, 3
      %p57 = por %p55, %p56
      %p58 = scmp.ne.s32.totalorder %s47, %s48
      %p59 = scmp.eq.s32.totalorder %s27, 0
      %p60 = por %p58, %p59
      %p61 = scmp.ne.s32.totalorder %s47, %s48
      %p62 = scmp.eq.s32.totalorder %s28, 3
      %p63 = por %p61, %p62
      %p65 = scmp.ne.s32.totalorder %s48, %s64
      %p66 = scmp.eq.s32.totalorder %s28, 0
      %p67 = por %p65, %p66
      %s68 = ssub.s32 %s30, %s37
      %p69 = scmp.eq.s32.totalorder %s68, 0
      %s71 = sadd.s32 %s70, 1
      %s72 = scalar_select %p69, %s70, %s71
      %p75 = pneg %p69
      %p76 = scmp.eq.s32.totalorder %s22, 3
      %p77 = por %p75, %p76
      %p78 = scmp.ne.s32.totalorder %s70, %s73
      %p79 = scmp.eq.s32.totalorder %s22, 0
      %p80 = por %p78, %p79
      %p81 = scmp.ne.s32.totalorder %s70, %s73
      %p82 = scmp.eq.s32.totalorder %s27, 3
      %p83 = por %p81, %p82
      %p84 = scmp.ne.s32.totalorder %s73, %s74
      %p85 = scmp.eq.s32.totalorder %s27, 0
      %p86 = por %p84, %p85
      %p87 = scmp.ne.s32.totalorder %s73, %s74
      %p88 = scmp.eq.s32.totalorder %s28, 3
      %p89 = por %p87, %p88
      %p91 = scmp.ne.s32.totalorder %s74, %s90
      %p92 = scmp.eq.s32.totalorder %s28, 0
      %p93 = por %p91, %p92
      %s94 = ssub.s32 %s30, %s37
      %p95 = scmp.eq.s32.totalorder %s94, 0
      %s97 = sadd.s32 %s96, 1
      %s98 = scalar_select %p95, %s96, %s97
      %p101 = pneg %p95
      %p102 = scmp.eq.s32.totalorder %s22, 3
      %p103 = por %p101, %p102
      %p104 = scmp.ne.s32.totalorder %s96, %s99
      %p105 = scmp.eq.s32.totalorder %s22, 0
      %p106 = por %p104, %p105
      %p107 = scmp.ne.s32.totalorder %s96, %s99
      %p108 = scmp.eq.s32.totalorder %s27, 3
      %p109 = por %p107, %p108
      %p110 = scmp.ne.s32.totalorder %s99, %s100
      %p111 = scmp.eq.s32.totalorder %s27, 0
      %p112 = por %p110, %p111
      %p113 = scmp.ne.s32.totalorder %s99, %s100
      %p114 = scmp.eq.s32.totalorder %s28, 3
      %p115 = por %p113, %p114
      %p117 = scmp.ne.s32.totalorder %s100, %s116
      %p118 = scmp.eq.s32.totalorder %s28, 0
      %p119 = por %p117, %p118
      %s120 = ssub.s32 %s30, %s37
      %p121 = scmp.eq.s32.totalorder %s120, 0
      %s123 = sadd.s32 %s122, 1
      %s124 = scalar_select %p121, %s122, %s123
      %p127 = pneg %p121
      %p128 = scmp.eq.s32.totalorder %s22, 3
      %p129 = por %p127, %p128
      %p130 = scmp.ne.s32.totalorder %s122, %s125
      %p131 = scmp.eq.s32.totalorder %s22, 0
      %p132 = por %p130, %p131
      %p133 = scmp.ne.s32.totalorder %s122, %s125
      %p134 = scmp.eq.s32.totalorder %s27, 3
      %p135 = por %p133, %p134
      %p136 = scmp.ne.s32.totalorder %s125, %s126
      %p137 = scmp.eq.s32.totalorder %s27, 0
      %p138 = por %p136, %p137
      %p139 = scmp.ne.s32.totalorder %s125, %s126
      %p140 = scmp.eq.s32.totalorder %s28, 3
      %p141 = por %p139, %p140
      %p143 = scmp.ne.s32.totalorder %s126, %s142
      %p144 = scmp.eq.s32.totalorder %s28, 0
      %p145 = por %p143, %p144
      %s146 = ssub.s32 %s30, %s37
      %p147 = scmp.eq.s32.totalorder %s146, 0
      %s149 = sadd.s32 %s148, 1
      %s150 = scalar_select %p147, %s148, %s149
      %p153 = pneg %p147
      %p154 = scmp.eq.s32.totalorder %s22, 3
      %p155 = por %p153, %p154
      %p156 = scmp.ne.s32.totalorder %s148, %s151
      %p157 = scmp.eq.s32.totalorder %s22, 0
      %p158 = por %p156, %p157
      %p159 = scmp.ne.s32.totalorder %s148, %s151
      %p160 = scmp.eq.s32.totalorder %s27, 3
      %p161 = por %p159, %p160
      %p162 = scmp.ne.s32.totalorder %s151, %s152
      %p163 = scmp.eq.s32.totalorder %s27, 0
      %p164 = por %p162, %p163
      %p165 = scmp.ne.s32.totalorder %s151, %s152
      %p166 = scmp.eq.s32.totalorder %s28, 3
      %p167 = por %p165, %p166
      %p169 = scmp.ne.s32.totalorder %s152, %s168
      %p170 = scmp.eq.s32.totalorder %s28, 0
      %p171 = por %p169, %p170
      %s172 = ssub.s32 %s30, %s37
      %p173 = scmp.eq.s32.totalorder %s172, 0
      %s175 = sadd.s32 %s174, 1
      %s176 = scalar_select %p173, %s174, %s175
      %p179 = pneg %p173
      %p180 = scmp.eq.s32.totalorder %s22, 3
      %p181 = por %p179, %p180
      %p182 = scmp.ne.s32.totalorder %s174, %s177
      %p183 = scmp.eq.s32.totalorder %s22, 0
      %p184 = por %p182, %p183
      %p185 = scmp.ne.s32.totalorder %s174, %s177
      %p186 = scmp.eq.s32.totalorder %s27, 3
      %p187 = por %p185, %p186
      %p188 = scmp.ne.s32.totalorder %s177, %s178
      %p189 = scmp.eq.s32.totalorder %s27, 0
      %p190 = por %p188, %p189
      %p191 = scmp.ne.s32.totalorder %s177, %s178
      %p192 = scmp.eq.s32.totalorder %s28, 3
      %p193 = por %p191, %p192
      %p195 = scmp.ne.s32.totalorder %s178, %s194
      %p196 = scmp.eq.s32.totalorder %s28, 0
      %p197 = por %p195, %p196
      %s198 = ssub.s32 %s30, %s37
      %p199 = scmp.eq.s32.totalorder %s198, 0
      %s201 = sadd.s32 %s200, 1
      %s202 = scalar_select %p199, %s200, %s201
      %p205 = pneg %p199
      %p206 = scmp.eq.s32.totalorder %s22, 3
      %p207 = por %p205, %p206
      %p208 = scmp.ne.s32.totalorder %s200, %s203
      %p209 = scmp.eq.s32.totalorder %s22, 0
      %p210 = por %p208, %p209
      %p211 = scmp.ne.s32.totalorder %s200, %s203
      %p212 = scmp.eq.s32.totalorder %s27, 3
      %p213 = por %p211, %p212
      %p214 = scmp.ne.s32.totalorder %s203, %s204
      %p215 = scmp.eq.s32.totalorder %s27, 0
      %p216 = por %p214, %p215
      %p217 = scmp.ne.s32.totalorder %s203, %s204
      %p218 = scmp.eq.s32.totalorder %s28, 3
      %p219 = por %p217, %p218
      %p221 = scmp.ne.s32.totalorder %s204, %s220
      %p222 = scmp.eq.s32.totalorder %s28, 0
      %p223 = por %p221, %p222
      %s224 = ssub.s32 %s30, %s37
      %p225 = scmp.eq.s32.totalorder %s224, 0
      %s227 = sadd.s32 %s226, 1
      %s228 = scalar_select %p225, %s226, %s227
      %p231 = pneg %p225
      %p232 = scmp.eq.s32.totalorder %s22, 3
      %p233 = por %p231, %p232
      %p234 = scmp.ne.s32.totalorder %s226, %s229
      %p235 = scmp.eq.s32.totalorder %s22, 0
      %p236 = por %p234, %p235
      %p237 = scmp.ne.s32.totalorder %s226, %s229
      %p238 = scmp.eq.s32.totalorder %s27, 3
      %p239 = por %p237, %p238
      %p240 = scmp.ne.s32.totalorder %s229, %s230
      %p241 = scmp.eq.s32.totalorder %s27, 0
      %p242 = por %p240, %p241
      %p243 = scmp.ne.s32.totalorder %s229, %s230
      %p244 = scmp.eq.s32.totalorder %s28, 3
      %p245 = por %p243, %p244
      %p247 = scmp.ne.s32.totalorder %s230, %s246
      %p248 = scmp.eq.s32.totalorder %s28, 0
      %p249 = por %p247, %p248
      %s250 = ssub.s32 %s30, %s37
      %p251 = scmp.eq.s32.totalorder %s250, 0
      %s253 = sadd.s32 %s252, 1
      %s254 = scalar_select %p251, %s252, %s253
      %p257 = pneg %p251
      %p258 = scmp.eq.s32.totalorder %s22, 3
      %p259 = por %p257, %p258
      %p260 = scmp.ne.s32.totalorder %s252, %s255
      %p261 = scmp.eq.s32.totalorder %s22, 0
      %p262 = por %p260, %p261
      %p263 = scmp.ne.s32.totalorder %s252, %s255
      %p264 = scmp.eq.s32.totalorder %s27, 3
      %p265 = por %p263, %p264
      %p266 = scmp.ne.s32.totalorder %s255, %s256
      %p267 = scmp.eq.s32.totalorder %s27, 0
      %p268 = por %p266, %p267
      %p269 = scmp.ne.s32.totalorder %s255, %s256
      %p270 = scmp.eq.s32.totalorder %s28, 3
      %p271 = por %p269, %p270
      %p273 = scmp.ne.s32.totalorder %s256, %s272
      %p274 = scmp.eq.s32.totalorder %s28, 0
      %p275 = por %p273, %p274
      %s276 = ssub.s32 %s30, %s37
      %p277 = scmp.eq.s32.totalorder %s276, 0
      %s279 = sadd.s32 %s278, 1
      %s280 = scalar_select %p277, %s278, %s279
      %p283 = pneg %p277
      %p284 = scmp.eq.s32.totalorder %s22, 3
      %p285 = por %p283, %p284
      %p286 = scmp.ne.s32.totalorder %s278, %s281
      %p287 = scmp.eq.s32.totalorder %s22, 0
      %p288 = por %p286, %p287
      %p289 = scmp.ne.s32.totalorder %s278, %s281
      %p290 = scmp.eq.s32.totalorder %s27, 3
      %p291 = por %p289, %p290
      %p292 = scmp.ne.s32.totalorder %s281, %s282
      %p293 = scmp.eq.s32.totalorder %s27, 0
      %p294 = por %p292, %p293
      %p295 = scmp.ne.s32.totalorder %s281, %s282
      %p296 = scmp.eq.s32.totalorder %s28, 3
      %p297 = por %p295, %p296
      %p299 = scmp.ne.s32.totalorder %s282, %s298
      %p300 = scmp.eq.s32.totalorder %s28, 0
      %p301 = por %p299, %p300
      %s302 = ssub.s32 %s30, %s37
      %p303 = scmp.eq.s32.totalorder %s302, 0
      %s305 = sadd.s32 %s304, 1
      %s306 = scalar_select %p303, %s304, %s305
      %p309 = pneg %p303
      %p310 = scmp.eq.s32.totalorder %s22, 3
      %p311 = por %p309, %p310
      %p312 = scmp.ne.s32.totalorder %s304, %s307
      %p313 = scmp.eq.s32.totalorder %s22, 0
      %p314 = por %p312, %p313
      %p315 = scmp.ne.s32.totalorder %s304, %s307
      %p316 = scmp.eq.s32.totalorder %s27, 3
      %p317 = por %p315, %p316
      %p318 = scmp.ne.s32.totalorder %s307, %s308
      %p319 = scmp.eq.s32.totalorder %s27, 0
      %p320 = por %p318, %p319
      %p321 = scmp.ne.s32.totalorder %s307, %s308
      %p322 = scmp.eq.s32.totalorder %s28, 3
      %p323 = por %p321, %p322
      %p325 = scmp.ne.s32.totalorder %s308, %s324
      %p326 = scmp.eq.s32.totalorder %s28, 0
      %p327 = por %p325, %p326
      %s328 = ssub.s32 %s30, %s37
      %p329 = scmp.eq.s32.totalorder %s328, 0
      %s331 = sadd.s32 %s330, 1
      %s332 = scalar_select %p329, %s330, %s331
      %p335 = pneg %p329
      %p336 = scmp.eq.s32.totalorder %s22, 3
      %p337 = por %p335, %p336
      %p338 = scmp.ne.s32.totalorder %s330, %s333
      %p339 = scmp.eq.s32.totalorder %s22, 0
      %p340 = por %p338, %p339
      %p341 = scmp.ne.s32.totalorder %s330, %s333
      %p342 = scmp.eq.s32.totalorder %s27, 3
      %p343 = por %p341, %p342
      %p344 = scmp.ne.s32.totalorder %s333, %s334
      %p345 = scmp.eq.s32.totalorder %s27, 0
      %p346 = por %p344, %p345
      %p347 = scmp.ne.s32.totalorder %s333, %s334
      %p348 = scmp.eq.s32.totalorder %s28, 3
      %p349 = por %p347, %p348
      %p351 = scmp.ne.s32.totalorder %s334, %s350
      %p352 = scmp.eq.s32.totalorder %s28, 0
      %p353 = por %p351, %p352
      %s354 = ssub.s32 %s30, %s37
      %p355 = scmp.eq.s32.totalorder %s354, 0
      %s357 = sadd.s32 %s356, 1
      %s358 = scalar_select %p355, %s356, %s357
      %p361 = pneg %p355
      %p362 = scmp.eq.s32.totalorder %s22, 3
      %p363 = por %p361, %p362
      %p364 = scmp.ne.s32.totalorder %s356, %s359
      %p365 = scmp.eq.s32.totalorder %s22, 0
      %p366 = por %p364, %p365
      %p367 = scmp.ne.s32.totalorder %s356, %s359
      %p368 = scmp.eq.s32.totalorder %s27, 3
      %p369 = por %p367, %p368
      %p370 = scmp.ne.s32.totalorder %s359, %s360
      %p371 = scmp.eq.s32.totalorder %s27, 0
      %p372 = por %p370, %p371
      %p373 = scmp.ne.s32.totalorder %s359, %s360
      %p374 = scmp.eq.s32.totalorder %s28, 3
      %p375 = por %p373, %p374
      %p377 = scmp.ne.s32.totalorder %s360, %s376
      %p378 = scmp.eq.s32.totalorder %s28, 0
      %p379 = por %p377, %p378
      %s380 = ssub.s32 %s29, %s41
      %p381 = scmp.eq.s32.totalorder %s380, 0
      %s383 = sadd.s32 %s382, 1
      %s384 = scalar_select %p381, %s382, %s383
      %p387 = pneg %p381
      %p388 = scmp.eq.s32.totalorder %s22, 3
      %p389 = por %p387, %p388
      %p390 = scmp.ne.s32.totalorder %s382, %s385
      %p391 = scmp.eq.s32.totalorder %s22, 0
      %p392 = por %p390, %p391
      %p393 = scmp.ne.s32.totalorder %s382, %s385
      %p394 = scmp.eq.s32.totalorder %s27, 3
      %p395 = por %p393, %p394
      %p396 = scmp.ne.s32.totalorder %s385, %s386
      %p397 = scmp.eq.s32.totalorder %s27, 0
      %p398 = por %p396, %p397
      %p399 = scmp.ne.s32.totalorder %s385, %s386
      %p400 = scmp.eq.s32.totalorder %s28, 3
      %p401 = por %p399, %p400
      %p403 = scmp.ne.s32.totalorder %s386, %s402
      %p404 = scmp.eq.s32.totalorder %s28, 0
      %p405 = por %p403, %p404
      %p406 = scmp.le.s32.totalorder 1, %s22
      %p407 = scmp.lt.s32.totalorder %s22, 5
      %p408 = pnand %p406, %p407
      %p409 = pneg %p408
      // Predicated region
      $region9: #{cifar10_transformer_forward.4} parent=5 // pred_check
        _
      $region10: #{cifar10_transformer_forward.4} parent=5 // pred_check_branch
        %411 = sbr.rel (%p408) target = $region12
      $region11: #{cifar10_transformer_forward.4} parent=5 // pred_region
        %s412 = ssub.s32 %s22, 1
      $region12: #{cifar10_transformer_forward.4} parent=5 // pred_fallthru
        _
      %p413 = scmp.lt.s32.totalorder %s22, 4
      // Predicated region
      $region13: #{cifar10_transformer_forward.4} parent=5 // pred_check
        %p414 = pneg %p413
      $region14: #{cifar10_transformer_forward.4} parent=5 // pred_check_branch
        %416 = sbr.rel (%p414) target = $region16
      $region15: #{cifar10_transformer_forward.4} parent=5 // pred_region
        // Predicated region
        $region17: #{cifar10_transformer_forward.4} parent=15 // pred_check
          %p417 = pneg %p54
        $region18: #{cifar10_transformer_forward.4} parent=15 // pred_check_branch
          %419 = sbr.rel (%p417) target = $region20
        $region19: #{cifar10_transformer_forward.4} parent=15 // pred_region
          %p420 = scmp.lt.s32.totalorder %s29, 1
          %s421 = scalar_select %p420, %s29, 1
          %s422 = smul.addr %s421, 3
          %s423 = smul.addr %s422, 8
          %s424 = scalar_lea.vmem %s0, %s423
        $region20: #{cifar10_transformer_forward.4} parent=15 // pred_fallthru
          _
        // Predicated region
        $region21: #{cifar10_transformer_forward.4} parent=15 // pred_check
          %p425 = pneg %p80
        $region22: #{cifar10_transformer_forward.4} parent=15 // pred_check_branch
          %427 = sbr.rel (%p425) target = $region24
        $region23: #{cifar10_transformer_forward.4} parent=15 // pred_region
          %p428 = scmp.lt.s32.totalorder %s30, 1
          %s429 = scalar_select %p428, %s30, 1
          %s430 = scalar_lea.vmem %s1, %s429
        $region24: #{cifar10_transformer_forward.4} parent=15 // pred_fallthru
          _
        // Predicated region
        $region25: #{cifar10_transformer_forward.4} parent=15 // pred_check
          %p431 = pneg %p106
        $region26: #{cifar10_transformer_forward.4} parent=15 // pred_check_branch
          %433 = sbr.rel (%p431) target = $region28
        $region27: #{cifar10_transformer_forward.4} parent=15 // pred_region
          %p434 = scmp.lt.s32.totalorder %s30, 1
          %s435 = scalar_select %p434, %s30, 1
          %s436 = scalar_lea.vmem %s2, %s435
        $region28: #{cifar10_transformer_forward.4} parent=15 // pred_fallthru
          _
        // Predicated region
        $region29: #{cifar10_transformer_forward.4} parent=15 // pred_check
          %p437 = pneg %p132
        $region30: #{cifar10_transformer_forward.4} parent=15 // pred_check_branch
          %439 = sbr.rel (%p437) target = $region32
        $region31: #{cifar10_transformer_forward.4} parent=15 // pred_region
          %p440 = scmp.lt.s32.totalorder %s30, 1
          %s441 = scalar_select %p440, %s30, 1
          %s442 = smul.addr %s441, 48
          %s443 = smul.addr %s442, 8
          %s444 = scalar_lea.vmem %s3, %s443
        $region32: #{cifar10_transformer_forward.4} parent=15 // pred_fallthru
          _
        // Predicated region
        $region33: #{cifar10_transformer_forward.4} parent=15 // pred_check
          %p445 = pneg %p158
        $region34: #{cifar10_transformer_forward.4} parent=15 // pred_check_branch
          %447 = sbr.rel (%p445) target = $region36
        $region35: #{cifar10_transformer_forward.4} parent=15 // pred_region
          %p448 = scmp.lt.s32.totalorder %s30, 1
          %s449 = scalar_select %p448, %s30, 1
          %s450 = smul.addr %s449, 3
          %s451 = scalar_lea.vmem %s4, %s450
        $region36: #{cifar10_transformer_forward.4} parent=15 // pred_fallthru
          _
        // Predicated region
        $region37: #{cifar10_transformer_forward.4} parent=15 // pred_check
          %p452 = pneg %p184
        $region38: #{cifar10_transformer_forward.4} parent=15 // pred_check_branch
          %454 = sbr.rel (%p452) target = $region40
        $region39: #{cifar10_transformer_forward.4} parent=15 // pred_region
          %s455 = sand.u32 %s174, 1
          %s456 = scalar_lea.sflag [#allocation3], %s455
          %s457 = sand.u32 %s174, 1
          %s458 = smul.addr %s457, 128
          %s459 = scalar_lea.vmem [#allocation2], %s458
          %s461 = ssub.s32 2048, 2048
          %462 = vsyncadd %s456, %s461
          %s463 = smul.addr %s30, 16
          %s464 = smul.addr %s463, 128
          %s465 = scalar_lea.hbm %s5, %s464
          %s466 = sshll.u32 %s459, 4
          %s467 = int_to_ptr.vmem [resolvable:$true] %s466
          %472 = dma.hbm_to_vmem [thread:$0]  %s465, 2048, %s467, %s456, 128, 128, 8
        $region40: #{cifar10_transformer_forward.4} parent=15 // pred_fallthru
          _
        // Predicated region
        $region41: #{cifar10_transformer_forward.4} parent=15 // pred_check
          %p473 = pneg %p210
        $region42: #{cifar10_transformer_forward.4} parent=15 // pred_check_branch
          %475 = sbr.rel (%p473) target = $region44
        $region43: #{cifar10_transformer_forward.4} parent=15 // pred_region
          %p476 = scmp.lt.s32.totalorder %s30, 1
          %s477 = scalar_select %p476, %s30, 1
          %s478 = scalar_lea.vmem %s6, %s477
        $region44: #{cifar10_transformer_forward.4} parent=15 // pred_fallthru
          _
        // Predicated region
        $region45: #{cifar10_transformer_forward.4} parent=15 // pred_check
          %p479 = pneg %p236
        $region46: #{cifar10_transformer_forward.4} parent=15 // pred_check_branch
          %481 = sbr.rel (%p479) target = $region48
        $region47: #{cifar10_transformer_forward.4} parent=15 // pred_region
          %p482 = scmp.lt.s32.totalorder %s30, 1
          %s483 = scalar_select %p482, %s30, 1
          %s484 = scalar_lea.vmem %s7, %s483
        $region48: #{cifar10_transformer_forward.4} parent=15 // pred_fallthru
          _
        // Predicated region
        $region49: #{cifar10_transformer_forward.4} parent=15 // pred_check
          %p485 = pneg %p262
        $region50: #{cifar10_transformer_forward.4} parent=15 // pred_check_branch
          %487 = sbr.rel (%p485) target = $region52
        $region51: #{cifar10_transformer_forward.4} parent=15 // pred_region
          %p488 = scmp.lt.s32.totalorder %s30, 1
          %s489 = scalar_select %p488, %s30, 1
          %s490 = scalar_lea.vmem %s8, %s489
        $region52: #{cifar10_transformer_forward.4} parent=15 // pred_fallthru
          _
        // Predicated region
        $region53: #{cifar10_transformer_forward.4} parent=15 // pred_check
          %p491 = pneg %p288
        $region54: #{cifar10_transformer_forward.4} parent=15 // pred_check_branch
          %493 = sbr.rel (%p491) target = $region56
        $region55: #{cifar10_transformer_forward.4} parent=15 // pred_region
          %p494 = scmp.lt.s32.totalorder %s30, 1
          %s495 = scalar_select %p494, %s30, 1
          %s496 = smul.addr %s495, 32
          %s497 = smul.addr %s496, 8
          %s498 = scalar_lea.vmem %s9, %s497
        $region56: #{cifar10_transformer_forward.4} parent=15 // pred_fallthru
          _
        // Predicated region
        $region57: #{cifar10_transformer_forward.4} parent=15 // pred_check
          %p499 = pneg %p314
        $region58: #{cifar10_transformer_forward.4} parent=15 // pred_check_branch
          %501 = sbr.rel (%p499) target = $region60
        $region59: #{cifar10_transformer_forward.4} parent=15 // pred_region
          %p502 = scmp.lt.s32.totalorder %s30, 1
          %s503 = scalar_select %p502, %s30, 1
          %s504 = smul.addr %s503, 2
          %s505 = scalar_lea.vmem %s10, %s504
        $region60: #{cifar10_transformer_forward.4} parent=15 // pred_fallthru
          _
        // Predicated region
        $region61: #{cifar10_transformer_forward.4} parent=15 // pred_check
          %p506 = pneg %p340
        $region62: #{cifar10_transformer_forward.4} parent=15 // pred_check_branch
          %508 = sbr.rel (%p506) target = $region64
        $region63: #{cifar10_transformer_forward.4} parent=15 // pred_region
          %p509 = scmp.lt.s32.totalorder %s30, 1
          %s510 = scalar_select %p509, %s30, 1
          %s511 = smul.addr %s510, 32
          %s512 = smul.addr %s511, 8
          %s513 = scalar_lea.vmem %s11, %s512
        $region64: #{cifar10_transformer_forward.4} parent=15 // pred_fallthru
          _
        // Predicated region
        $region65: #{cifar10_transformer_forward.4} parent=15 // pred_check
          %p514 = pneg %p366
        $region66: #{cifar10_transformer_forward.4} parent=15 // pred_check_branch
          %516 = sbr.rel (%p514) target = $region68
        $region67: #{cifar10_transformer_forward.4} parent=15 // pred_region
          %p517 = scmp.lt.s32.totalorder %s30, 1
          %s518 = scalar_select %p517, %s30, 1
          %s519 = scalar_lea.vmem %s12, %s518
        $region68: #{cifar10_transformer_forward.4} parent=15 // pred_fallthru
          _
      $region16: #{cifar10_transformer_forward.4} parent=5 // pred_fallthru
        _
      %p520 = scmp.le.s32.totalorder 1, %s22
      %p521 = scmp.lt.s32.totalorder %s22, 5
      %p522 = pnand %p520, %p521
      %p523 = pneg %p522
      // Predicated region
      $region69: #{cifar10_transformer_forward.4} parent=5 // pred_check
        _
      $region70: #{cifar10_transformer_forward.4} parent=5 // pred_check_branch
        %525 = sbr.rel (%p522) target = $region72
      $region71: #{cifar10_transformer_forward.4} parent=5 // pred_region
        %s526 = ssub.s32 %s22, 1
        %s527 = sand.u32 %s177, 1
        %s528 = scalar_lea.sflag [#allocation3], %s527
        %s529 = sand.u32 %s177, 1
        %s530 = smul.addr %s529, 128
        %s531 = scalar_lea.vmem [#allocation2], %s530
        // Predicated region
        $region73: #{cifar10_transformer_forward.4} parent=71 // pred_check
          %p532 = pneg %p190
        $region74: #{cifar10_transformer_forward.4} parent=71 // pred_check_branch
          %534 = sbr.rel (%p532) target = $region76
        $region75: #{cifar10_transformer_forward.4} parent=71 // pred_region
          %535 = dma.done %s528, 2048
        $region76: #{cifar10_transformer_forward.4} parent=71 // pred_fallthru
          _
        %p536 = scmp.lt.s32.totalorder %s31, 1
        %s537 = scalar_select %p536, %s31, 1
        %s538 = smul.addr %s537, 3
        %s539 = smul.addr %s538, 8
        %s540 = scalar_lea.vmem %s0, %s539
        %p541 = pneg %p60
        %p542 = pneg %p57
        %p543 = scmp.lt.s32.totalorder %s32, 1
        %s544 = scalar_select %p543, %s32, 1
        %s545 = scalar_lea.vmem %s1, %s544
        %p546 = pneg %p86
        %p547 = pneg %p83
        %p548 = scmp.lt.s32.totalorder %s32, 1
        %s549 = scalar_select %p548, %s32, 1
        %s550 = scalar_lea.vmem %s2, %s549
        %p551 = pneg %p112
        %p552 = pneg %p109
        %p553 = scmp.lt.s32.totalorder %s32, 1
        %s554 = scalar_select %p553, %s32, 1
        %s555 = smul.addr %s554, 48
        %s556 = smul.addr %s555, 8
        %s557 = scalar_lea.vmem %s3, %s556
        %p558 = pneg %p138
        %p559 = pneg %p135
        %p560 = scmp.lt.s32.totalorder %s32, 1
        %s561 = scalar_select %p560, %s32, 1
        %s562 = smul.addr %s561, 3
        %s563 = scalar_lea.vmem %s4, %s562
        %p564 = pneg %p164
        %p565 = pneg %p161
        %s566 = sand.u32 %s177, 1
        %s567 = scalar_lea.sflag [#allocation3], %s566
        %s568 = sand.u32 %s177, 1
        %s569 = smul.addr %s568, 128
        %s570 = scalar_lea.vmem [#allocation2], %s569
        %p571 = pneg %p190
        %p572 = pneg %p187
        %p573 = scmp.lt.s32.totalorder %s32, 1
        %s574 = scalar_select %p573, %s32, 1
        %s575 = scalar_lea.vmem %s6, %s574
        %p576 = pneg %p216
        %p577 = pneg %p213
        %p578 = scmp.lt.s32.totalorder %s32, 1
        %s579 = scalar_select %p578, %s32, 1
        %s580 = scalar_lea.vmem %s7, %s579
        %p581 = pneg %p242
        %p582 = pneg %p239
        %p583 = scmp.lt.s32.totalorder %s32, 1
        %s584 = scalar_select %p583, %s32, 1
        %s585 = scalar_lea.vmem %s8, %s584
        %p586 = pneg %p268
        %p587 = pneg %p265
        %p588 = scmp.lt.s32.totalorder %s32, 1
        %s589 = scalar_select %p588, %s32, 1
        %s590 = smul.addr %s589, 32
        %s591 = smul.addr %s590, 8
        %s592 = scalar_lea.vmem %s9, %s591
        %p593 = pneg %p294
        %p594 = pneg %p291
        %p595 = scmp.lt.s32.totalorder %s32, 1
        %s596 = scalar_select %p595, %s32, 1
        %s597 = smul.addr %s596, 2
        %s598 = scalar_lea.vmem %s10, %s597
        %p599 = pneg %p320
        %p600 = pneg %p317
        %p601 = scmp.lt.s32.totalorder %s32, 1
        %s602 = scalar_select %p601, %s32, 1
        %s603 = smul.addr %s602, 32
        %s604 = smul.addr %s603, 8
        %s605 = scalar_lea.vmem %s11, %s604
        %p606 = pneg %p346
        %p607 = pneg %p343
        %p608 = scmp.lt.s32.totalorder %s32, 1
        %s609 = scalar_select %p608, %s32, 1
        %s610 = scalar_lea.vmem %s12, %s609
        %p611 = pneg %p372
        %p612 = pneg %p369
        %p613 = pneg %p398
        %p614 = pneg %p395
        %p615 = scmp.lt.s32.totalorder %s31, 1
        %s616 = scalar_select %p615, %s31, 1
        %s617 = smul.addr %s616, 3
        %s618 = smul.addr %s617, 8
        %s619 = scalar_lea.vmem %s13, %s618
        %p620 = scmp.lt.s32.totalorder %s31, 1
        %s621 = scalar_select %p620, %s31, 1
        %s622 = smul.addr %s621, 3
        %s623 = smul.addr %s622, 8
        %s624 = scalar_lea.vmem %s0, %s623
        %p625 = scmp.lt.s32.totalorder %s32, 1
        %s626 = scalar_select %p625, %s32, 1
        %s627 = scalar_lea.vmem %s1, %s626
        %p628 = scmp.lt.s32.totalorder %s32, 1
        %s629 = scalar_select %p628, %s32, 1
        %s630 = scalar_lea.vmem %s2, %s629
        %p631 = scmp.lt.s32.totalorder %s32, 1
        %s632 = scalar_select %p631, %s32, 1
        %s633 = smul.addr %s632, 48
        %s634 = smul.addr %s633, 8
        %s635 = scalar_lea.vmem %s3, %s634
        %p636 = scmp.lt.s32.totalorder %s32, 1
        %s637 = scalar_select %p636, %s32, 1
        %s638 = smul.addr %s637, 3
        %s639 = scalar_lea.vmem %s4, %s638
        %p640 = scmp.lt.s32.totalorder %s32, 1
        %s641 = scalar_select %p640, %s32, 1
        %s642 = scalar_lea.vmem %s6, %s641
        %p643 = scmp.lt.s32.totalorder %s32, 1
        %s644 = scalar_select %p643, %s32, 1
        %s645 = scalar_lea.vmem %s7, %s644
        %p646 = scmp.lt.s32.totalorder %s32, 1
        %s647 = scalar_select %p646, %s32, 1
        %s648 = scalar_lea.vmem %s8, %s647
        %p649 = scmp.lt.s32.totalorder %s32, 1
        %s650 = scalar_select %p649, %s32, 1
        %s651 = smul.addr %s650, 32
        %s652 = smul.addr %s651, 8
        %s653 = scalar_lea.vmem %s9, %s652
        %p654 = scmp.lt.s32.totalorder %s32, 1
        %s655 = scalar_select %p654, %s32, 1
        %s656 = smul.addr %s655, 2
        %s657 = scalar_lea.vmem %s10, %s656
        %p658 = scmp.lt.s32.totalorder %s32, 1
        %s659 = scalar_select %p658, %s32, 1
        %s660 = smul.addr %s659, 32
        %s661 = smul.addr %s660, 8
        %s662 = scalar_lea.vmem %s11, %s661
        %p663 = scmp.lt.s32.totalorder %s32, 1
        %s664 = scalar_select %p663, %s32, 1
        %s665 = scalar_lea.vmem %s12, %s664
        %p666 = scmp.lt.s32.totalorder %s31, 1
        %s667 = scalar_select %p666, %s31, 1
        %s668 = smul.addr %s667, 3
        %s669 = smul.addr %s668, 8
        %s670 = scalar_lea.vmem %s13, %s669
        %p671 = scmp.eq.s32.totalorder %s32, 0
        // Predicated region
        $region77: #{cifar10_transformer_forward.4} parent=71 // pred_check
          %p672 = pneg %p671
        $region78: #{cifar10_transformer_forward.4} parent=71 // pred_check_branch
          %674 = sbr.rel (%p672) target = $region80
        $region79: #{cifar10_transformer_forward.4} parent=71 // pred_region
          %v675 = vld [vmem:[%s624] sm:$0xff]
          %v676 = vld [vmem:[%s624 + $0x8] sm:$0xff]
          %v677 = vld [vmem:[%s624 + $0x10] sm:$0x1]
          %678 = vst [vmem:[%s670] sm:$0xff] %v675
          %679 = vst [vmem:[%s670 + $0x8] sm:$0xff] %v676
          %680 = vst [vmem:[%s670 + $0x10] sm:$0x1] %v677
        $region80: #{cifar10_transformer_forward.4} parent=71 // pred_fallthru
          _
        %v681 = vld [vmem:[%s670] sm:$0xff]
        %v682 = vld [vmem:[%s670 + $0x8] sm:$0xff]
        %v683 = vld [vmem:[%s670 + $0x10] sm:$0x1]
        %v684 = vld [vmem:[%s627] sm:$0x1]
        %v685 = vld [vmem:[%s630] sm:$0x1]
        %686 = vadd.xlane.f32.xlu0 %v681
        %v687 = vpop.xlane.xlu0 %686
        %688 = vadd.xlane.f32.xlu0 %v682
        %v689 = vpop.xlane.xlu0 %688
        %vm690 = vcmask 1040384
        %v691 = vsel %vm690, %v683, 0.0
        %692 = vadd.xlane.f32.xlu0 %v691
        %v693 = vpop.xlane.xlu0 %692
        %v694 = vrcp.pop 128.0
        %v695 = vmul.f32 %v687, %v694
        %v696 = vmul.f32 %v689, %v694
        %v697 = vmul.f32 %v693, %v694
        %v698 = vsub.f32 %v681, %v695
        %v699 = vsub.f32 %v682, %v696
        %v700 = vsub.f32 %v683, %v697
        %v701 = vmul.f32 %v698, %v698
        %v702 = vmul.f32 %v699, %v699
        %v703 = vmul.f32 %v700, %v700
        %704 = vadd.xlane.f32.xlu0 %v701
        %v705 = vpop.xlane.xlu0 %704
        %706 = vadd.xlane.f32.xlu0 %v702
        %v707 = vpop.xlane.xlu0 %706
        %v708 = vsel %vm690, %v703, 0.0
        %709 = vadd.xlane.f32.xlu0 %v708
        %v710 = vpop.xlane.xlu0 %709
        %v711 = vmul.f32 %v705, %v694
        %v712 = vmul.f32 %v707, %v694
        %v713 = vmul.f32 %v710, %v694
        %v714 = vadd.f32 %v711, 1e-12
        %v715 = vadd.f32 %v712, 1e-12
        %v716 = vadd.f32 %v713, 1e-12
        %v717 = vrsqrt.pop %v714
        %v718 = vrsqrt.pop %v715
        %v719 = vrsqrt.pop %v716
        %v720 = vmul.f32 %v698, %v717
        %v721 = vmul.f32 %v699, %v718
        %v722 = vmul.f32 %v700, %v719
        %v724 = vlaneseq
        %v725 = vshrl.u32 %v724, 7
        %v726 = vsub.s32 0, %v725
        %v727 = vrot.slane %v684, %v726
        %v729 = vmul.f32 %v720, %v727
        %v730 = vmul.f32 %v721, %v727
        %v731 = vmul.f32 %v722, %v727
        %v733 = vlaneseq
        %v734 = vshrl.u32 %v733, 7
        %v735 = vsub.s32 0, %v734
        %v736 = vrot.slane %v685, %v735
        %v738 = vadd.f32 %v729, %v736
        %v739 = vadd.f32 %v730, %v736
        %v740 = vadd.f32 %v731, %v736
        %v741 = vld [vmem:[%s635] sm:$0xff]
        %v742 = vld [vmem:[%s635 + $0x8] sm:$0xff]
        %v743 = vld [vmem:[%s635 + $0x10] sm:$0xff]
        %v744 = vld [vmem:[%s635 + $0x18] sm:$0xff]
        %v745 = vld [vmem:[%s635 + $0x20] sm:$0xff]
        %v746 = vld [vmem:[%s635 + $0x28] sm:$0xff]
        %v747 = vld [vmem:[%s635 + $0x30] sm:$0xff]
        %v748 = vld [vmem:[%s635 + $0x38] sm:$0xff]
        %v749 = vld [vmem:[%s635 + $0x40] sm:$0xff]
        %v750 = vld [vmem:[%s635 + $0x48] sm:$0xff]
        %v751 = vld [vmem:[%s635 + $0x50] sm:$0xff]
        %v752 = vld [vmem:[%s635 + $0x58] sm:$0xff]
        %v753 = vld [vmem:[%s635 + $0x60] sm:$0xff]
        %v754 = vld [vmem:[%s635 + $0x68] sm:$0xff]
        %v755 = vld [vmem:[%s635 + $0x70] sm:$0xff]
        %v756 = vld [vmem:[%s635 + $0x78] sm:$0xff]
        %v757 = vld [vmem:[%s635 + $0x80] sm:$0xff]
        %v758 = vld [vmem:[%s635 + $0x88] sm:$0xff]
        %v759 = vld [vmem:[%s635 + $0x90] sm:$0xff]
        %v760 = vld [vmem:[%s635 + $0x98] sm:$0xff]
        %v761 = vld [vmem:[%s635 + $0xa0] sm:$0xff]
        %v762 = vld [vmem:[%s635 + $0xa8] sm:$0xff]
        %v763 = vld [vmem:[%s635 + $0xb0] sm:$0xff]
        %v764 = vld [vmem:[%s635 + $0xb8] sm:$0xff]
        %v765 = vld [vmem:[%s635 + $0xc0] sm:$0xff]
        %v766 = vld [vmem:[%s635 + $0xc8] sm:$0xff]
        %v767 = vld [vmem:[%s635 + $0xd0] sm:$0xff]
        %v768 = vld [vmem:[%s635 + $0xd8] sm:$0xff]
        %v769 = vld [vmem:[%s635 + $0xe0] sm:$0xff]
        %v770 = vld [vmem:[%s635 + $0xe8] sm:$0xff]
        %v771 = vld [vmem:[%s635 + $0xf0] sm:$0xff]
        %v772 = vld [vmem:[%s635 + $0xf8] sm:$0xff]
        %v773 = vld [vmem:[%s635 + $0x100] sm:$0xff]
        %v774 = vld [vmem:[%s635 + $0x108] sm:$0xff]
        %v775 = vld [vmem:[%s635 + $0x110] sm:$0xff]
        %v776 = vld [vmem:[%s635 + $0x118] sm:$0xff]
        %v777 = vld [vmem:[%s635 + $0x120] sm:$0xff]
        %v778 = vld [vmem:[%s635 + $0x128] sm:$0xff]
        %v779 = vld [vmem:[%s635 + $0x130] sm:$0xff]
        %v780 = vld [vmem:[%s635 + $0x138] sm:$0xff]
        %v781 = vld [vmem:[%s635 + $0x140] sm:$0xff]
        %v782 = vld [vmem:[%s635 + $0x148] sm:$0xff]
        %v783 = vld [vmem:[%s635 + $0x150] sm:$0xff]
        %v784 = vld [vmem:[%s635 + $0x158] sm:$0xff]
        %v785 = vld [vmem:[%s635 + $0x160] sm:$0xff]
        %v786 = vld [vmem:[%s635 + $0x168] sm:$0xff]
        %v787 = vld [vmem:[%s635 + $0x170] sm:$0xff]
        %v788 = vld [vmem:[%s635 + $0x178] sm:$0xff]
        %v789 = vld [vmem:[%s639] sm:$0x7]
        %v791 = vlaneseq
        %v792 = vshrl.u32 %v791, 7
        %v793 = vsub.s32 0, %v792
        %v794 = vrot.slane %v789, %v793
        %v795 = vlaneseq
        %v796 = vshrl.u32 %v795, 7
        %v797 = vsub.s32 1, %v796
        %v798 = vrot.slane %v789, %v797
        %v799 = vlaneseq
        %v800 = vshrl.u32 %v799, 7
        %v801 = vsub.s32 2, %v800
        %v802 = vrot.slane %v789, %v801
        %806 = vmatprep.subr.mxu0 %v787
        %807 = vmatpush1.msra.mxu0 %v786
        %808 = vmatprep.subr.mxu0 %v784
        %809 = vmatpush1.msra.mxu0 %v783
        %810 = vmatprep.subr.mxu0 %v781
        %811 = vmatpush1.msra.mxu0 %v780
        %812 = vmatprep.subr.mxu0 %v778
        %813 = vmatpush1.msra.mxu0 %v777
        %814 = vmatprep.subr.mxu0 %v775
        %815 = vmatpush1.msra.mxu0 %v774
        %816 = vmatprep.subr.mxu0 %v772
        %817 = vmatpush1.msra.mxu0 %v771
        %818 = vmatprep.subr.mxu0 %v769
        %819 = vmatpush1.msra.mxu0 %v768
        %820 = vmatprep.subr.mxu0 %v766
        %821 = vmatpush1.msra.mxu0 %v765
        %822 = vmatprep.subr.mxu0 %v763
        %823 = vmatpush1.msra.mxu0 %v762
        %824 = vmatprep.subr.mxu0 %v760
        %825 = vmatpush1.msra.mxu0 %v759
        %826 = vmatprep.subr.mxu0 %v757
        %827 = vmatpush1.msra.mxu0 %v756
        %828 = vmatprep.subr.mxu0 %v754
        %829 = vmatpush1.msra.mxu0 %v753
        %830 = vmatprep.subr.mxu0 %v751
        %831 = vmatpush1.msra.mxu0 %v750
        %832 = vmatprep.subr.mxu0 %v748
        %833 = vmatpush1.msra.mxu0 %v747
        %834 = vmatprep.subr.mxu0 %v745
        %835 = vmatpush1.msra.mxu0 %v744
        %836 = vmatprep.subr.mxu0 %v742
        %837 = vmatpush1.msra.mxu0 %v741
        %838 = vmatprep.subr.mxu0 0.0
        %839 = vmatpush2.msra.mxu0 0.0
        %840 = vmatprep.subr.mxu0 0.0
        %841 = vmatpush2.msra.mxu0 0.0
        %842 = vmatprep.subr.mxu0 0.0
        %843 = vmatpush2.msra.mxu0 0.0
        %844 = vmatprep.subr.mxu0 0.0
        %845 = vmatpush2.msra.mxu0 0.0
        %846 = vmatprep.subr.mxu0 0.0
        %847 = vmatpush2.msra.mxu0 0.0
        %848 = vmatprep.subr.mxu0 0.0
        %849 = vmatpush2.msra.mxu0 0.0
        %850 = vmatprep.subr.mxu0 0.0
        %851 = vmatpush2.msra.mxu0 0.0
        %852 = vmatprep.subr.mxu0 0.0
        %853 = vmatpush2.msra.mxu0 0.0
        %854 = vmatprep.subr.mxu0 0.0
        %855 = vmatpush2.msra.mxu0 0.0
        %856 = vmatprep.subr.mxu0 0.0
        %857 = vmatpush2.msra.mxu0 0.0
        %858 = vmatprep.subr.mxu0 0.0
        %859 = vmatpush2.msra.mxu0 0.0
        %860 = vmatprep.subr.mxu0 0.0
        %861 = vmatpush2.msra.mxu0 0.0
        %862 = vmatprep.subr.mxu0 0.0
        %863 = vmatpush2.msra.mxu0 0.0
        %864 = vmatprep.subr.mxu0 0.0
        %865 = vmatpush2.msra.mxu0 0.0
        %866 = vmatprep.subr.mxu0 0.0
        %867 = vmatpush2.msra.mxu0 0.0
        %868 = vmatprep.subr.mxu0 0.0
        %869 = vmatpush2.msra.mxu0 0.0
        %870 = vmatprep.mubr.f32.mxu0 0.0
        %871 = vmatmul.mubr.f32.gmra.mxu0 %v738
        %v872 = vpop.f32.mrf.mxu0
        %v873 = vadd.f32 %v794, %v872
        %v874 = vpop.f32.mrf.mxu0
        %v875 = vadd.f32 %v798, %v874
        %876 = vmatprep.mubr.f32.mxu0 0.0
        %877 = vmatmul.mubr.f32.gmra.mxu0 %v739
        %v878 = vpop.f32.mrf.mxu0
        %v879 = vadd.f32 %v794, %v878
        %v880 = vpop.f32.mrf.mxu0
        %v881 = vadd.f32 %v798, %v880
        %882 = vmatprep.mubr.f32.mxu0 0.0
        %883 = vmatmul.mubr.f32.gmra.mxu0 %v740
        %v884 = vpop.f32.mrf.mxu0
        %v885 = vadd.f32 %v794, %v884
        %v886 = vpop.f32.mrf.mxu0
        %v887 = vadd.f32 %v798, %v886
        %888 = vdwg.mxu0
        %889 = vmatprep.subr.mxu0 0.0
        %890 = vmatpush1.msra.mxu0 %v788
        %891 = vmatprep.subr.mxu0 0.0
        %892 = vmatpush1.msra.mxu0 %v785
        %893 = vmatprep.subr.mxu0 0.0
        %894 = vmatpush1.msra.mxu0 %v782
        %895 = vmatprep.subr.mxu0 0.0
        %896 = vmatpush1.msra.mxu0 %v779
        %897 = vmatprep.subr.mxu0 0.0
        %898 = vmatpush1.msra.mxu0 %v776
        %899 = vmatprep.subr.mxu0 0.0
        %900 = vmatpush1.msra.mxu0 %v773
        %901 = vmatprep.subr.mxu0 0.0
        %902 = vmatpush1.msra.mxu0 %v770
        %903 = vmatprep.subr.mxu0 0.0
        %904 = vmatpush1.msra.mxu0 %v767
        %905 = vmatprep.subr.mxu0 0.0
        %906 = vmatpush1.msra.mxu0 %v764
        %907 = vmatprep.subr.mxu0 0.0
        %908 = vmatpush1.msra.mxu0 %v761
        %909 = vmatprep.subr.mxu0 0.0
        %910 = vmatpush1.msra.mxu0 %v758
        %911 = vmatprep.subr.mxu0 0.0
        %912 = vmatpush1.msra.mxu0 %v755
        %913 = vmatprep.subr.mxu0 0.0
        %914 = vmatpush1.msra.mxu0 %v752
        %915 = vmatprep.subr.mxu0 0.0
        %916 = vmatpush1.msra.mxu0 %v749
        %917 = vmatprep.subr.mxu0 0.0
        %918 = vmatpush1.msra.mxu0 %v746
        %919 = vmatprep.subr.mxu0 0.0
        %920 = vmatpush1.msra.mxu0 %v743
        %921 = vmatprep.subr.mxu0 0.0
        %922 = vmatpush2.msra.mxu0 0.0
        %923 = vmatprep.subr.mxu0 0.0
        %924 = vmatpush2.msra.mxu0 0.0
        %925 = vmatprep.subr.mxu0 0.0
        %926 = vmatpush2.msra.mxu0 0.0
        %927 = vmatprep.subr.mxu0 0.0
        %928 = vmatpush2.msra.mxu0 0.0
        %929 = vmatprep.subr.mxu0 0.0
        %930 = vmatpush2.msra.mxu0 0.0
        %931 = vmatprep.subr.mxu0 0.0
        %932 = vmatpush2.msra.mxu0 0.0
        %933 = vmatprep.subr.mxu0 0.0
        %934 = vmatpush2.msra.mxu0 0.0
        %935 = vmatprep.subr.mxu0 0.0
        %936 = vmatpush2.msra.mxu0 0.0
        %937 = vmatprep.subr.mxu0 0.0
        %938 = vmatpush2.msra.mxu0 0.0
        %939 = vmatprep.subr.mxu0 0.0
        %940 = vmatpush2.msra.mxu0 0.0
        %941 = vmatprep.subr.mxu0 0.0
        %942 = vmatpush2.msra.mxu0 0.0
        %943 = vmatprep.subr.mxu0 0.0
        %944 = vmatpush2.msra.mxu0 0.0
        %945 = vmatprep.subr.mxu0 0.0
        %946 = vmatpush2.msra.mxu0 0.0
        %947 = vmatprep.subr.mxu0 0.0
        %948 = vmatpush2.msra.mxu0 0.0
        %949 = vmatprep.subr.mxu0 0.0
        %950 = vmatpush2.msra.mxu0 0.0
        %951 = vmatprep.subr.mxu0 0.0
        %952 = vmatpush2.msra.mxu0 0.0
        %953 = vmatprep.mubr.f32.mxu0 0.0
        %954 = vmatmul.mubr.f32.gmra.mxu0 %v738
        %v955 = vpop.f32.mrf.mxu0
        %v956 = vadd.f32 %v802, %v955
        %v957 = vpop.f32.mrf.mxu0
        %958 = vmatprep.mubr.f32.mxu0 0.0
        %959 = vmatmul.mubr.f32.gmra.mxu0 %v739
        %v960 = vpop.f32.mrf.mxu0
        %v961 = vadd.f32 %v802, %v960
        %v962 = vpop.f32.mrf.mxu0
        %963 = vmatprep.mubr.f32.mxu0 0.0
        %964 = vmatmul.mubr.f32.gmra.mxu0 %v740
        %v965 = vpop.f32.mrf.mxu0
        %v966 = vadd.f32 %v802, %v965
        %v967 = vpop.f32.mrf.mxu0
        %968 = vdwg.mxu0
        %vm969 = vcmask 261120
        %v971 = vsel %vm969, %v873, 0
        %v974 = vsel %vm969, %v879, 0
        %v977 = vsel %vm969, %v885, 0
        %v980 = vsel %vm969, %v875, 0
        %v983 = vsel %vm969, %v881, 0
        %v986 = vsel %vm969, %v887, 0
        %988 = vmatprep.subr.mxu0 0.0
        %989 = vmatpush1.xpose.msra.mxu0 0.0
        %990 = vmatprep.subr.mxu0 0.0
        %991 = vmatpush1.xpose.msra.mxu0 0.0
        %992 = vmatprep.subr.mxu0 0.0
        %993 = vmatpush1.xpose.msra.mxu0 0.0
        %994 = vmatprep.subr.mxu0 0.0
        %995 = vmatpush1.xpose.msra.mxu0 0.0
        %996 = vmatprep.subr.mxu0 0.0
        %997 = vmatpush1.xpose.msra.mxu0 0.0
        %998 = vmatprep.subr.mxu0 0.0
        %999 = vmatpush1.xpose.msra.mxu0 0.0
        %1000 = vmatprep.subr.mxu0 0.0
        %1001 = vmatpush1.xpose.msra.mxu0 0.0
        %1002 = vmatprep.subr.mxu0 0.0
        %1003 = vmatpush1.xpose.msra.mxu0 0.0
        %1004 = vmatprep.subr.mxu0 0.0
        %1005 = vmatpush1.xpose.msra.mxu0 0.0
        %1006 = vmatprep.subr.mxu0 0.0
        %1007 = vmatpush1.xpose.msra.mxu0 0.0
        %1008 = vmatprep.subr.mxu0 0.0
        %1009 = vmatpush1.xpose.msra.mxu0 0.0
        %1010 = vmatprep.subr.mxu0 0.0
        %1011 = vmatpush1.xpose.msra.mxu0 0.0
        %1012 = vmatprep.subr.mxu0 0.0
        %1013 = vmatpush1.xpose.msra.mxu0 0.0
        %1014 = vmatprep.subr.mxu0 0.0
        %1015 = vmatpush1.xpose.msra.mxu0 %v986
        %1016 = vmatprep.subr.mxu0 0.0
        %1017 = vmatpush1.xpose.msra.mxu0 %v983
        %1018 = vmatprep.subr.mxu0 0.0
        %1019 = vmatpush1.xpose.msra.mxu0 %v980
        %1020 = vmatprep.subr.mxu0 0.0
        %1021 = vmatpush2.xpose.msra.mxu0 0.0
        %1022 = vmatprep.subr.mxu0 0.0
        %1023 = vmatpush2.xpose.msra.mxu0 0.0
        %1024 = vmatprep.subr.mxu0 0.0
        %1025 = vmatpush2.xpose.msra.mxu0 0.0
        %1026 = vmatprep.subr.mxu0 0.0
        %1027 = vmatpush2.xpose.msra.mxu0 0.0
        %1028 = vmatprep.subr.mxu0 0.0
        %1029 = vmatpush2.xpose.msra.mxu0 0.0
        %1030 = vmatprep.subr.mxu0 0.0
        %1031 = vmatpush2.xpose.msra.mxu0 0.0
        %1032 = vmatprep.subr.mxu0 0.0
        %1033 = vmatpush2.xpose.msra.mxu0 0.0
        %1034 = vmatprep.subr.mxu0 0.0
        %1035 = vmatpush2.xpose.msra.mxu0 0.0
        %1036 = vmatprep.subr.mxu0 0.0
        %1037 = vmatpush2.xpose.msra.mxu0 0.0
        %1038 = vmatprep.subr.mxu0 0.0
        %1039 = vmatpush2.xpose.msra.mxu0 0.0
        %1040 = vmatprep.subr.mxu0 0.0
        %1041 = vmatpush2.xpose.msra.mxu0 0.0
        %1042 = vmatprep.subr.mxu0 0.0
        %1043 = vmatpush2.xpose.msra.mxu0 0.0
        %1044 = vmatprep.subr.mxu0 0.0
        %1045 = vmatpush2.xpose.msra.mxu0 0.0
        %1046 = vmatprep.subr.mxu0 0.0
        %1047 = vmatpush2.xpose.msra.mxu0 0.0
        %1048 = vmatprep.subr.mxu0 0.0
        %1049 = vmatpush2.xpose.msra.mxu0 0.0
        %1050 = vmatprep.subr.mxu0 0.0
        %1051 = vmatpush2.xpose.msra.mxu0 0.0
        %1052 = vmatprep.mubr.f32.mxu0 0.0
        %1053 = vmatmul.mubr.f32.gmra.mxu0 %v971
        %v1054 = vpop.f32.mrf.mxu0
        %v1055 = vadd.f32 0.0, %v1054
        %v1056 = vpop.f32.mrf.mxu0
        %1057 = vmatprep.mubr.f32.mxu0 0.0
        %1058 = vmatmul.mubr.f32.gmra.mxu0 %v974
        %v1059 = vpop.f32.mrf.mxu0
        %v1060 = vadd.f32 0.0, %v1059
        %v1061 = vpop.f32.mrf.mxu0
        %1062 = vmatprep.mubr.f32.mxu0 0.0
        %1063 = vmatmul.mubr.f32.gmra.mxu0 %v977
        %v1064 = vpop.f32.mrf.mxu0
        %v1065 = vadd.f32 0.0, %v1064
        %v1066 = vpop.f32.mrf.mxu0
        %1067 = vdwg.mxu0
        %v1068 = vmul.f32 %v1055, 0.17677669
        %v1069 = vmul.f32 %v1060, 0.17677669
        %v1070 = vmul.f32 %v1065, 0.17677669
        %vm1071 = vcmask 138240
        %v1072 = vsel %vm1071, %v1068, -inf
        %1073 = vmax.xlane.f32.xlu0 %v1072
        %v1074 = vpop.xlane.xlu0 %1073
        %v1075 = vsel %vm1071, %v1069, -inf
        %1076 = vmax.xlane.f32.xlu0 %v1075
        %v1077 = vpop.xlane.xlu0 %1076
        %vm1078 = vcmask 131072
        %v1079 = vsel %vm1078, %v1070, -inf
        %1080 = vmax.xlane.f32.xlu0 %v1079
        %v1081 = vpop.xlane.xlu0 %1080
        %v1082 = vsub.f32 %v1068, %v1074
        %v1083 = vsub.f32 %v1069, %v1077
        %v1084 = vsub.f32 %v1070, %v1081
        %v1085 = vmul.f32 %v1082, 1.442695
        %v1086 = vpow.pop %v1085
        %v1087 = vmul.f32 %v1083, 1.442695
        %v1088 = vpow.pop %v1087
        %v1089 = vmul.f32 %v1084, 1.442695
        %v1090 = vpow.pop %v1089
        %v1091 = vsel %vm1071, %v1086, 0.0
        %1092 = vadd.xlane.f32.xlu0 %v1091
        %v1093 = vpop.xlane.xlu0 %1092
        %v1094 = vsel %vm1071, %v1088, 0.0
        %1095 = vadd.xlane.f32.xlu0 %v1094
        %v1096 = vpop.xlane.xlu0 %1095
        %v1097 = vsel %vm1078, %v1090, 0.0
        %1098 = vadd.xlane.f32.xlu0 %v1097
        %v1099 = vpop.xlane.xlu0 %1098
        %v1100 = vrcp.pop %v1093
        %v1101 = vrcp.pop %v1096
        %v1102 = vrcp.pop %v1099
        %v1103 = vmul.f32 %v1086, %v1100
        %v1104 = vmul.f32 %v1088, %v1101
        %v1105 = vmul.f32 %v1090, %v1102
        %v1107 = vsel %vm1071, %v1103, 0
        %v1110 = vsel %vm1071, %v1104, 0
        %v1113 = vsel %vm1071, %v1105, 0
        %v1116 = vsel %vm690, %v966, 0
        %1118 = vmatprep.subr.mxu0 0.0
        %1119 = vmatpush1.msra.mxu0 0.0
        %1120 = vmatprep.subr.mxu0 0.0
        %1121 = vmatpush1.msra.mxu0 0.0
        %1122 = vmatprep.subr.mxu0 0.0
        %1123 = vmatpush1.msra.mxu0 0.0
        %1124 = vmatprep.subr.mxu0 0.0
        %1125 = vmatpush1.msra.mxu0 0.0
        %1126 = vmatprep.subr.mxu0 0.0
        %1127 = vmatpush1.msra.mxu0 0.0
        %1128 = vmatprep.subr.mxu0 0.0
        %1129 = vmatpush1.msra.mxu0 0.0
        %1130 = vmatprep.subr.mxu0 0.0
        %1131 = vmatpush1.msra.mxu0 0.0
        %1132 = vmatprep.subr.mxu0 0.0
        %1133 = vmatpush1.msra.mxu0 0.0
        %1134 = vmatprep.subr.mxu0 0.0
        %1135 = vmatpush1.msra.mxu0 0.0
        %1136 = vmatprep.subr.mxu0 0.0
        %1137 = vmatpush1.msra.mxu0 0.0
        %1138 = vmatprep.subr.mxu0 0.0
        %1139 = vmatpush1.msra.mxu0 0.0
        %1140 = vmatprep.subr.mxu0 0.0
        %1141 = vmatpush1.msra.mxu0 0.0
        %1142 = vmatprep.subr.mxu0 0.0
        %1143 = vmatpush1.msra.mxu0 0.0
        %1144 = vmatprep.subr.mxu0 0.0
        %1145 = vmatpush1.msra.mxu0 %v1116
        %1146 = vmatprep.subr.mxu0 0.0
        %1147 = vmatpush1.msra.mxu0 %v961
        %1148 = vmatprep.subr.mxu0 0.0
        %1149 = vmatpush1.msra.mxu0 %v956
        %1150 = vmatprep.subr.mxu0 0.0
        %1151 = vmatpush2.msra.mxu0 0.0
        %1152 = vmatprep.subr.mxu0 0.0
        %1153 = vmatpush2.msra.mxu0 0.0
        %1154 = vmatprep.subr.mxu0 0.0
        %1155 = vmatpush2.msra.mxu0 0.0
        %1156 = vmatprep.subr.mxu0 0.0
        %1157 = vmatpush2.msra.mxu0 0.0
        %1158 = vmatprep.subr.mxu0 0.0
        %1159 = vmatpush2.msra.mxu0 0.0
        %1160 = vmatprep.subr.mxu0 0.0
        %1161 = vmatpush2.msra.mxu0 0.0
        %1162 = vmatprep.subr.mxu0 0.0
        %1163 = vmatpush2.msra.mxu0 0.0
        %1164 = vmatprep.subr.mxu0 0.0
        %1165 = vmatpush2.msra.mxu0 0.0
        %1166 = vmatprep.subr.mxu0 0.0
        %1167 = vmatpush2.msra.mxu0 0.0
        %1168 = vmatprep.subr.mxu0 0.0
        %1169 = vmatpush2.msra.mxu0 0.0
        %1170 = vmatprep.subr.mxu0 0.0
        %1171 = vmatpush2.msra.mxu0 0.0
        %1172 = vmatprep.subr.mxu0 0.0
        %1173 = vmatpush2.msra.mxu0 0.0
        %1174 = vmatprep.subr.mxu0 0.0
        %1175 = vmatpush2.msra.mxu0 0.0
        %1176 = vmatprep.subr.mxu0 0.0
        %1177 = vmatpush2.msra.mxu0 0.0
        %1178 = vmatprep.subr.mxu0 0.0
        %1179 = vmatpush2.msra.mxu0 0.0
        %1180 = vmatprep.subr.mxu0 0.0
        %1181 = vmatpush2.msra.mxu0 0.0
        %1182 = vmatprep.mubr.f32.mxu0 0.0
        %1183 = vmatmul.mubr.f32.gmra.mxu0 %v1107
        %v1184 = vpop.f32.mrf.mxu0
        %v1185 = vadd.f32 0.0, %v1184
        %v1186 = vpop.f32.mrf.mxu0
        %1187 = vmatprep.mubr.f32.mxu0 0.0
        %1188 = vmatmul.mubr.f32.gmra.mxu0 %v1110
        %v1189 = vpop.f32.mrf.mxu0
        %v1190 = vadd.f32 0.0, %v1189
        %v1191 = vpop.f32.mrf.mxu0
        %1192 = vmatprep.mubr.f32.mxu0 0.0
        %1193 = vmatmul.mubr.f32.gmra.mxu0 %v1113
        %v1194 = vpop.f32.mrf.mxu0
        %v1195 = vadd.f32 0.0, %v1194
        %v1196 = vpop.f32.mrf.mxu0
        %1197 = vdwg.mxu0
        %1198 = vrot.lane.b32.xlu0 %v873, 96
        %v1199 = vpop.permute.xlu0 %1198
        %1200 = vrot.lane.b32.xlu0 %v879, 96
        %v1201 = vpop.permute.xlu0 %1200
        %1202 = vrot.lane.b32.xlu0 %v885, 96
        %v1203 = vpop.permute.xlu0 %1202
        %1204 = vrot.lane.b32.xlu0 %v875, 96
        %v1205 = vpop.permute.xlu0 %1204
        %1206 = vrot.lane.b32.xlu0 %v881, 96
        %v1207 = vpop.permute.xlu0 %1206
        %1208 = vrot.lane.b32.xlu0 %v887, 96
        %v1209 = vpop.permute.xlu0 %1208
        %v1210 = vsel %vm969, %v1199, 0
        %v1212 = vsel %vm969, %v1201, 0
        %v1214 = vsel %vm969, %v1203, 0
        %v1216 = vsel %vm969, %v1205, 0
        %v1218 = vsel %vm969, %v1207, 0
        %v1220 = vsel %vm969, %v1209, 0
        %1222 = vmatprep.subr.mxu0 0.0
        %1223 = vmatpush1.xpose.msra.mxu0 0.0
        %1224 = vmatprep.subr.mxu0 0.0
        %1225 = vmatpush1.xpose.msra.mxu0 0.0
        %1226 = vmatprep.subr.mxu0 0.0
        %1227 = vmatpush1.xpose.msra.mxu0 0.0
        %1228 = vmatprep.subr.mxu0 0.0
        %1229 = vmatpush1.xpose.msra.mxu0 0.0
        %1230 = vmatprep.subr.mxu0 0.0
        %1231 = vmatpush1.xpose.msra.mxu0 0.0
        %1232 = vmatprep.subr.mxu0 0.0
        %1233 = vmatpush1.xpose.msra.mxu0 0.0
        %1234 = vmatprep.subr.mxu0 0.0
        %1235 = vmatpush1.xpose.msra.mxu0 0.0
        %1236 = vmatprep.subr.mxu0 0.0
        %1237 = vmatpush1.xpose.msra.mxu0 0.0
        %1238 = vmatprep.subr.mxu0 0.0
        %1239 = vmatpush1.xpose.msra.mxu0 0.0
        %1240 = vmatprep.subr.mxu0 0.0
        %1241 = vmatpush1.xpose.msra.mxu0 0.0
        %1242 = vmatprep.subr.mxu0 0.0
        %1243 = vmatpush1.xpose.msra.mxu0 0.0
        %1244 = vmatprep.subr.mxu0 0.0
        %1245 = vmatpush1.xpose.msra.mxu0 0.0
        %1246 = vmatprep.subr.mxu0 0.0
        %1247 = vmatpush1.xpose.msra.mxu0 0.0
        %1248 = vmatprep.subr.mxu0 0.0
        %1249 = vmatpush1.xpose.msra.mxu0 %v1220
        %1250 = vmatprep.subr.mxu0 0.0
        %1251 = vmatpush1.xpose.msra.mxu0 %v1218
        %1252 = vmatprep.subr.mxu0 0.0
        %1253 = vmatpush1.xpose.msra.mxu0 %v1216
        %1254 = vmatprep.subr.mxu0 0.0
        %1255 = vmatpush2.xpose.msra.mxu0 0.0
        %1256 = vmatprep.subr.mxu0 0.0
        %1257 = vmatpush2.xpose.msra.mxu0 0.0
        %1258 = vmatprep.subr.mxu0 0.0
        %1259 = vmatpush2.xpose.msra.mxu0 0.0
        %1260 = vmatprep.subr.mxu0 0.0
        %1261 = vmatpush2.xpose.msra.mxu0 0.0
        %1262 = vmatprep.subr.mxu0 0.0
        %1263 = vmatpush2.xpose.msra.mxu0 0.0
        %1264 = vmatprep.subr.mxu0 0.0
        %1265 = vmatpush2.xpose.msra.mxu0 0.0
        %1266 = vmatprep.subr.mxu0 0.0
        %1267 = vmatpush2.xpose.msra.mxu0 0.0
        %1268 = vmatprep.subr.mxu0 0.0
        %1269 = vmatpush2.xpose.msra.mxu0 0.0
        %1270 = vmatprep.subr.mxu0 0.0
        %1271 = vmatpush2.xpose.msra.mxu0 0.0
        %1272 = vmatprep.subr.mxu0 0.0
        %1273 = vmatpush2.xpose.msra.mxu0 0.0
        %1274 = vmatprep.subr.mxu0 0.0
        %1275 = vmatpush2.xpose.msra.mxu0 0.0
        %1276 = vmatprep.subr.mxu0 0.0
        %1277 = vmatpush2.xpose.msra.mxu0 0.0
        %1278 = vmatprep.subr.mxu0 0.0
        %1279 = vmatpush2.xpose.msra.mxu0 0.0
        %1280 = vmatprep.subr.mxu0 0.0
        %1281 = vmatpush2.xpose.msra.mxu0 0.0
        %1282 = vmatprep.subr.mxu0 0.0
        %1283 = vmatpush2.xpose.msra.mxu0 0.0
        %1284 = vmatprep.subr.mxu0 0.0
        %1285 = vmatpush2.xpose.msra.mxu0 0.0
        %1286 = vmatprep.mubr.f32.mxu0 0.0
        %1287 = vmatmul.mubr.f32.gmra.mxu0 %v1210
        %v1288 = vpop.f32.mrf.mxu0
        %v1289 = vadd.f32 0.0, %v1288
        %v1290 = vpop.f32.mrf.mxu0
        %1291 = vmatprep.mubr.f32.mxu0 0.0
        %1292 = vmatmul.mubr.f32.gmra.mxu0 %v1212
        %v1293 = vpop.f32.mrf.mxu0
        %v1294 = vadd.f32 0.0, %v1293
        %v1295 = vpop.f32.mrf.mxu0
        %1296 = vmatprep.mubr.f32.mxu0 0.0
        %1297 = vmatmul.mubr.f32.gmra.mxu0 %v1214
        %v1298 = vpop.f32.mrf.mxu0
        %v1299 = vadd.f32 0.0, %v1298
        %v1300 = vpop.f32.mrf.mxu0
        %1301 = vdwg.mxu0
        %v1302 = vmul.f32 %v1289, 0.17677669
        %v1303 = vmul.f32 %v1294, 0.17677669
        %v1304 = vmul.f32 %v1299, 0.17677669
        %v1305 = vsel %vm1071, %v1302, -inf
        %1306 = vmax.xlane.f32.xlu0 %v1305
        %v1307 = vpop.xlane.xlu0 %1306
        %v1308 = vsel %vm1071, %v1303, -inf
        %1309 = vmax.xlane.f32.xlu0 %v1308
        %v1310 = vpop.xlane.xlu0 %1309
        %v1311 = vsel %vm1078, %v1304, -inf
        %1312 = vmax.xlane.f32.xlu0 %v1311
        %v1313 = vpop.xlane.xlu0 %1312
        %v1314 = vsub.f32 %v1302, %v1307
        %v1315 = vsub.f32 %v1303, %v1310
        %v1316 = vsub.f32 %v1304, %v1313
        %v1317 = vmul.f32 %v1314, 1.442695
        %v1318 = vpow.pop %v1317
        %v1319 = vmul.f32 %v1315, 1.442695
        %v1320 = vpow.pop %v1319
        %v1321 = vmul.f32 %v1316, 1.442695
        %v1322 = vpow.pop %v1321
        %v1323 = vsel %vm1071, %v1318, 0.0
        %1324 = vadd.xlane.f32.xlu0 %v1323
        %v1325 = vpop.xlane.xlu0 %1324
        %v1326 = vsel %vm1071, %v1320, 0.0
        %1327 = vadd.xlane.f32.xlu0 %v1326
        %v1328 = vpop.xlane.xlu0 %1327
        %v1329 = vsel %vm1078, %v1322, 0.0
        %1330 = vadd.xlane.f32.xlu0 %v1329
        %v1331 = vpop.xlane.xlu0 %1330
        %v1332 = vrcp.pop %v1325
        %v1333 = vrcp.pop %v1328
        %v1334 = vrcp.pop %v1331
        %v1335 = vmul.f32 %v1318, %v1332
        %v1336 = vmul.f32 %v1320, %v1333
        %v1337 = vmul.f32 %v1322, %v1334
        %1340 = vrot.lane.b32.xlu0 %v956, 96
        %v1341 = vpop.permute.xlu0 %1340
        %1342 = vrot.lane.b32.xlu0 %v961, 96
        %v1343 = vpop.permute.xlu0 %1342
        %1344 = vrot.lane.b32.xlu0 %v966, 96
        %v1345 = vpop.permute.xlu0 %1344
        %v1349 = vsel %vm1071, %v1335, 0
        %v1352 = vsel %vm1071, %v1336, 0
        %v1355 = vsel %vm1071, %v1337, 0
        %v1357 = vsel %vm690, %v1345, 0
        %1359 = vmatprep.subr.mxu0 0.0
        %1360 = vmatpush1.msra.mxu0 0.0
        %1361 = vmatprep.subr.mxu0 0.0
        %1362 = vmatpush1.msra.mxu0 0.0
        %1363 = vmatprep.subr.mxu0 0.0
        %1364 = vmatpush1.msra.mxu0 0.0
        %1365 = vmatprep.subr.mxu0 0.0
        %1366 = vmatpush1.msra.mxu0 0.0
        %1367 = vmatprep.subr.mxu0 0.0
        %1368 = vmatpush1.msra.mxu0 0.0
        %1369 = vmatprep.subr.mxu0 0.0
        %1370 = vmatpush1.msra.mxu0 0.0
        %1371 = vmatprep.subr.mxu0 0.0
        %1372 = vmatpush1.msra.mxu0 0.0
        %1373 = vmatprep.subr.mxu0 0.0
        %1374 = vmatpush1.msra.mxu0 0.0
        %1375 = vmatprep.subr.mxu0 0.0
        %1376 = vmatpush1.msra.mxu0 0.0
        %1377 = vmatprep.subr.mxu0 0.0
        %1378 = vmatpush1.msra.mxu0 0.0
        %1379 = vmatprep.subr.mxu0 0.0
        %1380 = vmatpush1.msra.mxu0 0.0
        %1381 = vmatprep.subr.mxu0 0.0
        %1382 = vmatpush1.msra.mxu0 0.0
        %1383 = vmatprep.subr.mxu0 0.0
        %1384 = vmatpush1.msra.mxu0 0.0
        %1385 = vmatprep.subr.mxu0 0.0
        %1386 = vmatpush1.msra.mxu0 %v1357
        %1387 = vmatprep.subr.mxu0 0.0
        %1388 = vmatpush1.msra.mxu0 %v1343
        %1389 = vmatprep.subr.mxu0 0.0
        %1390 = vmatpush1.msra.mxu0 %v1341
        %1391 = vmatprep.subr.mxu0 0.0
        %1392 = vmatpush2.msra.mxu0 0.0
        %1393 = vmatprep.subr.mxu0 0.0
        %1394 = vmatpush2.msra.mxu0 0.0
        %1395 = vmatprep.subr.mxu0 0.0
        %1396 = vmatpush2.msra.mxu0 0.0
        %1397 = vmatprep.subr.mxu0 0.0
        %1398 = vmatpush2.msra.mxu0 0.0
        %1399 = vmatprep.subr.mxu0 0.0
        %1400 = vmatpush2.msra.mxu0 0.0
        %1401 = vmatprep.subr.mxu0 0.0
        %1402 = vmatpush2.msra.mxu0 0.0
        %1403 = vmatprep.subr.mxu0 0.0
        %1404 = vmatpush2.msra.mxu0 0.0
        %1405 = vmatprep.subr.mxu0 0.0
        %1406 = vmatpush2.msra.mxu0 0.0
        %1407 = vmatprep.subr.mxu0 0.0
        %1408 = vmatpush2.msra.mxu0 0.0
        %1409 = vmatprep.subr.mxu0 0.0
        %1410 = vmatpush2.msra.mxu0 0.0
        %1411 = vmatprep.subr.mxu0 0.0
        %1412 = vmatpush2.msra.mxu0 0.0
        %1413 = vmatprep.subr.mxu0 0.0
        %1414 = vmatpush2.msra.mxu0 0.0
        %1415 = vmatprep.subr.mxu0 0.0
        %1416 = vmatpush2.msra.mxu0 0.0
        %1417 = vmatprep.subr.mxu0 0.0
        %1418 = vmatpush2.msra.mxu0 0.0
        %1419 = vmatprep.subr.mxu0 0.0
        %1420 = vmatpush2.msra.mxu0 0.0
        %1421 = vmatprep.subr.mxu0 0.0
        %1422 = vmatpush2.msra.mxu0 0.0
        %1423 = vmatprep.mubr.f32.mxu0 0.0
        %1424 = vmatmul.mubr.f32.gmra.mxu0 %v1349
        %v1425 = vpop.f32.mrf.mxu0
        %v1426 = vadd.f32 0.0, %v1425
        %v1427 = vpop.f32.mrf.mxu0
        %1428 = vmatprep.mubr.f32.mxu0 0.0
        %1429 = vmatmul.mubr.f32.gmra.mxu0 %v1352
        %v1430 = vpop.f32.mrf.mxu0
        %v1431 = vadd.f32 0.0, %v1430
        %v1432 = vpop.f32.mrf.mxu0
        %1433 = vmatprep.mubr.f32.mxu0 0.0
        %1434 = vmatmul.mubr.f32.gmra.mxu0 %v1355
        %v1435 = vpop.f32.mrf.mxu0
        %v1436 = vadd.f32 0.0, %v1435
        %v1437 = vpop.f32.mrf.mxu0
        %1438 = vdwg.mxu0
        %1439 = vrot.lane.b32.xlu0 %v873, 64
        %v1440 = vpop.permute.xlu0 %1439
        %1441 = vrot.lane.b32.xlu0 %v879, 64
        %v1442 = vpop.permute.xlu0 %1441
        %1443 = vrot.lane.b32.xlu0 %v885, 64
        %v1444 = vpop.permute.xlu0 %1443
        %1445 = vrot.lane.b32.xlu0 %v875, 64
        %v1446 = vpop.permute.xlu0 %1445
        %1447 = vrot.lane.b32.xlu0 %v881, 64
        %v1448 = vpop.permute.xlu0 %1447
        %1449 = vrot.lane.b32.xlu0 %v887, 64
        %v1450 = vpop.permute.xlu0 %1449
        %v1451 = vsel %vm969, %v1440, 0
        %v1453 = vsel %vm969, %v1442, 0
        %v1455 = vsel %vm969, %v1444, 0
        %v1457 = vsel %vm969, %v1446, 0
        %v1459 = vsel %vm969, %v1448, 0
        %v1461 = vsel %vm969, %v1450, 0
        %1463 = vmatprep.subr.mxu0 0.0
        %1464 = vmatpush1.xpose.msra.mxu0 0.0
        %1465 = vmatprep.subr.mxu0 0.0
        %1466 = vmatpush1.xpose.msra.mxu0 0.0
        %1467 = vmatprep.subr.mxu0 0.0
        %1468 = vmatpush1.xpose.msra.mxu0 0.0
        %1469 = vmatprep.subr.mxu0 0.0
        %1470 = vmatpush1.xpose.msra.mxu0 0.0
        %1471 = vmatprep.subr.mxu0 0.0
        %1472 = vmatpush1.xpose.msra.mxu0 0.0
        %1473 = vmatprep.subr.mxu0 0.0
        %1474 = vmatpush1.xpose.msra.mxu0 0.0
        %1475 = vmatprep.subr.mxu0 0.0
        %1476 = vmatpush1.xpose.msra.mxu0 0.0
        %1477 = vmatprep.subr.mxu0 0.0
        %1478 = vmatpush1.xpose.msra.mxu0 0.0
        %1479 = vmatprep.subr.mxu0 0.0
        %1480 = vmatpush1.xpose.msra.mxu0 0.0
        %1481 = vmatprep.subr.mxu0 0.0
        %1482 = vmatpush1.xpose.msra.mxu0 0.0
        %1483 = vmatprep.subr.mxu0 0.0
        %1484 = vmatpush1.xpose.msra.mxu0 0.0
        %1485 = vmatprep.subr.mxu0 0.0
        %1486 = vmatpush1.xpose.msra.mxu0 0.0
        %1487 = vmatprep.subr.mxu0 0.0
        %1488 = vmatpush1.xpose.msra.mxu0 0.0
        %1489 = vmatprep.subr.mxu0 0.0
        %1490 = vmatpush1.xpose.msra.mxu0 %v1461
        %1491 = vmatprep.subr.mxu0 0.0
        %1492 = vmatpush1.xpose.msra.mxu0 %v1459
        %1493 = vmatprep.subr.mxu0 0.0
        %1494 = vmatpush1.xpose.msra.mxu0 %v1457
        %1495 = vmatprep.subr.mxu0 0.0
        %1496 = vmatpush2.xpose.msra.mxu0 0.0
        %1497 = vmatprep.subr.mxu0 0.0
        %1498 = vmatpush2.xpose.msra.mxu0 0.0
        %1499 = vmatprep.subr.mxu0 0.0
        %1500 = vmatpush2.xpose.msra.mxu0 0.0
        %1501 = vmatprep.subr.mxu0 0.0
        %1502 = vmatpush2.xpose.msra.mxu0 0.0
        %1503 = vmatprep.subr.mxu0 0.0
        %1504 = vmatpush2.xpose.msra.mxu0 0.0
        %1505 = vmatprep.subr.mxu0 0.0
        %1506 = vmatpush2.xpose.msra.mxu0 0.0
        %1507 = vmatprep.subr.mxu0 0.0
        %1508 = vmatpush2.xpose.msra.mxu0 0.0
        %1509 = vmatprep.subr.mxu0 0.0
        %1510 = vmatpush2.xpose.msra.mxu0 0.0
        %1511 = vmatprep.subr.mxu0 0.0
        %1512 = vmatpush2.xpose.msra.mxu0 0.0
        %1513 = vmatprep.subr.mxu0 0.0
        %1514 = vmatpush2.xpose.msra.mxu0 0.0
        %1515 = vmatprep.subr.mxu0 0.0
        %1516 = vmatpush2.xpose.msra.mxu0 0.0
        %1517 = vmatprep.subr.mxu0 0.0
        %1518 = vmatpush2.xpose.msra.mxu0 0.0
        %1519 = vmatprep.subr.mxu0 0.0
        %1520 = vmatpush2.xpose.msra.mxu0 0.0
        %1521 = vmatprep.subr.mxu0 0.0
        %1522 = vmatpush2.xpose.msra.mxu0 0.0
        %1523 = vmatprep.subr.mxu0 0.0
        %1524 = vmatpush2.xpose.msra.mxu0 0.0
        %1525 = vmatprep.subr.mxu0 0.0
        %1526 = vmatpush2.xpose.msra.mxu0 0.0
        %1527 = vmatprep.mubr.f32.mxu0 0.0
        %1528 = vmatmul.mubr.f32.gmra.mxu0 %v1451
        %v1529 = vpop.f32.mrf.mxu0
        %v1530 = vadd.f32 0.0, %v1529
        %v1531 = vpop.f32.mrf.mxu0
        %1532 = vmatprep.mubr.f32.mxu0 0.0
        %1533 = vmatmul.mubr.f32.gmra.mxu0 %v1453
        %v1534 = vpop.f32.mrf.mxu0
        %v1535 = vadd.f32 0.0, %v1534
        %v1536 = vpop.f32.mrf.mxu0
        %1537 = vmatprep.mubr.f32.mxu0 0.0
        %1538 = vmatmul.mubr.f32.gmra.mxu0 %v1455
        %v1539 = vpop.f32.mrf.mxu0
        %v1540 = vadd.f32 0.0, %v1539
        %v1541 = vpop.f32.mrf.mxu0
        %1542 = vdwg.mxu0
        %v1543 = vmul.f32 %v1530, 0.17677669
        %v1544 = vmul.f32 %v1535, 0.17677669
        %v1545 = vmul.f32 %v1540, 0.17677669
        %v1546 = vsel %vm1071, %v1543, -inf
        %1547 = vmax.xlane.f32.xlu0 %v1546
        %v1548 = vpop.xlane.xlu0 %1547
        %v1549 = vsel %vm1071, %v1544, -inf
        %1550 = vmax.xlane.f32.xlu0 %v1549
        %v1551 = vpop.xlane.xlu0 %1550
        %v1552 = vsel %vm1078, %v1545, -inf
        %1553 = vmax.xlane.f32.xlu0 %v1552
        %v1554 = vpop.xlane.xlu0 %1553
        %v1555 = vsub.f32 %v1543, %v1548
        %v1556 = vsub.f32 %v1544, %v1551
        %v1557 = vsub.f32 %v1545, %v1554
        %v1558 = vmul.f32 %v1555, 1.442695
        %v1559 = vpow.pop %v1558
        %v1560 = vmul.f32 %v1556, 1.442695
        %v1561 = vpow.pop %v1560
        %v1562 = vmul.f32 %v1557, 1.442695
        %v1563 = vpow.pop %v1562
        %v1564 = vsel %vm1071, %v1559, 0.0
        %1565 = vadd.xlane.f32.xlu0 %v1564
        %v1566 = vpop.xlane.xlu0 %1565
        %v1567 = vsel %vm1071, %v1561, 0.0
        %1568 = vadd.xlane.f32.xlu0 %v1567
        %v1569 = vpop.xlane.xlu0 %1568
        %v1570 = vsel %vm1078, %v1563, 0.0
        %1571 = vadd.xlane.f32.xlu0 %v1570
        %v1572 = vpop.xlane.xlu0 %1571
        %v1573 = vrcp.pop %v1566
        %v1574 = vrcp.pop %v1569
        %v1575 = vrcp.pop %v1572
        %v1576 = vmul.f32 %v1559, %v1573
        %v1577 = vmul.f32 %v1561, %v1574
        %v1578 = vmul.f32 %v1563, %v1575
        %1579 = vrot.lane.b32.xlu0 %v956, 64
        %v1580 = vpop.permute.xlu0 %1579
        %1581 = vrot.lane.b32.xlu0 %v961, 64
        %v1582 = vpop.permute.xlu0 %1581
        %1583 = vrot.lane.b32.xlu0 %v966, 64
        %v1584 = vpop.permute.xlu0 %1583
        %v1588 = vsel %vm1071, %v1576, 0
        %v1591 = vsel %vm1071, %v1577, 0
        %v1594 = vsel %vm1071, %v1578, 0
        %v1596 = vsel %vm690, %v1584, 0
        %1598 = vmatprep.subr.mxu0 0.0
        %1599 = vmatpush1.msra.mxu0 0.0
        %1600 = vmatprep.subr.mxu0 0.0
        %1601 = vmatpush1.msra.mxu0 0.0
        %1602 = vmatprep.subr.mxu0 0.0
        %1603 = vmatpush1.msra.mxu0 0.0
        %1604 = vmatprep.subr.mxu0 0.0
        %1605 = vmatpush1.msra.mxu0 0.0
        %1606 = vmatprep.subr.mxu0 0.0
        %1607 = vmatpush1.msra.mxu0 0.0
        %1608 = vmatprep.subr.mxu0 0.0
        %1609 = vmatpush1.msra.mxu0 0.0
        %1610 = vmatprep.subr.mxu0 0.0
        %1611 = vmatpush1.msra.mxu0 0.0
        %1612 = vmatprep.subr.mxu0 0.0
        %1613 = vmatpush1.msra.mxu0 0.0
        %1614 = vmatprep.subr.mxu0 0.0
        %1615 = vmatpush1.msra.mxu0 0.0
        %1616 = vmatprep.subr.mxu0 0.0
        %1617 = vmatpush1.msra.mxu0 0.0
        %1618 = vmatprep.subr.mxu0 0.0
        %1619 = vmatpush1.msra.mxu0 0.0
        %1620 = vmatprep.subr.mxu0 0.0
        %1621 = vmatpush1.msra.mxu0 0.0
        %1622 = vmatprep.subr.mxu0 0.0
        %1623 = vmatpush1.msra.mxu0 0.0
        %1624 = vmatprep.subr.mxu0 0.0
        %1625 = vmatpush1.msra.mxu0 %v1596
        %1626 = vmatprep.subr.mxu0 0.0
        %1627 = vmatpush1.msra.mxu0 %v1582
        %1628 = vmatprep.subr.mxu0 0.0
        %1629 = vmatpush1.msra.mxu0 %v1580
        %1630 = vmatprep.subr.mxu0 0.0
        %1631 = vmatpush2.msra.mxu0 0.0
        %1632 = vmatprep.subr.mxu0 0.0
        %1633 = vmatpush2.msra.mxu0 0.0
        %1634 = vmatprep.subr.mxu0 0.0
        %1635 = vmatpush2.msra.mxu0 0.0
        %1636 = vmatprep.subr.mxu0 0.0
        %1637 = vmatpush2.msra.mxu0 0.0
        %1638 = vmatprep.subr.mxu0 0.0
        %1639 = vmatpush2.msra.mxu0 0.0
        %1640 = vmatprep.subr.mxu0 0.0
        %1641 = vmatpush2.msra.mxu0 0.0
        %1642 = vmatprep.subr.mxu0 0.0
        %1643 = vmatpush2.msra.mxu0 0.0
        %1644 = vmatprep.subr.mxu0 0.0
        %1645 = vmatpush2.msra.mxu0 0.0
        %1646 = vmatprep.subr.mxu0 0.0
        %1647 = vmatpush2.msra.mxu0 0.0
        %1648 = vmatprep.subr.mxu0 0.0
        %1649 = vmatpush2.msra.mxu0 0.0
        %1650 = vmatprep.subr.mxu0 0.0
        %1651 = vmatpush2.msra.mxu0 0.0
        %1652 = vmatprep.subr.mxu0 0.0
        %1653 = vmatpush2.msra.mxu0 0.0
        %1654 = vmatprep.subr.mxu0 0.0
        %1655 = vmatpush2.msra.mxu0 0.0
        %1656 = vmatprep.subr.mxu0 0.0
        %1657 = vmatpush2.msra.mxu0 0.0
        %1658 = vmatprep.subr.mxu0 0.0
        %1659 = vmatpush2.msra.mxu0 0.0
        %1660 = vmatprep.subr.mxu0 0.0
        %1661 = vmatpush2.msra.mxu0 0.0
        %1662 = vmatprep.mubr.f32.mxu0 0.0
        %1663 = vmatmul.mubr.f32.gmra.mxu0 %v1588
        %v1664 = vpop.f32.mrf.mxu0
        %v1665 = vadd.f32 0.0, %v1664
        %v1666 = vpop.f32.mrf.mxu0
        %1667 = vmatprep.mubr.f32.mxu0 0.0
        %1668 = vmatmul.mubr.f32.gmra.mxu0 %v1591
        %v1669 = vpop.f32.mrf.mxu0
        %v1670 = vadd.f32 0.0, %v1669
        %v1671 = vpop.f32.mrf.mxu0
        %1672 = vmatprep.mubr.f32.mxu0 0.0
        %1673 = vmatmul.mubr.f32.gmra.mxu0 %v1594
        %v1674 = vpop.f32.mrf.mxu0
        %v1675 = vadd.f32 0.0, %v1674
        %v1676 = vpop.f32.mrf.mxu0
        %1677 = vdwg.mxu0
        %1678 = vrot.lane.b32.xlu0 %v873, 32
        %v1679 = vpop.permute.xlu0 %1678
        %1680 = vrot.lane.b32.xlu0 %v879, 32
        %v1681 = vpop.permute.xlu0 %1680
        %1682 = vrot.lane.b32.xlu0 %v885, 32
        %v1683 = vpop.permute.xlu0 %1682
        %1684 = vrot.lane.b32.xlu0 %v875, 32
        %v1685 = vpop.permute.xlu0 %1684
        %1686 = vrot.lane.b32.xlu0 %v881, 32
        %v1687 = vpop.permute.xlu0 %1686
        %1688 = vrot.lane.b32.xlu0 %v887, 32
        %v1689 = vpop.permute.xlu0 %1688
        %v1690 = vsel %vm969, %v1679, 0
        %v1692 = vsel %vm969, %v1681, 0
        %v1694 = vsel %vm969, %v1683, 0
        %v1696 = vsel %vm969, %v1685, 0
        %v1698 = vsel %vm969, %v1687, 0
        %v1700 = vsel %vm969, %v1689, 0
        %1702 = vmatprep.subr.mxu0 0.0
        %1703 = vmatpush1.xpose.msra.mxu0 0.0
        %1704 = vmatprep.subr.mxu0 0.0
        %1705 = vmatpush1.xpose.msra.mxu0 0.0
        %1706 = vmatprep.subr.mxu0 0.0
        %1707 = vmatpush1.xpose.msra.mxu0 0.0
        %1708 = vmatprep.subr.mxu0 0.0
        %1709 = vmatpush1.xpose.msra.mxu0 0.0
        %1710 = vmatprep.subr.mxu0 0.0
        %1711 = vmatpush1.xpose.msra.mxu0 0.0
        %1712 = vmatprep.subr.mxu0 0.0
        %1713 = vmatpush1.xpose.msra.mxu0 0.0
        %1714 = vmatprep.subr.mxu0 0.0
        %1715 = vmatpush1.xpose.msra.mxu0 0.0
        %1716 = vmatprep.subr.mxu0 0.0
        %1717 = vmatpush1.xpose.msra.mxu0 0.0
        %1718 = vmatprep.subr.mxu0 0.0
        %1719 = vmatpush1.xpose.msra.mxu0 0.0
        %1720 = vmatprep.subr.mxu0 0.0
        %1721 = vmatpush1.xpose.msra.mxu0 0.0
        %1722 = vmatprep.subr.mxu0 0.0
        %1723 = vmatpush1.xpose.msra.mxu0 0.0
        %1724 = vmatprep.subr.mxu0 0.0
        %1725 = vmatpush1.xpose.msra.mxu0 0.0
        %1726 = vmatprep.subr.mxu0 0.0
        %1727 = vmatpush1.xpose.msra.mxu0 0.0
        %1728 = vmatprep.subr.mxu0 0.0
        %1729 = vmatpush1.xpose.msra.mxu0 %v1700
        %1730 = vmatprep.subr.mxu0 0.0
        %1731 = vmatpush1.xpose.msra.mxu0 %v1698
        %1732 = vmatprep.subr.mxu0 0.0
        %1733 = vmatpush1.xpose.msra.mxu0 %v1696
        %1734 = vmatprep.subr.mxu0 0.0
        %1735 = vmatpush2.xpose.msra.mxu0 0.0
        %1736 = vmatprep.subr.mxu0 0.0
        %1737 = vmatpush2.xpose.msra.mxu0 0.0
        %1738 = vmatprep.subr.mxu0 0.0
        %1739 = vmatpush2.xpose.msra.mxu0 0.0
        %1740 = vmatprep.subr.mxu0 0.0
        %1741 = vmatpush2.xpose.msra.mxu0 0.0
        %1742 = vmatprep.subr.mxu0 0.0
        %1743 = vmatpush2.xpose.msra.mxu0 0.0
        %1744 = vmatprep.subr.mxu0 0.0
        %1745 = vmatpush2.xpose.msra.mxu0 0.0
        %1746 = vmatprep.subr.mxu0 0.0
        %1747 = vmatpush2.xpose.msra.mxu0 0.0
        %1748 = vmatprep.subr.mxu0 0.0
        %1749 = vmatpush2.xpose.msra.mxu0 0.0
        %1750 = vmatprep.subr.mxu0 0.0
        %1751 = vmatpush2.xpose.msra.mxu0 0.0
        %1752 = vmatprep.subr.mxu0 0.0
        %1753 = vmatpush2.xpose.msra.mxu0 0.0
        %1754 = vmatprep.subr.mxu0 0.0
        %1755 = vmatpush2.xpose.msra.mxu0 0.0
        %1756 = vmatprep.subr.mxu0 0.0
        %1757 = vmatpush2.xpose.msra.mxu0 0.0
        %1758 = vmatprep.subr.mxu0 0.0
        %1759 = vmatpush2.xpose.msra.mxu0 0.0
        %1760 = vmatprep.subr.mxu0 0.0
        %1761 = vmatpush2.xpose.msra.mxu0 0.0
        %1762 = vmatprep.subr.mxu0 0.0
        %1763 = vmatpush2.xpose.msra.mxu0 0.0
        %1764 = vmatprep.subr.mxu0 0.0
        %1765 = vmatpush2.xpose.msra.mxu0 0.0
        %1766 = vmatprep.mubr.f32.mxu0 0.0
        %1767 = vmatmul.mubr.f32.gmra.mxu0 %v1690
        %v1768 = vpop.f32.mrf.mxu0
        %v1769 = vadd.f32 0.0, %v1768
        %v1770 = vpop.f32.mrf.mxu0
        %1771 = vmatprep.mubr.f32.mxu0 0.0
        %1772 = vmatmul.mubr.f32.gmra.mxu0 %v1692
        %v1773 = vpop.f32.mrf.mxu0
        %v1774 = vadd.f32 0.0, %v1773
        %v1775 = vpop.f32.mrf.mxu0
        %1776 = vmatprep.mubr.f32.mxu0 0.0
        %1777 = vmatmul.mubr.f32.gmra.mxu0 %v1694
        %v1778 = vpop.f32.mrf.mxu0
        %v1779 = vadd.f32 0.0, %v1778
        %v1780 = vpop.f32.mrf.mxu0
        %1781 = vdwg.mxu0
        %v1782 = vmul.f32 %v1769, 0.17677669
        %v1783 = vmul.f32 %v1774, 0.17677669
        %v1784 = vmul.f32 %v1779, 0.17677669
        %v1785 = vsel %vm1071, %v1782, -inf
        %1786 = vmax.xlane.f32.xlu0 %v1785
        %v1787 = vpop.xlane.xlu0 %1786
        %v1788 = vsel %vm1071, %v1783, -inf
        %1789 = vmax.xlane.f32.xlu0 %v1788
        %v1790 = vpop.xlane.xlu0 %1789
        %v1791 = vsel %vm1078, %v1784, -inf
        %1792 = vmax.xlane.f32.xlu0 %v1791
        %v1793 = vpop.xlane.xlu0 %1792
        %v1794 = vsub.f32 %v1782, %v1787
        %v1795 = vsub.f32 %v1783, %v1790
        %v1796 = vsub.f32 %v1784, %v1793
        %v1797 = vmul.f32 %v1794, 1.442695
        %v1798 = vpow.pop %v1797
        %v1799 = vmul.f32 %v1795, 1.442695
        %v1800 = vpow.pop %v1799
        %v1801 = vmul.f32 %v1796, 1.442695
        %v1802 = vpow.pop %v1801
        %v1803 = vsel %vm1071, %v1798, 0.0
        %1804 = vadd.xlane.f32.xlu0 %v1803
        %v1805 = vpop.xlane.xlu0 %1804
        %v1806 = vsel %vm1071, %v1800, 0.0
        %1807 = vadd.xlane.f32.xlu0 %v1806
        %v1808 = vpop.xlane.xlu0 %1807
        %v1809 = vsel %vm1078, %v1802, 0.0
        %1810 = vadd.xlane.f32.xlu0 %v1809
        %v1811 = vpop.xlane.xlu0 %1810
        %v1812 = vrcp.pop %v1805
        %v1813 = vrcp.pop %v1808
        %v1814 = vrcp.pop %v1811
        %v1815 = vmul.f32 %v1798, %v1812
        %v1816 = vmul.f32 %v1800, %v1813
        %v1817 = vmul.f32 %v1802, %v1814
        %1818 = vrot.lane.b32.xlu0 %v956, 32
        %v1819 = vpop.permute.xlu0 %1818
        %1820 = vrot.lane.b32.xlu0 %v961, 32
        %v1821 = vpop.permute.xlu0 %1820
        %1822 = vrot.lane.b32.xlu0 %v966, 32
        %v1823 = vpop.permute.xlu0 %1822
        %v1827 = vsel %vm1071, %v1815, 0
        %v1830 = vsel %vm1071, %v1816, 0
        %v1833 = vsel %vm1071, %v1817, 0
        %v1835 = vsel %vm690, %v1823, 0
        %1837 = vmatprep.subr.mxu0 0.0
        %1838 = vmatpush1.msra.mxu0 0.0
        %1839 = vmatprep.subr.mxu0 0.0
        %1840 = vmatpush1.msra.mxu0 0.0
        %1841 = vmatprep.subr.mxu0 0.0
        %1842 = vmatpush1.msra.mxu0 0.0
        %1843 = vmatprep.subr.mxu0 0.0
        %1844 = vmatpush1.msra.mxu0 0.0
        %1845 = vmatprep.subr.mxu0 0.0
        %1846 = vmatpush1.msra.mxu0 0.0
        %1847 = vmatprep.subr.mxu0 0.0
        %1848 = vmatpush1.msra.mxu0 0.0
        %1849 = vmatprep.subr.mxu0 0.0
        %1850 = vmatpush1.msra.mxu0 0.0
        %1851 = vmatprep.subr.mxu0 0.0
        %1852 = vmatpush1.msra.mxu0 0.0
        %1853 = vmatprep.subr.mxu0 0.0
        %1854 = vmatpush1.msra.mxu0 0.0
        %1855 = vmatprep.subr.mxu0 0.0
        %1856 = vmatpush1.msra.mxu0 0.0
        %1857 = vmatprep.subr.mxu0 0.0
        %1858 = vmatpush1.msra.mxu0 0.0
        %1859 = vmatprep.subr.mxu0 0.0
        %1860 = vmatpush1.msra.mxu0 0.0
        %1861 = vmatprep.subr.mxu0 0.0
        %1862 = vmatpush1.msra.mxu0 0.0
        %1863 = vmatprep.subr.mxu0 0.0
        %1864 = vmatpush1.msra.mxu0 %v1835
        %1865 = vmatprep.subr.mxu0 0.0
        %1866 = vmatpush1.msra.mxu0 %v1821
        %1867 = vmatprep.subr.mxu0 0.0
        %1868 = vmatpush1.msra.mxu0 %v1819
        %1869 = vmatprep.subr.mxu0 0.0
        %1870 = vmatpush2.msra.mxu0 0.0
        %1871 = vmatprep.subr.mxu0 0.0
        %1872 = vmatpush2.msra.mxu0 0.0
        %1873 = vmatprep.subr.mxu0 0.0
        %1874 = vmatpush2.msra.mxu0 0.0
        %1875 = vmatprep.subr.mxu0 0.0
        %1876 = vmatpush2.msra.mxu0 0.0
        %1877 = vmatprep.subr.mxu0 0.0
        %1878 = vmatpush2.msra.mxu0 0.0
        %1879 = vmatprep.subr.mxu0 0.0
        %1880 = vmatpush2.msra.mxu0 0.0
        %1881 = vmatprep.subr.mxu0 0.0
        %1882 = vmatpush2.msra.mxu0 0.0
        %1883 = vmatprep.subr.mxu0 0.0
        %1884 = vmatpush2.msra.mxu0 0.0
        %1885 = vmatprep.subr.mxu0 0.0
        %1886 = vmatpush2.msra.mxu0 0.0
        %1887 = vmatprep.subr.mxu0 0.0
        %1888 = vmatpush2.msra.mxu0 0.0
        %1889 = vmatprep.subr.mxu0 0.0
        %1890 = vmatpush2.msra.mxu0 0.0
        %1891 = vmatprep.subr.mxu0 0.0
        %1892 = vmatpush2.msra.mxu0 0.0
        %1893 = vmatprep.subr.mxu0 0.0
        %1894 = vmatpush2.msra.mxu0 0.0
        %1895 = vmatprep.subr.mxu0 0.0
        %1896 = vmatpush2.msra.mxu0 0.0
        %1897 = vmatprep.subr.mxu0 0.0
        %1898 = vmatpush2.msra.mxu0 0.0
        %1899 = vmatprep.subr.mxu0 0.0
        %1900 = vmatpush2.msra.mxu0 0.0
        %1901 = vmatprep.mubr.f32.mxu0 0.0
        %1902 = vmatmul.mubr.f32.gmra.mxu0 %v1827
        %v1903 = vpop.f32.mrf.mxu0
        %v1904 = vadd.f32 0.0, %v1903
        %v1905 = vpop.f32.mrf.mxu0
        %1906 = vmatprep.mubr.f32.mxu0 0.0
        %1907 = vmatmul.mubr.f32.gmra.mxu0 %v1830
        %v1908 = vpop.f32.mrf.mxu0
        %v1909 = vadd.f32 0.0, %v1908
        %v1910 = vpop.f32.mrf.mxu0
        %1911 = vmatprep.mubr.f32.mxu0 0.0
        %1912 = vmatmul.mubr.f32.gmra.mxu0 %v1833
        %v1913 = vpop.f32.mrf.mxu0
        %v1914 = vadd.f32 0.0, %v1913
        %v1915 = vpop.f32.mrf.mxu0
        %1916 = vdwg.mxu0
        %1920 = vrot.lane.b32.xlu0 %v1426, 32
        %v1921 = vpop.permute.xlu0 %1920
        %1922 = vrot.lane.b32.xlu0 %v1431, 32
        %v1923 = vpop.permute.xlu0 %1922
        %1924 = vrot.lane.b32.xlu0 %v1436, 32
        %v1925 = vpop.permute.xlu0 %1924
        %1932 = vrot.lane.b32.xlu0 %v1665, 64
        %v1933 = vpop.permute.xlu0 %1932
        %1934 = vrot.lane.b32.xlu0 %v1670, 64
        %v1935 = vpop.permute.xlu0 %1934
        %1936 = vrot.lane.b32.xlu0 %v1675, 64
        %v1937 = vpop.permute.xlu0 %1936
        %1944 = vrot.lane.b32.xlu0 %v1904, 96
        %v1945 = vpop.permute.xlu0 %1944
        %1946 = vrot.lane.b32.xlu0 %v1909, 96
        %v1947 = vpop.permute.xlu0 %1946
        %1948 = vrot.lane.b32.xlu0 %v1914, 96
        %v1949 = vpop.permute.xlu0 %1948
        %v1953 = vsel %vm969, %v1185, %v1921
        %v1954 = vsel %vm969, %v1190, %v1923
        %v1955 = vsel %vm969, %v1195, %v1925
        %vm1956 = vcmask 523264
        %v1957 = vsel %vm1956, %v1953, %v1933
        %v1958 = vsel %vm1956, %v1954, %v1935
        %v1959 = vsel %vm1956, %v1955, %v1937
        %vm1960 = vcmask 785408
        %v1961 = vsel %vm1960, %v1957, %v1945
        %v1962 = vsel %vm1960, %v1958, %v1947
        %v1963 = vsel %vm1960, %v1959, %v1949
        %v1964 = vld [vmem:[%s531] sm:$0xff]
        %v1965 = vld [vmem:[%s531 + $0x8] sm:$0xff]
        %v1966 = vld [vmem:[%s531 + $0x10] sm:$0xff]
        %v1967 = vld [vmem:[%s531 + $0x18] sm:$0xff]
        %v1968 = vld [vmem:[%s531 + $0x20] sm:$0xff]
        %v1969 = vld [vmem:[%s531 + $0x28] sm:$0xff]
        %v1970 = vld [vmem:[%s531 + $0x30] sm:$0xff]
        %v1971 = vld [vmem:[%s531 + $0x38] sm:$0xff]
        %v1972 = vld [vmem:[%s531 + $0x40] sm:$0xff]
        %v1973 = vld [vmem:[%s531 + $0x48] sm:$0xff]
        %v1974 = vld [vmem:[%s531 + $0x50] sm:$0xff]
        %v1975 = vld [vmem:[%s531 + $0x58] sm:$0xff]
        %v1976 = vld [vmem:[%s531 + $0x60] sm:$0xff]
        %v1977 = vld [vmem:[%s531 + $0x68] sm:$0xff]
        %v1978 = vld [vmem:[%s531 + $0x70] sm:$0xff]
        %v1979 = vld [vmem:[%s531 + $0x78] sm:$0xff]
        %v1980 = vld [vmem:[%s642] sm:$0x1]
        %v1982 = vlaneseq
        %v1983 = vshrl.u32 %v1982, 7
        %v1984 = vsub.s32 0, %v1983
        %v1985 = vrot.slane %v1980, %v1984
        %1987 = vmatprep.subr.mxu0 0.0
        %1988 = vmatpush1.msra.mxu0 %v1979
        %1989 = vmatprep.subr.mxu0 0.0
        %1990 = vmatpush1.msra.mxu0 %v1978
        %1991 = vmatprep.subr.mxu0 0.0
        %1992 = vmatpush1.msra.mxu0 %v1977
        %1993 = vmatprep.subr.mxu0 0.0
        %1994 = vmatpush1.msra.mxu0 %v1976
        %1995 = vmatprep.subr.mxu0 0.0
        %1996 = vmatpush1.msra.mxu0 %v1975
        %1997 = vmatprep.subr.mxu0 0.0
        %1998 = vmatpush1.msra.mxu0 %v1974
        %1999 = vmatprep.subr.mxu0 0.0
        %2000 = vmatpush1.msra.mxu0 %v1973
        %2001 = vmatprep.subr.mxu0 0.0
        %2002 = vmatpush1.msra.mxu0 %v1972
        %2003 = vmatprep.subr.mxu0 0.0
        %2004 = vmatpush1.msra.mxu0 %v1971
        %2005 = vmatprep.subr.mxu0 0.0
        %2006 = vmatpush1.msra.mxu0 %v1970
        %2007 = vmatprep.subr.mxu0 0.0
        %2008 = vmatpush1.msra.mxu0 %v1969
        %2009 = vmatprep.subr.mxu0 0.0
        %2010 = vmatpush1.msra.mxu0 %v1968
        %2011 = vmatprep.subr.mxu0 0.0
        %2012 = vmatpush1.msra.mxu0 %v1967
        %2013 = vmatprep.subr.mxu0 0.0
        %2014 = vmatpush1.msra.mxu0 %v1966
        %2015 = vmatprep.subr.mxu0 0.0
        %2016 = vmatpush1.msra.mxu0 %v1965
        %2017 = vmatprep.subr.mxu0 0.0
        %2018 = vmatpush1.msra.mxu0 %v1964
        %2019 = vmatprep.subr.mxu0 0.0
        %2020 = vmatpush2.msra.mxu0 0.0
        %2021 = vmatprep.subr.mxu0 0.0
        %2022 = vmatpush2.msra.mxu0 0.0
        %2023 = vmatprep.subr.mxu0 0.0
        %2024 = vmatpush2.msra.mxu0 0.0
        %2025 = vmatprep.subr.mxu0 0.0
        %2026 = vmatpush2.msra.mxu0 0.0
        %2027 = vmatprep.subr.mxu0 0.0
        %2028 = vmatpush2.msra.mxu0 0.0
        %2029 = vmatprep.subr.mxu0 0.0
        %2030 = vmatpush2.msra.mxu0 0.0
        %2031 = vmatprep.subr.mxu0 0.0
        %2032 = vmatpush2.msra.mxu0 0.0
        %2033 = vmatprep.subr.mxu0 0.0
        %2034 = vmatpush2.msra.mxu0 0.0
        %2035 = vmatprep.subr.mxu0 0.0
        %2036 = vmatpush2.msra.mxu0 0.0
        %2037 = vmatprep.subr.mxu0 0.0
        %2038 = vmatpush2.msra.mxu0 0.0
        %2039 = vmatprep.subr.mxu0 0.0
        %2040 = vmatpush2.msra.mxu0 0.0
        %2041 = vmatprep.subr.mxu0 0.0
        %2042 = vmatpush2.msra.mxu0 0.0
        %2043 = vmatprep.subr.mxu0 0.0
        %2044 = vmatpush2.msra.mxu0 0.0
        %2045 = vmatprep.subr.mxu0 0.0
        %2046 = vmatpush2.msra.mxu0 0.0
        %2047 = vmatprep.subr.mxu0 0.0
        %2048 = vmatpush2.msra.mxu0 0.0
        %2049 = vmatprep.subr.mxu0 0.0
        %2050 = vmatpush2.msra.mxu0 0.0
        %2051 = vmatprep.mubr.f32.mxu0 0.0
        %2052 = vmatmul.mubr.f32.gmra.mxu0 %v1961
        %v2053 = vpop.f32.mrf.mxu0
        %v2054 = vadd.f32 %v1985, %v2053
        %v2055 = vpop.f32.mrf.mxu0
        %2056 = vmatprep.mubr.f32.mxu0 0.0
        %2057 = vmatmul.mubr.f32.gmra.mxu0 %v1962
        %v2058 = vpop.f32.mrf.mxu0
        %v2059 = vadd.f32 %v1985, %v2058
        %v2060 = vpop.f32.mrf.mxu0
        %2061 = vmatprep.mubr.f32.mxu0 0.0
        %2062 = vmatmul.mubr.f32.gmra.mxu0 %v1963
        %v2063 = vpop.f32.mrf.mxu0
        %v2064 = vadd.f32 %v1985, %v2063
        %v2065 = vpop.f32.mrf.mxu0
        %2066 = vdwg.mxu0
        %v2067 = vadd.f32 %v681, %v2054
        %v2068 = vadd.f32 %v682, %v2059
        %v2069 = vadd.f32 %v683, %v2064
        %v2070 = vld [vmem:[%s645] sm:$0x1]
        %v2071 = vld [vmem:[%s648] sm:$0x1]
        %2072 = vadd.xlane.f32.xlu0 %v2067
        %v2073 = vpop.xlane.xlu0 %2072
        %2074 = vadd.xlane.f32.xlu0 %v2068
        %v2075 = vpop.xlane.xlu0 %2074
        %v2076 = vsel %vm690, %v2069, 0.0
        %2077 = vadd.xlane.f32.xlu0 %v2076
        %v2078 = vpop.xlane.xlu0 %2077
        %v2079 = vmul.f32 %v2073, %v694
        %v2080 = vmul.f32 %v2075, %v694
        %v2081 = vmul.f32 %v2078, %v694
        %v2082 = vsub.f32 %v2067, %v2079
        %v2083 = vsub.f32 %v2068, %v2080
        %v2084 = vsub.f32 %v2069, %v2081
        %v2085 = vmul.f32 %v2082, %v2082
        %v2086 = vmul.f32 %v2083, %v2083
        %v2087 = vmul.f32 %v2084, %v2084
        %2088 = vadd.xlane.f32.xlu0 %v2085
        %v2089 = vpop.xlane.xlu0 %2088
        %2090 = vadd.xlane.f32.xlu0 %v2086
        %v2091 = vpop.xlane.xlu0 %2090
        %v2092 = vsel %vm690, %v2087, 0.0
        %2093 = vadd.xlane.f32.xlu0 %v2092
        %v2094 = vpop.xlane.xlu0 %2093
        %v2095 = vmul.f32 %v2089, %v694
        %v2096 = vmul.f32 %v2091, %v694
        %v2097 = vmul.f32 %v2094, %v694
        %v2098 = vadd.f32 %v2095, 1e-12
        %v2099 = vadd.f32 %v2096, 1e-12
        %v2100 = vadd.f32 %v2097, 1e-12
        %v2101 = vrsqrt.pop %v2098
        %v2102 = vrsqrt.pop %v2099
        %v2103 = vrsqrt.pop %v2100
        %v2104 = vmul.f32 %v2082, %v2101
        %v2105 = vmul.f32 %v2083, %v2102
        %v2106 = vmul.f32 %v2084, %v2103
        %v2108 = vlaneseq
        %v2109 = vshrl.u32 %v2108, 7
        %v2110 = vsub.s32 0, %v2109
        %v2111 = vrot.slane %v2070, %v2110
        %v2113 = vmul.f32 %v2104, %v2111
        %v2114 = vmul.f32 %v2105, %v2111
        %v2115 = vmul.f32 %v2106, %v2111
        %v2117 = vlaneseq
        %v2118 = vshrl.u32 %v2117, 7
        %v2119 = vsub.s32 0, %v2118
        %v2120 = vrot.slane %v2071, %v2119
        %v2122 = vadd.f32 %v2113, %v2120
        %v2123 = vadd.f32 %v2114, %v2120
        %v2124 = vadd.f32 %v2115, %v2120
        %v2125 = vld [vmem:[%s653] sm:$0xff]
        %v2126 = vld [vmem:[%s653 + $0x8] sm:$0xff]
        %v2127 = vld [vmem:[%s653 + $0x10] sm:$0xff]
        %v2128 = vld [vmem:[%s653 + $0x18] sm:$0xff]
        %v2129 = vld [vmem:[%s653 + $0x20] sm:$0xff]
        %v2130 = vld [vmem:[%s653 + $0x28] sm:$0xff]
        %v2131 = vld [vmem:[%s653 + $0x30] sm:$0xff]
        %v2132 = vld [vmem:[%s653 + $0x38] sm:$0xff]
        %v2133 = vld [vmem:[%s653 + $0x40] sm:$0xff]
        %v2134 = vld [vmem:[%s653 + $0x48] sm:$0xff]
        %v2135 = vld [vmem:[%s653 + $0x50] sm:$0xff]
        %v2136 = vld [vmem:[%s653 + $0x58] sm:$0xff]
        %v2137 = vld [vmem:[%s653 + $0x60] sm:$0xff]
        %v2138 = vld [vmem:[%s653 + $0x68] sm:$0xff]
        %v2139 = vld [vmem:[%s653 + $0x70] sm:$0xff]
        %v2140 = vld [vmem:[%s653 + $0x78] sm:$0xff]
        %v2141 = vld [vmem:[%s653 + $0x80] sm:$0xff]
        %v2142 = vld [vmem:[%s653 + $0x88] sm:$0xff]
        %v2143 = vld [vmem:[%s653 + $0x90] sm:$0xff]
        %v2144 = vld [vmem:[%s653 + $0x98] sm:$0xff]
        %v2145 = vld [vmem:[%s653 + $0xa0] sm:$0xff]
        %v2146 = vld [vmem:[%s653 + $0xa8] sm:$0xff]
        %v2147 = vld [vmem:[%s653 + $0xb0] sm:$0xff]
        %v2148 = vld [vmem:[%s653 + $0xb8] sm:$0xff]
        %v2149 = vld [vmem:[%s653 + $0xc0] sm:$0xff]
        %v2150 = vld [vmem:[%s653 + $0xc8] sm:$0xff]
        %v2151 = vld [vmem:[%s653 + $0xd0] sm:$0xff]
        %v2152 = vld [vmem:[%s653 + $0xd8] sm:$0xff]
        %v2153 = vld [vmem:[%s653 + $0xe0] sm:$0xff]
        %v2154 = vld [vmem:[%s653 + $0xe8] sm:$0xff]
        %v2155 = vld [vmem:[%s653 + $0xf0] sm:$0xff]
        %v2156 = vld [vmem:[%s653 + $0xf8] sm:$0xff]
        %v2157 = vld [vmem:[%s657] sm:$0x3]
        %v2159 = vlaneseq
        %v2160 = vshrl.u32 %v2159, 7
        %v2161 = vsub.s32 0, %v2160
        %v2162 = vrot.slane %v2157, %v2161
        %v2163 = vlaneseq
        %v2164 = vshrl.u32 %v2163, 7
        %v2165 = vsub.s32 1, %v2164
        %v2166 = vrot.slane %v2157, %v2165
        %2169 = vmatprep.subr.mxu0 %v2156
        %2170 = vmatpush1.msra.mxu0 %v2155
        %2171 = vmatprep.subr.mxu0 %v2154
        %2172 = vmatpush1.msra.mxu0 %v2153
        %2173 = vmatprep.subr.mxu0 %v2152
        %2174 = vmatpush1.msra.mxu0 %v2151
        %2175 = vmatprep.subr.mxu0 %v2150
        %2176 = vmatpush1.msra.mxu0 %v2149
        %2177 = vmatprep.subr.mxu0 %v2148
        %2178 = vmatpush1.msra.mxu0 %v2147
        %2179 = vmatprep.subr.mxu0 %v2146
        %2180 = vmatpush1.msra.mxu0 %v2145
        %2181 = vmatprep.subr.mxu0 %v2144
        %2182 = vmatpush1.msra.mxu0 %v2143
        %2183 = vmatprep.subr.mxu0 %v2142
        %2184 = vmatpush1.msra.mxu0 %v2141
        %2185 = vmatprep.subr.mxu0 %v2140
        %2186 = vmatpush1.msra.mxu0 %v2139
        %2187 = vmatprep.subr.mxu0 %v2138
        %2188 = vmatpush1.msra.mxu0 %v2137
        %2189 = vmatprep.subr.mxu0 %v2136
        %2190 = vmatpush1.msra.mxu0 %v2135
        %2191 = vmatprep.subr.mxu0 %v2134
        %2192 = vmatpush1.msra.mxu0 %v2133
        %2193 = vmatprep.subr.mxu0 %v2132
        %2194 = vmatpush1.msra.mxu0 %v2131
        %2195 = vmatprep.subr.mxu0 %v2130
        %2196 = vmatpush1.msra.mxu0 %v2129
        %2197 = vmatprep.subr.mxu0 %v2128
        %2198 = vmatpush1.msra.mxu0 %v2127
        %2199 = vmatprep.subr.mxu0 %v2126
        %2200 = vmatpush1.msra.mxu0 %v2125
        %2201 = vmatprep.subr.mxu0 0.0
        %2202 = vmatpush2.msra.mxu0 0.0
        %2203 = vmatprep.subr.mxu0 0.0
        %2204 = vmatpush2.msra.mxu0 0.0
        %2205 = vmatprep.subr.mxu0 0.0
        %2206 = vmatpush2.msra.mxu0 0.0
        %2207 = vmatprep.subr.mxu0 0.0
        %2208 = vmatpush2.msra.mxu0 0.0
        %2209 = vmatprep.subr.mxu0 0.0
        %2210 = vmatpush2.msra.mxu0 0.0
        %2211 = vmatprep.subr.mxu0 0.0
        %2212 = vmatpush2.msra.mxu0 0.0
        %2213 = vmatprep.subr.mxu0 0.0
        %2214 = vmatpush2.msra.mxu0 0.0
        %2215 = vmatprep.subr.mxu0 0.0
        %2216 = vmatpush2.msra.mxu0 0.0
        %2217 = vmatprep.subr.mxu0 0.0
        %2218 = vmatpush2.msra.mxu0 0.0
        %2219 = vmatprep.subr.mxu0 0.0
        %2220 = vmatpush2.msra.mxu0 0.0
        %2221 = vmatprep.subr.mxu0 0.0
        %2222 = vmatpush2.msra.mxu0 0.0
        %2223 = vmatprep.subr.mxu0 0.0
        %2224 = vmatpush2.msra.mxu0 0.0
        %2225 = vmatprep.subr.mxu0 0.0
        %2226 = vmatpush2.msra.mxu0 0.0
        %2227 = vmatprep.subr.mxu0 0.0
        %2228 = vmatpush2.msra.mxu0 0.0
        %2229 = vmatprep.subr.mxu0 0.0
        %2230 = vmatpush2.msra.mxu0 0.0
        %2231 = vmatprep.subr.mxu0 0.0
        %2232 = vmatpush2.msra.mxu0 0.0
        %2233 = vmatprep.mubr.f32.mxu0 0.0
        %2234 = vmatmul.mubr.f32.gmra.mxu0 %v2122
        %v2235 = vpop.f32.mrf.mxu0
        %v2236 = vadd.f32 %v2162, %v2235
        %v2237 = vpop.f32.mrf.mxu0
        %v2238 = vadd.f32 %v2166, %v2237
        %2239 = vmatprep.mubr.f32.mxu0 0.0
        %2240 = vmatmul.mubr.f32.gmra.mxu0 %v2123
        %v2241 = vpop.f32.mrf.mxu0
        %v2242 = vadd.f32 %v2162, %v2241
        %v2243 = vpop.f32.mrf.mxu0
        %v2244 = vadd.f32 %v2166, %v2243
        %2245 = vmatprep.mubr.f32.mxu0 0.0
        %2246 = vmatmul.mubr.f32.gmra.mxu0 %v2124
        %v2247 = vpop.f32.mrf.mxu0
        %v2248 = vadd.f32 %v2162, %v2247
        %v2249 = vpop.f32.mrf.mxu0
        %v2250 = vadd.f32 %v2166, %v2249
        %2251 = vdwg.mxu0
        %v2252 = vmul.f32 %v2236, 0.5
        %v2253 = vmul.f32 %v2238, 0.5
        %v2254 = vmul.f32 %v2242, 0.5
        %v2255 = vmul.f32 %v2244, 0.5
        %v2256 = vmul.f32 %v2248, 0.5
        %v2257 = vmul.f32 %v2250, 0.5
        %v2258 = vmul.f32 %v2236, 0.044715
        %v2259 = vmul.f32 %v2238, 0.044715
        %v2260 = vmul.f32 %v2242, 0.044715
        %v2261 = vmul.f32 %v2244, 0.044715
        %v2262 = vmul.f32 %v2248, 0.044715
        %v2263 = vmul.f32 %v2250, 0.044715
        %v2264 = vmul.f32 %v2258, %v2236
        %v2265 = vmul.f32 %v2259, %v2238
        %v2266 = vmul.f32 %v2260, %v2242
        %v2267 = vmul.f32 %v2261, %v2244
        %v2268 = vmul.f32 %v2262, %v2248
        %v2269 = vmul.f32 %v2263, %v2250
        %v2270 = vmul.f32 %v2264, %v2236
        %v2271 = vmul.f32 %v2265, %v2238
        %v2272 = vmul.f32 %v2266, %v2242
        %v2273 = vmul.f32 %v2267, %v2244
        %v2274 = vmul.f32 %v2268, %v2248
        %v2275 = vmul.f32 %v2269, %v2250
        %v2276 = vadd.f32 %v2236, %v2270
        %v2277 = vadd.f32 %v2238, %v2271
        %v2278 = vadd.f32 %v2242, %v2272
        %v2279 = vadd.f32 %v2244, %v2273
        %v2280 = vadd.f32 %v2248, %v2274
        %v2281 = vadd.f32 %v2250, %v2275
        %v2282 = vmul.f32 %v2276, 0.7978846
        %v2283 = vmul.f32 %v2277, 0.7978846
        %v2284 = vmul.f32 %v2278, 0.7978846
        %v2285 = vmul.f32 %v2279, 0.7978846
        %v2286 = vmul.f32 %v2280, 0.7978846
        %v2287 = vmul.f32 %v2281, 0.7978846
        %v2288 = vtanh.pop %v2282
        %v2289 = vtanh.pop %v2283
        %v2290 = vtanh.pop %v2284
        %v2291 = vtanh.pop %v2285
        %v2292 = vtanh.pop %v2286
        %v2293 = vtanh.pop %v2287
        %v2294 = vadd.f32 %v2288, 1.0
        %v2295 = vadd.f32 %v2289, 1.0
        %v2296 = vadd.f32 %v2290, 1.0
        %v2297 = vadd.f32 %v2291, 1.0
        %v2298 = vadd.f32 %v2292, 1.0
        %v2299 = vadd.f32 %v2293, 1.0
        %v2300 = vmul.f32 %v2252, %v2294
        %v2301 = vmul.f32 %v2253, %v2295
        %v2302 = vmul.f32 %v2254, %v2296
        %v2303 = vmul.f32 %v2255, %v2297
        %v2304 = vmul.f32 %v2256, %v2298
        %v2305 = vmul.f32 %v2257, %v2299
        %v2306 = vld [vmem:[%s662] sm:$0xff]
        %v2307 = vld [vmem:[%s662 + $0x8] sm:$0xff]
        %v2308 = vld [vmem:[%s662 + $0x10] sm:$0xff]
        %v2309 = vld [vmem:[%s662 + $0x18] sm:$0xff]
        %v2310 = vld [vmem:[%s662 + $0x20] sm:$0xff]
        %v2311 = vld [vmem:[%s662 + $0x28] sm:$0xff]
        %v2312 = vld [vmem:[%s662 + $0x30] sm:$0xff]
        %v2313 = vld [vmem:[%s662 + $0x38] sm:$0xff]
        %v2314 = vld [vmem:[%s662 + $0x40] sm:$0xff]
        %v2315 = vld [vmem:[%s662 + $0x48] sm:$0xff]
        %v2316 = vld [vmem:[%s662 + $0x50] sm:$0xff]
        %v2317 = vld [vmem:[%s662 + $0x58] sm:$0xff]
        %v2318 = vld [vmem:[%s662 + $0x60] sm:$0xff]
        %v2319 = vld [vmem:[%s662 + $0x68] sm:$0xff]
        %v2320 = vld [vmem:[%s662 + $0x70] sm:$0xff]
        %v2321 = vld [vmem:[%s662 + $0x78] sm:$0xff]
        %v2322 = vld [vmem:[%s662 + $0x80] sm:$0xff]
        %v2323 = vld [vmem:[%s662 + $0x88] sm:$0xff]
        %v2324 = vld [vmem:[%s662 + $0x90] sm:$0xff]
        %v2325 = vld [vmem:[%s662 + $0x98] sm:$0xff]
        %v2326 = vld [vmem:[%s662 + $0xa0] sm:$0xff]
        %v2327 = vld [vmem:[%s662 + $0xa8] sm:$0xff]
        %v2328 = vld [vmem:[%s662 + $0xb0] sm:$0xff]
        %v2329 = vld [vmem:[%s662 + $0xb8] sm:$0xff]
        %v2330 = vld [vmem:[%s662 + $0xc0] sm:$0xff]
        %v2331 = vld [vmem:[%s662 + $0xc8] sm:$0xff]
        %v2332 = vld [vmem:[%s662 + $0xd0] sm:$0xff]
        %v2333 = vld [vmem:[%s662 + $0xd8] sm:$0xff]
        %v2334 = vld [vmem:[%s662 + $0xe0] sm:$0xff]
        %v2335 = vld [vmem:[%s662 + $0xe8] sm:$0xff]
        %v2336 = vld [vmem:[%s662 + $0xf0] sm:$0xff]
        %v2337 = vld [vmem:[%s662 + $0xf8] sm:$0xff]
        %v2338 = vld [vmem:[%s665] sm:$0x1]
        %v2340 = vlaneseq
        %v2341 = vshrl.u32 %v2340, 7
        %v2342 = vsub.s32 0, %v2341
        %v2343 = vrot.slane %v2338, %v2342
        %2345 = vmatprep.subr.mxu0 0.0
        %2346 = vmatpush1.msra.mxu0 %v2321
        %2347 = vmatprep.subr.mxu0 0.0
        %2348 = vmatpush1.msra.mxu0 %v2320
        %2349 = vmatprep.subr.mxu0 0.0
        %2350 = vmatpush1.msra.mxu0 %v2319
        %2351 = vmatprep.subr.mxu0 0.0
        %2352 = vmatpush1.msra.mxu0 %v2318
        %2353 = vmatprep.subr.mxu0 0.0
        %2354 = vmatpush1.msra.mxu0 %v2317
        %2355 = vmatprep.subr.mxu0 0.0
        %2356 = vmatpush1.msra.mxu0 %v2316
        %2357 = vmatprep.subr.mxu0 0.0
        %2358 = vmatpush1.msra.mxu0 %v2315
        %2359 = vmatprep.subr.mxu0 0.0
        %2360 = vmatpush1.msra.mxu0 %v2314
        %2361 = vmatprep.subr.mxu0 0.0
        %2362 = vmatpush1.msra.mxu0 %v2313
        %2363 = vmatprep.subr.mxu0 0.0
        %2364 = vmatpush1.msra.mxu0 %v2312
        %2365 = vmatprep.subr.mxu0 0.0
        %2366 = vmatpush1.msra.mxu0 %v2311
        %2367 = vmatprep.subr.mxu0 0.0
        %2368 = vmatpush1.msra.mxu0 %v2310
        %2369 = vmatprep.subr.mxu0 0.0
        %2370 = vmatpush1.msra.mxu0 %v2309
        %2371 = vmatprep.subr.mxu0 0.0
        %2372 = vmatpush1.msra.mxu0 %v2308
        %2373 = vmatprep.subr.mxu0 0.0
        %2374 = vmatpush1.msra.mxu0 %v2307
        %2375 = vmatprep.subr.mxu0 0.0
        %2376 = vmatpush1.msra.mxu0 %v2306
        %2377 = vmatprep.subr.mxu0 0.0
        %2378 = vmatpush2.msra.mxu0 %v2337
        %2379 = vmatprep.subr.mxu0 0.0
        %2380 = vmatpush2.msra.mxu0 %v2336
        %2381 = vmatprep.subr.mxu0 0.0
        %2382 = vmatpush2.msra.mxu0 %v2335
        %2383 = vmatprep.subr.mxu0 0.0
        %2384 = vmatpush2.msra.mxu0 %v2334
        %2385 = vmatprep.subr.mxu0 0.0
        %2386 = vmatpush2.msra.mxu0 %v2333
        %2387 = vmatprep.subr.mxu0 0.0
        %2388 = vmatpush2.msra.mxu0 %v2332
        %2389 = vmatprep.subr.mxu0 0.0
        %2390 = vmatpush2.msra.mxu0 %v2331
        %2391 = vmatprep.subr.mxu0 0.0
        %2392 = vmatpush2.msra.mxu0 %v2330
        %2393 = vmatprep.subr.mxu0 0.0
        %2394 = vmatpush2.msra.mxu0 %v2329
        %2395 = vmatprep.subr.mxu0 0.0
        %2396 = vmatpush2.msra.mxu0 %v2328
        %2397 = vmatprep.subr.mxu0 0.0
        %2398 = vmatpush2.msra.mxu0 %v2327
        %2399 = vmatprep.subr.mxu0 0.0
        %2400 = vmatpush2.msra.mxu0 %v2326
        %2401 = vmatprep.subr.mxu0 0.0
        %2402 = vmatpush2.msra.mxu0 %v2325
        %2403 = vmatprep.subr.mxu0 0.0
        %2404 = vmatpush2.msra.mxu0 %v2324
        %2405 = vmatprep.subr.mxu0 0.0
        %2406 = vmatpush2.msra.mxu0 %v2323
        %2407 = vmatprep.subr.mxu0 0.0
        %2408 = vmatpush2.msra.mxu0 %v2322
        %2409 = vmatprep.mubr.f32.mxu0 %v2301
        %2410 = vmatmul.mubr.f32.gmra.mxu0 %v2300
        %v2411 = vpop.f32.mrf.mxu0
        %v2412 = vadd.f32 %v2343, %v2411
        %v2413 = vpop.f32.mrf.mxu0
        %2414 = vmatprep.mubr.f32.mxu0 %v2303
        %2415 = vmatmul.mubr.f32.gmra.mxu0 %v2302
        %v2416 = vpop.f32.mrf.mxu0
        %v2417 = vadd.f32 %v2343, %v2416
        %v2418 = vpop.f32.mrf.mxu0
        %2419 = vmatprep.mubr.f32.mxu0 %v2305
        %2420 = vmatmul.mubr.f32.gmra.mxu0 %v2304
        %v2421 = vpop.f32.mrf.mxu0
        %v2422 = vadd.f32 %v2343, %v2421
        %v2423 = vpop.f32.mrf.mxu0
        %2424 = vdwg.mxu0
        %v2425 = vadd.f32 %v2067, %v2412
        %v2426 = vadd.f32 %v2068, %v2417
        %v2427 = vadd.f32 %v2069, %v2422
        %2428 = vst [vmem:[%s670] sm:$0xff] %v2425
        %2429 = vst [vmem:[%s670 + $0x8] sm:$0xff] %v2426
        %2430 = vst [vmem:[%s670 + $0x10] sm:$0x1] %v2427
        %p2431 = scmp.lt.s32.totalorder %s31, 1
        %s2432 = scalar_select %p2431, %s31, 1
        %s2433 = smul.addr %s2432, 3
        %s2434 = smul.addr %s2433, 8
        %s2435 = scalar_lea.vmem %s13, %s2434
        // Predicated region
        $region81: #{cifar10_transformer_forward.4} parent=71 // pred_check
          %p2436 = pneg %p395
        $region82: #{cifar10_transformer_forward.4} parent=71 // pred_check_branch
          %2438 = sbr.rel (%p2436) target = $region84
        $region83: #{cifar10_transformer_forward.4} parent=71 // pred_region
          _
        $region84: #{cifar10_transformer_forward.4} parent=71 // pred_fallthru
          _
      $region72: #{cifar10_transformer_forward.4} parent=5 // pred_fallthru
        _
      %p2439 = scmp.le.s32.totalorder 2, %s22
      // Predicated region
      $region85: #{cifar10_transformer_forward.4} parent=5 // pred_check
        %p2440 = pneg %p2439
      $region86: #{cifar10_transformer_forward.4} parent=5 // pred_check_branch
        %2442 = sbr.rel (%p2440) target = $region88
      $region87: #{cifar10_transformer_forward.4} parent=5 // pred_region
        %s2443 = ssub.s32 %s22, 2
        // Predicated region
        $region89: #{cifar10_transformer_forward.4} parent=87 // pred_check
          %p2444 = pneg %p401
        $region90: #{cifar10_transformer_forward.4} parent=87 // pred_check_branch
          %2446 = sbr.rel (%p2444) target = $region92
        $region91: #{cifar10_transformer_forward.4} parent=87 // pred_region
          %p2447 = scmp.lt.s32.totalorder %s33, 1
          %s2448 = scalar_select %p2447, %s33, 1
          %s2449 = smul.addr %s2448, 3
          %s2450 = smul.addr %s2449, 8
          %s2451 = scalar_lea.vmem %s13, %s2450
        $region92: #{cifar10_transformer_forward.4} parent=87 // pred_fallthru
          _
      $region88: #{cifar10_transformer_forward.4} parent=5 // pred_fallthru
        _
    $region6: #{cifar10_transformer_forward.4} parent=1 // loop_footer
      %s26 = sadd.s32 1, %s22
    $region7: #{cifar10_transformer_forward.4} parent=1 // loop_footer_branch
      %21 = sbr.rel target = $region3
    $region8: #{cifar10_transformer_forward.4} parent=1 // loop_exit
      _
    %2452 = vsyncpa [#allocation3], 1
    %s2453 = scalar_lea.sflag [#allocation3], 1
    %2454 = vsyncpa %s2453, 1

</llo_original>
